<compile_context>
chip_gen: v5e
topology: v5e:2x2
jax: 0.10.0
libtpu: 0.0.40
codegen_flags: <defaults>
</compile_context>

<pallas_src>
import functools

import jax
import jax.numpy as jnp
from jax import lax
from jax.experimental import pallas as pl
from jax.experimental.pallas import tpu as pltpu

_CHUNK = 8  # inner unroll length == sublane store tile height


# -----------------------------------------------------------------------------
# Fused kernel: autoregressive LSTM adjacency sampler + conditional Gaussian
# -----------------------------------------------------------------------------
def _joint_kernel(w_ih_ref, w_stk_ref, b_ref, b_out_ref,
                  w_musig_t_ref, b_musig_t_ref, lnoise_ref, eps_ref,
                  *out_refs,
                  hidden, seq_len, btile, relaxed, inv_temp, return_meta):
    """One grid step = one 128-lane batch tile (all tensors feature-major).

    w_ih_ref      : (4H, 1)     input-to-hidden weights (input dim = 1: prev sample)
    w_stk_ref     : (4H+8, H)   [W_hh ; W_out padded to 8 rows]  (fused matmul)
    b_ref         : (4H, 1)     fused gate bias (PyTorch b_ih + b_hh pre-summed)
    b_out_ref     : (1, 1)      logit-projection bias
    w_musig_t_ref : (2S, S)     [w_mu^T ; w_sig^T]  (lane-dense head matmul)
    b_musig_t_ref : (2S, 1)     [b_mu^T ; b_sig^T]
    lnoise_ref    : (S, BT)     logistic noise logit(u), one row per step
    eps_ref       : (S, BT)     Gaussian noise for the weight sample
    outputs       : adj (S,BT), weights (S,BT) [, probs, mu, std if return_meta]
    """
    if return_meta:
        adj_ref, wgt_ref, probs_ref, mu_ref, std_ref = out_refs
    else:
        adj_ref, wgt_ref = out_refs
        probs_ref = mu_ref = std_ref = None

    H, S, BT = hidden, seq_len, btile

    # Loop-invariant operands, hoisted once (compiler may spill them to VMEM;
    # reloads use under-used vld slots — preferable to re-broadcasting per step).
    w_stk = w_stk_ref[...]                                     # (4H+8, H)
    w_ih_b = jnp.broadcast_to(w_ih_ref[...], (4 * H, BT))      # (4H, BT)
    b_b = jnp.broadcast_to(b_ref[...], (4 * H, BT))            # (4H, BT)
    b_out_b = jnp.broadcast_to(b_out_ref[...], (1, BT))        # (1, BT)

    # Defaults: zero start state / init input (see TODO in header).
    hh0 = jnp.zeros((4 * H, BT), jnp.float32)                  # W_hh @ h_{-1}
    c0 = jnp.zeros((H, BT), jnp.float32)
    x0 = jnp.zeros((1, BT), jnp.float32)

    def outer(j, carry):
        gates_hh, c, x = carry
        base = pl.multiple_of(j * _CHUNK, _CHUNK)
        l_blk = lnoise_ref[pl.ds(base, _CHUNK), :]             # (8, BT) aligned load
        samples = []
        probs = []
        for r in range(_CHUNK):
            gates = w_ih_b * x + gates_hh + b_b                # (4H, BT)
            i_g = jax.nn.sigmoid(gates[0 * H:1 * H, :])
            f_g = jax.nn.sigmoid(gates[1 * H:2 * H, :])
            g_g = jnp.tanh(gates[2 * H:3 * H, :])
            o_g = jax.nn.sigmoid(gates[3 * H:4 * H, :])
            c = f_g * c + i_g * g_g
            h = o_g * jnp.tanh(c)
            # Single fused (4H+8, H) @ (H, BT) matmul: recurrence for the next
            # step (rows :4H) + Bernoulli logit for this step (row 4H).
            stk = jnp.dot(w_stk, h, preferred_element_type=jnp.float32)
            gates_hh = stk[:4 * H, :]
            logits = stk[4 * H:4 * H + 1, :] + b_out_b         # (1, BT)
            l_r = l_blk[r:r + 1, :]                            # logistic noise row
            if relaxed:
                # binary-concrete (Gumbel-Softmax, K=2) relaxed Bernoulli sample
                x = jax.nn.sigmoid((logits + l_r) * inv_temp)
            else:
                # hard Bernoulli in logit space: u < sigmoid(l)  <=>  logit(u) < l
                x = (l_r < logits).astype(jnp.float32)
            samples.append(x)
            if return_meta:
                probs.append(jax.nn.sigmoid(logits))
        # One aligned full-vreg (8, BT) store per outer iteration.
        adj_ref[pl.ds(base, _CHUNK), :] = jnp.concatenate(samples, axis=0)
        if return_meta:
            probs_ref[pl.ds(base, _CHUNK), :] = jnp.concatenate(probs, axis=0)
        return (gates_hh, c, x)

    lax.fori_loop(0, S // _CHUNK, outer, (hh0, c0, x0))

    # ---- fused conditional-Gaussian head, feature-major (lane-dense) --------
    adj = adj_ref[...]                                         # (S, BT)
    musig = (jnp.dot(w_musig_t_ref[...], adj,
                     preferred_element_type=jnp.float32)
             + jnp.broadcast_to(b_musig_t_ref[...], (2 * S, BT)))
    mu = musig[:S, :]
    std = jnp.exp(musig[S:, :])
    # NOTE: relaxed path masks the Gaussian weights by the *soft* adjacency sample.
    wgt_ref[...] = (mu + std * eps_ref[...]) * adj
    if return_meta:
        mu_ref[...] = mu
        std_ref[...] = std


def joint_sample(w_ih, w_stk, b, b_out, w_musig_t, b_musig_t,
                 lnoise, eps, *, hidden, relaxed, temp, return_meta,
                 btile=128):
    """lnoise, eps: (S, B) feature-major noise. Returns (B, S) arrays."""
    S, B = lnoise.shape
    assert eps.shape == (S, B)
    H = hidden
    assert H % 8 == 0 and S % _CHUNK == 0  # sublane alignment for slices/stores

    # Pad batch to a multiple of 128 so the lane dimension is dense.
    b_pad = ((B + btile - 1) // btile) * btile
    if b_pad != B:
        pad = ((0, 0), (0, b_pad - B))
        lnoise = jnp.pad(lnoise, pad)      # 0 == logit(0.5): log/exp-safe
        eps = jnp.pad(eps, pad)
    nbt = b_pad // btile

    kernel = functools.partial(
        _joint_kernel, hidden=H, seq_len=S, btile=btile,
        relaxed=relaxed, inv_temp=1.0 / float(temp),
        return_meta=return_meta)

    def full(i):  # small parameter tensors, fully resident
        return (0, 0)

    noise_spec = pl.BlockSpec((S, btile), lambda i: (0, i))
    in_specs = [
        pl.BlockSpec(w_ih.shape, full),
        pl.BlockSpec(w_stk.shape, full),
        pl.BlockSpec(b.shape, full),
        pl.BlockSpec(b_out.shape, full),
        pl.BlockSpec(w_musig_t.shape, full),
        pl.BlockSpec(b_musig_t.shape, full),
        noise_spec,   # logistic noise (lane-dense)
        noise_spec,   # gaussian eps  (lane-dense)
    ]
    n_out = 5 if return_meta else 2
    out_specs = tuple(pl.BlockSpec((S, btile), lambda i: (0, i))
                      for _ in range(n_out))
    out_shape = tuple(jax.ShapeDtypeStruct((S, b_pad), jnp.float32)
                      for _ in range(n_out))

    # Advisory cost hint so XLA schedules surrounding RNG / transpose ops
    # around the long-latency autoregressive kernel.
    flops = nbt * (S * 2 * (4 * H + 8) * H * btile        # recurrent matmuls
                   + 2 * (2 * S) * S * btile              # head matmul
                   + S * 12 * H * btile)                  # elementwise (rough)
    transcendentals = nbt * (S * (5 * H + 2) * btile + 2 * S * btile)
    bytes_accessed = 4 * (nbt * (w_ih.size + w_stk.size + b.size + b_out.size
                                 + w_musig_t.size + b_musig_t.size)
                          + (2 + n_out) * S * b_pad)

    outs = pl.pallas_call(
        kernel,
        out_shape=out_shape,
        grid_spec=pltpu.PrefetchScalarGridSpec(
            num_scalar_prefetch=0,
            grid=(nbt,),
            in_specs=in_specs,
            out_specs=out_specs),
        compiler_params=pltpu.CompilerParams(
            dimension_semantics=("parallel",)),   # batch tiles -> v7x 2 TCs
        cost_estimate=pl.CostEstimate(
            flops=int(flops),
            transcendentals=int(transcendentals),
            bytes_accessed=int(bytes_accessed)),
    )(w_ih, w_stk, b, b_out, w_musig_t, b_musig_t, lnoise, eps)

    # Un-pad + final (S, B) -> (B, S) transpose handled by XLA outside the kernel.
    return tuple(o[:, :B].T for o in outs)


# -----------------------------------------------------------------------------
# Joint distribution wrapper (mirrors LSTM_JointDistribution.forward)
# -----------------------------------------------------------------------------
class LSTMJointDistributionPallas:
    def __init__(self, n_nodes, hidden, key):
        self.n_nodes = n_nodes
        self.hidden = hidden
        S = n_nodes * n_nodes
        H = hidden
        ks = jax.random.split(key, 9)
        scale = 0.1
        # adjacency LSTM parameters
        self.w_ih = scale * jax.random.normal(ks[0], (4 * H, 1), jnp.float32)
        w_hh = scale * jax.random.normal(ks[1], (4 * H, H), jnp.float32)
        # NOTE: single fused gate bias; PyTorch's b_ih + b_hh must be pre-summed.
        self.b = scale * jax.random.normal(ks[2], (4 * H, 1), jnp.float32)
        w_out = scale * jax.random.normal(ks[3], (1, H), jnp.float32)
        self.b_out = scale * jax.random.normal(ks[4], (1, 1), jnp.float32)
        # Fuse the output projection under w_hh (padded to 8 rows) so each LSTM
        # step issues a single (4H+8, H) @ (H, BT) MXU matmul.
        w_out_pad = jnp.zeros((8, H), jnp.float32).at[0].set(w_out[0])
        self.w_stk = jnp.concatenate([w_hh, w_out_pad], axis=0)       # (4H+8, H)
        # conditional Gaussian parameter network (affine in flattened adjacency),
        # pre-transposed + fused so the head is one feature-major matmul.
        w_mu = scale * jax.random.normal(ks[5], (S, S), jnp.float32)
        b_mu = scale * jax.random.normal(ks[6], (1, S), jnp.float32)
        w_sig = scale * jax.random.normal(ks[7], (S, S), jnp.float32)
        b_sig = -1.0 + scale * jax.random.normal(ks[8], (1, S), jnp.float32)
        self.w_musig_t = jnp.concatenate([w_mu.T, w_sig.T], axis=0)   # (2S, S)
        self.b_musig_t = jnp.concatenate([b_mu.T, b_sig.T], axis=0)   # (2S, 1)

    def forward(self, batch_size, key, reparametrized=True, temp=None,
                return_meta=False):
        N = self.n_nodes
        S = N * N
        k_u, k_e = jax.random.split(key)
        u = jax.random.uniform(k_u, (S, batch_size), jnp.float32,
                               minval=1e-6, maxval=1.0 - 1e-6)
        # Logistic noise logit(u), precomputed once (fused with RNG by XLA);
        # drives both the binary-concrete sample and the hard Bernoulli compare.
        lnoise = jnp.log(u) - jnp.log1p(-u)
        eps = jax.random.normal(k_e, (S, batch_size), jnp.float32)

        relaxed = bool(reparametrized and (temp is not None))
        t = float(temp) if temp is not None else 1.0

        outs = joint_sample(
            self.w_ih, self.w_stk, self.b, self.b_out,
            self.w_musig_t, self.b_musig_t, lnoise, eps,
            hidden=self.hidden, relaxed=relaxed, temp=t,
            return_meta=return_meta)

        if return_meta:
            adj, wgt, probs, mu, std = outs
            # TODO(synk): LSTM hidden/cell states not returned in meta.
            return (adj.reshape(batch_size, N, N),
                    wgt.reshape(batch_size, N, N),
                    (None, probs.reshape(batch_size, N, N)),
                    (mu.reshape(batch_size, N, N),
                     std.reshape(batch_size, N, N)))

        adj, wgt = outs
        return adj.reshape(batch_size, N, N), wgt.reshape(batch_size, N, N)


if __name__ == "__main__":
    key = jax.random.PRNGKey(0)
    k_params, k_sample = jax.random.split(key)

    n_nodes = 8
    hidden = 32
    batch_size = 4

    dist = LSTMJointDistributionPallas(n_nodes=n_nodes, hidden=hidden,
                                       key=k_params)

    # Default path: relaxed (reparametrized) samples, no meta outputs.
    adj_samples, weight_samples = dist.forward(
        batch_size, k_sample, reparametrized=True, temp=1.0)
    adj_samples = jax.block_until_ready(adj_samples)
    weight_samples = jax.block_until_ready(weight_samples)

    assert adj_samples.shape == (batch_size, n_nodes, n_nodes)
    assert weight_samples.shape == (batch_size, n_nodes, n_nodes)
    assert bool(jnp.all(jnp.isfinite(adj_samples)))
    assert bool(jnp.all(jnp.isfinite(weight_samples)))
    assert bool(jnp.all((adj_samples >= 0.0) & (adj_samples <= 1.0)))

    # Meta path: hard (non-reparametrized) Bernoulli samples + Normal params.
    adj_h, wgt_h, (_, bern_probs), (means, stds) = dist.forward(
        batch_size, k_sample, reparametrized=False, temp=None,
        return_meta=True)
    adj_h = jax.block_until_ready(adj_h)
    assert adj_h.shape == (batch_size, n_nodes, n_nodes)
    assert bern_probs.shape == (batch_size, n_nodes, n_nodes)
    assert means.shape == (batch_size, n_nodes, n_nodes)
    assert stds.shape == (batch_size, n_nodes, n_nodes)
    assert bool(jnp.all(jnp.isfinite(wgt_h)))
    assert bool(jnp.all((adj_h == 0.0) | (adj_h == 1.0)))
    assert bool(jnp.all((bern_probs >= 0.0) & (bern_probs <= 1.0)))
    assert bool(jnp.all(stds > 0.0))

    print("KERNEL_OK")
</pallas_src>

<mosaic_0001>
module attributes {stable_mosaic.version = 11 : i64} {
  func.func @_joint_kernel(%arg0: i32, %arg1: memref<128x1xf32, #tpu.memory_space<vmem>>, %arg2: memref<136x32xf32, #tpu.memory_space<vmem>>, %arg3: memref<128x1xf32, #tpu.memory_space<vmem>>, %arg4: memref<1x1xf32, #tpu.memory_space<vmem>>, %arg5: memref<128x64xf32, #tpu.memory_space<vmem>>, %arg6: memref<128x1xf32, #tpu.memory_space<vmem>>, %arg7: memref<64x128xf32, #tpu.memory_space<vmem>>, %arg8: memref<64x128xf32, #tpu.memory_space<vmem>>, %arg9: memref<64x128xf32, #tpu.memory_space<vmem>>, %arg10: memref<64x128xf32, #tpu.memory_space<vmem>>) attributes {dimension_semantics = [#tpu.dimension_semantics<parallel>], iteration_bounds = array<i64: 1>, scalar_prefetch = 0 : i64, scratch_operands = 0 : i64, tpu.core_type = #tpu.core_type<tc>, window_params = [{pipeline_mode = #tpu.pipeline_mode<synchronous>, transform_indices = @transform_0, window_bounds = array<i64: 128, 1>}, {pipeline_mode = #tpu.pipeline_mode<synchronous>, transform_indices = @transform_1, window_bounds = array<i64: 136, 32>}, {pipeline_mode = #tpu.pipeline_mode<synchronous>, transform_indices = @transform_2, window_bounds = array<i64: 128, 1>}, {pipeline_mode = #tpu.pipeline_mode<synchronous>, transform_indices = @transform_3, window_bounds = array<i64: 1, 1>}, {pipeline_mode = #tpu.pipeline_mode<synchronous>, transform_indices = @transform_4, window_bounds = array<i64: 128, 64>}, {pipeline_mode = #tpu.pipeline_mode<synchronous>, transform_indices = @transform_5, window_bounds = array<i64: 128, 1>}, {transform_indices = @transform_6, window_bounds = array<i64: 64, 128>}, {transform_indices = @transform_7, window_bounds = array<i64: 64, 128>}, {transform_indices = @transform_8, window_bounds = array<i64: 64, 128>}, {transform_indices = @transform_9, window_bounds = array<i64: 64, 128>}]} {
    %c0 = arith.constant 0 : index
    %c0_0 = arith.constant 0 : index
    %0 = vector.load %arg2[%c0, %c0_0] : memref<136x32xf32, #tpu.memory_space<vmem>>, vector<136x32xf32>
    %c0_1 = arith.constant 0 : index
    %c0_2 = arith.constant 0 : index
    %1 = vector.load %arg1[%c0_1, %c0_2] : memref<128x1xf32, #tpu.memory_space<vmem>>, vector<128x1xf32>
    %2 = vector.shape_cast %1 : vector<128x1xf32> to vector<128x1xf32>
    %3 = vector.broadcast %2 : vector<128x1xf32> to vector<128x128xf32>
    %c0_3 = arith.constant 0 : index
    %c0_4 = arith.constant 0 : index
    %4 = vector.load %arg3[%c0_3, %c0_4] : memref<128x1xf32, #tpu.memory_space<vmem>>, vector<128x1xf32>
    %5 = vector.shape_cast %4 : vector<128x1xf32> to vector<128x1xf32>
    %6 = vector.broadcast %5 : vector<128x1xf32> to vector<128x128xf32>
    %c0_5 = arith.constant 0 : index
    %c0_6 = arith.constant 0 : index
    %7 = vector.load %arg4[%c0_5, %c0_6] : memref<1x1xf32, #tpu.memory_space<vmem>>, vector<1x1xf32>
    %8 = vector.shape_cast %7 : vector<1x1xf32> to vector<1x1xf32>
    %9 = vector.broadcast %8 : vector<1x1xf32> to vector<1x128xf32>
    %cst = arith.constant 0.000000e+00 : f32
    %10 = vector.broadcast %cst : f32 to vector<128x128xf32>
    %cst_7 = arith.constant 0.000000e+00 : f32
    %11 = vector.broadcast %cst_7 : f32 to vector<32x128xf32>
    %cst_8 = arith.constant 0.000000e+00 : f32
    %12 = vector.broadcast %cst_8 : f32 to vector<1x128xf32>
    %c0_i32 = arith.constant 0 : i32
    %c8_i32 = arith.constant 8 : i32
    %13 = arith.addi %c0_i32, %c8_i32 : i32
    %c1_i32 = arith.constant 1 : i32
    %14:3 = scf.for %arg11 = %c0_i32 to %13 step %c1_i32 iter_args(%arg12 = %10, %arg13 = %11, %arg14 = %12) -> (vector<128x128xf32>, vector<32x128xf32>, vector<1x128xf32>)  : i32 {
      %c8_i32_21 = arith.constant 8 : i32
      %30 = arith.muli %arg11, %c8_i32_21 : i32
      %31 = tpu.assume_multiple %30, 8 : i32
      %32 = arith.index_cast %31 : i32 to index
      %c0_22 = arith.constant 0 : index
      %33 = vector.load %arg7[%32, %c0_22] : memref<64x128xf32, #tpu.memory_space<vmem>>, vector<8x128xf32>
      %34 = vector.broadcast %arg14 : vector<1x128xf32> to vector<128x128xf32>
      %35 = arith.mulf %3, %34 : vector<128x128xf32>
      %36 = arith.addf %35, %arg12 : vector<128x128xf32>
      %37 = arith.addf %36, %6 : vector<128x128xf32>
      %38 = vector.extract_strided_slice %37 {offsets = [0, 0], sizes = [32, 128], strides = [1, 1]} : vector<128x128xf32> to vector<32x128xf32>
      %39 = arith.negf %38 : vector<32x128xf32>
      %40 = math.exp %39 : vector<32x128xf32>
      %cst_23 = arith.constant 1.000000e+00 : f32
      %41 = vector.broadcast %cst_23 : f32 to vector<32x128xf32>
      %42 = arith.addf %41, %40 : vector<32x128xf32>
      %43 = arith.divf %41, %42 : vector<32x128xf32>
      %44 = vector.extract_strided_slice %37 {offsets = [32, 0], sizes = [32, 128], strides = [1, 1]} : vector<128x128xf32> to vector<32x128xf32>
      %45 = arith.negf %44 : vector<32x128xf32>
      %46 = math.exp %45 : vector<32x128xf32>
      %cst_24 = arith.constant 1.000000e+00 : f32
      %47 = vector.broadcast %cst_24 : f32 to vector<32x128xf32>
      %48 = arith.addf %47, %46 : vector<32x128xf32>
      %49 = arith.divf %47, %48 : vector<32x128xf32>
      %50 = vector.extract_strided_slice %37 {offsets = [64, 0], sizes = [32, 128], strides = [1, 1]} : vector<128x128xf32> to vector<32x128xf32>
      %51 = math.tanh %50 : vector<32x128xf32>
      %52 = vector.extract_strided_slice %37 {offsets = [96, 0], sizes = [32, 128], strides = [1, 1]} : vector<128x128xf32> to vector<32x128xf32>
      %53 = arith.negf %52 : vector<32x128xf32>
      %54 = math.exp %53 : vector<32x128xf32>
      %cst_25 = arith.constant 1.000000e+00 : f32
      %55 = vector.broadcast %cst_25 : f32 to vector<32x128xf32>
      %56 = arith.addf %55, %54 : vector<32x128xf32>
      %57 = arith.divf %55, %56 : vector<32x128xf32>
      %58 = arith.mulf %49, %arg13 : vector<32x128xf32>
      %59 = arith.mulf %43, %51 : vector<32x128xf32>
      %60 = arith.addf %58, %59 : vector<32x128xf32>
      %61 = math.tanh %60 : vector<32x128xf32>
      %62 = arith.mulf %57, %61 : vector<32x128xf32>
      %cst_26 = arith.constant dense<0.000000e+00> : vector<136x128xf32>
      %63 = tpu.matmul %0, %62, %cst_26 {dimension_numbers = #tpu.dot_dimension_numbers<[1], [0], [0], [1], [0, 0, 1, 1], [], []>} : vector<136x32xf32>, vector<32x128xf32>, vector<136x128xf32> -> vector<136x128xf32>
      %64 = vector.extract_strided_slice %63 {offsets = [0, 0], sizes = [128, 128], strides = [1, 1]} : vector<136x128xf32> to vector<128x128xf32>
      %65 = vector.extract_strided_slice %63 {offsets = [128, 0], sizes = [1, 128], strides = [1, 1]} : vector<136x128xf32> to vector<1x128xf32>
      %66 = arith.addf %65, %9 : vector<1x128xf32>
      %67 = vector.extract_strided_slice %33 {offsets = [0, 0], sizes = [1, 128], strides = [1, 1]} : vector<8x128xf32> to vector<1x128xf32>
      %68 = arith.addf %66, %67 : vector<1x128xf32>
      %cst_27 = arith.constant 1.000000e+00 : f32
      %69 = vector.broadcast %cst_27 : f32 to vector<1x128xf32>
      %70 = arith.mulf %68, %69 : vector<1x128xf32>
      %71 = arith.negf %70 : vector<1x128xf32>
      %72 = math.exp %71 : vector<1x128xf32>
      %cst_28 = arith.constant 1.000000e+00 : f32
      %73 = vector.broadcast %cst_28 : f32 to vector<1x128xf32>
      %74 = arith.addf %73, %72 : vector<1x128xf32>
      %75 = arith.divf %73, %74 : vector<1x128xf32>
      %76 = vector.broadcast %75 : vector<1x128xf32> to vector<128x128xf32>
      %77 = arith.mulf %3, %76 : vector<128x128xf32>
      %78 = arith.addf %77, %64 : vector<128x128xf32>
      %79 = arith.addf %78, %6 : vector<128x128xf32>
      %80 = vector.extract_strided_slice %79 {offsets = [0, 0], sizes = [32, 128], strides = [1, 1]} : vector<128x128xf32> to vector<32x128xf32>
      %81 = arith.negf %80 : vector<32x128xf32>
      %82 = math.exp %81 : vector<32x128xf32>
      %cst_29 = arith.constant 1.000000e+00 : f32
      %83 = vector.broadcast %cst_29 : f32 to vector<32x128xf32>
      %84 = arith.addf %83, %82 : vector<32x128xf32>
      %85 = arith.divf %83, %84 : vector<32x128xf32>
      %86 = vector.extract_strided_slice %79 {offsets = [32, 0], sizes = [32, 128], strides = [1, 1]} : vector<128x128xf32> to vector<32x128xf32>
      %87 = arith.negf %86 : vector<32x128xf32>
      %88 = math.exp %87 : vector<32x128xf32>
      %cst_30 = arith.constant 1.000000e+00 : f32
      %89 = vector.broadcast %cst_30 : f32 to vector<32x128xf32>
      %90 = arith.addf %89, %88 : vector<32x128xf32>
      %91 = arith.divf %89, %90 : vector<32x128xf32>
      %92 = vector.extract_strided_slice %79 {offsets = [64, 0], sizes = [32, 128], strides = [1, 1]} : vector<128x128xf32> to vector<32x128xf32>
      %93 = math.tanh %92 : vector<32x128xf32>
      %94 = vector.extract_strided_slice %79 {offsets = [96, 0], sizes = [32, 128], strides = [1, 1]} : vector<128x128xf32> to vector<32x128xf32>
      %95 = arith.negf %94 : vector<32x128xf32>
      %96 = math.exp %95 : vector<32x128xf32>
      %cst_31 = arith.constant 1.000000e+00 : f32
      %97 = vector.broadcast %cst_31 : f32 to vector<32x128xf32>
      %98 = arith.addf %97, %96 : vector<32x128xf32>
      %99 = arith.divf %97, %98 : vector<32x128xf32>
      %100 = arith.mulf %91, %60 : vector<32x128xf32>
      %101 = arith.mulf %85, %93 : vector<32x128xf32>
      %102 = arith.addf %100, %101 : vector<32x128xf32>
      %103 = math.tanh %102 : vector<32x128xf32>
      %104 = arith.mulf %99, %103 : vector<32x128xf32>
      %cst_32 = arith.constant dense<0.000000e+00> : vector<136x128xf32>
      %105 = tpu.matmul %0, %104, %cst_32 {dimension_numbers = #tpu.dot_dimension_numbers<[1], [0], [0], [1], [0, 0, 1, 1], [], []>} : vector<136x32xf32>, vector<32x128xf32>, vector<136x128xf32> -> vector<136x128xf32>
      %106 = vector.extract_strided_slice %105 {offsets = [0, 0], sizes = [128, 128], strides = [1, 1]} : vector<136x128xf32> to vector<128x128xf32>
      %107 = vector.extract_strided_slice %105 {offsets = [128, 0], sizes = [1, 128], strides = [1, 1]} : vector<136x128xf32> to vector<1x128xf32>
      %108 = arith.addf %107, %9 : vector<1x128xf32>
      %109 = vector.extract_strided_slice %33 {offsets = [1, 0], sizes = [1, 128], strides = [1, 1]} : vector<8x128xf32> to vector<1x128xf32>
      %110 = arith.addf %108, %109 : vector<1x128xf32>
      %cst_33 = arith.constant 1.000000e+00 : f32
      %111 = vector.broadcast %cst_33 : f32 to vector<1x128xf32>
      %112 = arith.mulf %110, %111 : vector<1x128xf32>
      %113 = arith.negf %112 : vector<1x128xf32>
      %114 = math.exp %113 : vector<1x128xf32>
      %cst_34 = arith.constant 1.000000e+00 : f32
      %115 = vector.broadcast %cst_34 : f32 to vector<1x128xf32>
      %116 = arith.addf %115, %114 : vector<1x128xf32>
      %117 = arith.divf %115, %116 : vector<1x128xf32>
      %118 = vector.broadcast %117 : vector<1x128xf32> to vector<128x128xf32>
      %119 = arith.mulf %3, %118 : vector<128x128xf32>
      %120 = arith.addf %119, %106 : vector<128x128xf32>
      %121 = arith.addf %120, %6 : vector<128x128xf32>
      %122 = vector.extract_strided_slice %121 {offsets = [0, 0], sizes = [32, 128], strides = [1, 1]} : vector<128x128xf32> to vector<32x128xf32>
      %123 = arith.negf %122 : vector<32x128xf32>
      %124 = math.exp %123 : vector<32x128xf32>
      %cst_35 = arith.constant 1.000000e+00 : f32
      %125 = vector.broadcast %cst_35 : f32 to vector<32x128xf32>
      %126 = arith.addf %125, %124 : vector<32x128xf32>
      %127 = arith.divf %125, %126 : vector<32x128xf32>
      %128 = vector.extract_strided_slice %121 {offsets = [32, 0], sizes = [32, 128], strides = [1, 1]} : vector<128x128xf32> to vector<32x128xf32>
      %129 = arith.negf %128 : vector<32x128xf32>
      %130 = math.exp %129 : vector<32x128xf32>
      %cst_36 = arith.constant 1.000000e+00 : f32
      %131 = vector.broadcast %cst_36 : f32 to vector<32x128xf32>
      %132 = arith.addf %131, %130 : vector<32x128xf32>
      %133 = arith.divf %131, %132 : vector<32x128xf32>
      %134 = vector.extract_strided_slice %121 {offsets = [64, 0], sizes = [32, 128], strides = [1, 1]} : vector<128x128xf32> to vector<32x128xf32>
      %135 = math.tanh %134 : vector<32x128xf32>
      %136 = vector.extract_strided_slice %121 {offsets = [96, 0], sizes = [32, 128], strides = [1, 1]} : vector<128x128xf32> to vector<32x128xf32>
      %137 = arith.negf %136 : vector<32x128xf32>
      %138 = math.exp %137 : vector<32x128xf32>
      %cst_37 = arith.constant 1.000000e+00 : f32
      %139 = vector.broadcast %cst_37 : f32 to vector<32x128xf32>
      %140 = arith.addf %139, %138 : vector<32x128xf32>
      %141 = arith.divf %139, %140 : vector<32x128xf32>
      %142 = arith.mulf %133, %102 : vector<32x128xf32>
      %143 = arith.mulf %127, %135 : vector<32x128xf32>
      %144 = arith.addf %142, %143 : vector<32x128xf32>
      %145 = math.tanh %144 : vector<32x128xf32>
      %146 = arith.mulf %141, %145 : vector<32x128xf32>
      %cst_38 = arith.constant dense<0.000000e+00> : vector<136x128xf32>
      %147 = tpu.matmul %0, %146, %cst_38 {dimension_numbers = #tpu.dot_dimension_numbers<[1], [0], [0], [1], [0, 0, 1, 1], [], []>} : vector<136x32xf32>, vector<32x128xf32>, vector<136x128xf32> -> vector<136x128xf32>
      %148 = vector.extract_strided_slice %147 {offsets = [0, 0], sizes = [128, 128], strides = [1, 1]} : vector<136x128xf32> to vector<128x128xf32>
      %149 = vector.extract_strided_slice %147 {offsets = [128, 0], sizes = [1, 128], strides = [1, 1]} : vector<136x128xf32> to vector<1x128xf32>
      %150 = arith.addf %149, %9 : vector<1x128xf32>
      %151 = vector.extract_strided_slice %33 {offsets = [2, 0], sizes = [1, 128], strides = [1, 1]} : vector<8x128xf32> to vector<1x128xf32>
      %152 = arith.addf %150, %151 : vector<1x128xf32>
      %cst_39 = arith.constant 1.000000e+00 : f32
      %153 = vector.broadcast %cst_39 : f32 to vector<1x128xf32>
      %154 = arith.mulf %152, %153 : vector<1x128xf32>
      %155 = arith.negf %154 : vector<1x128xf32>
      %156 = math.exp %155 : vector<1x128xf32>
      %cst_40 = arith.constant 1.000000e+00 : f32
      %157 = vector.broadcast %cst_40 : f32 to vector<1x128xf32>
      %158 = arith.addf %157, %156 : vector<1x128xf32>
      %159 = arith.divf %157, %158 : vector<1x128xf32>
      %160 = vector.broadcast %159 : vector<1x128xf32> to vector<128x128xf32>
      %161 = arith.mulf %3, %160 : vector<128x128xf32>
      %162 = arith.addf %161, %148 : vector<128x128xf32>
      %163 = arith.addf %162, %6 : vector<128x128xf32>
      %164 = vector.extract_strided_slice %163 {offsets = [0, 0], sizes = [32, 128], strides = [1, 1]} : vector<128x128xf32> to vector<32x128xf32>
      %165 = arith.negf %164 : vector<32x128xf32>
      %166 = math.exp %165 : vector<32x128xf32>
      %cst_41 = arith.constant 1.000000e+00 : f32
      %167 = vector.broadcast %cst_41 : f32 to vector<32x128xf32>
      %168 = arith.addf %167, %166 : vector<32x128xf32>
      %169 = arith.divf %167, %168 : vector<32x128xf32>
      %170 = vector.extract_strided_slice %163 {offsets = [32, 0], sizes = [32, 128], strides = [1, 1]} : vector<128x128xf32> to vector<32x128xf32>
      %171 = arith.negf %170 : vector<32x128xf32>
      %172 = math.exp %171 : vector<32x128xf32>
      %cst_42 = arith.constant 1.000000e+00 : f32
      %173 = vector.broadcast %cst_42 : f32 to vector<32x128xf32>
      %174 = arith.addf %173, %172 : vector<32x128xf32>
      %175 = arith.divf %173, %174 : vector<32x128xf32>
      %176 = vector.extract_strided_slice %163 {offsets = [64, 0], sizes = [32, 128], strides = [1, 1]} : vector<128x128xf32> to vector<32x128xf32>
      %177 = math.tanh %176 : vector<32x128xf32>
      %178 = vector.extract_strided_slice %163 {offsets = [96, 0], sizes = [32, 128], strides = [1, 1]} : vector<128x128xf32> to vector<32x128xf32>
      %179 = arith.negf %178 : vector<32x128xf32>
      %180 = math.exp %179 : vector<32x128xf32>
      %cst_43 = arith.constant 1.000000e+00 : f32
      %181 = vector.broadcast %cst_43 : f32 to vector<32x128xf32>
      %182 = arith.addf %181, %180 : vector<32x128xf32>
      %183 = arith.divf %181, %182 : vector<32x128xf32>
      %184 = arith.mulf %175, %144 : vector<32x128xf32>
      %185 = arith.mulf %169, %177 : vector<32x128xf32>
      %186 = arith.addf %184, %185 : vector<32x128xf32>
      %187 = math.tanh %186 : vector<32x128xf32>
      %188 = arith.mulf %183, %187 : vector<32x128xf32>
      %cst_44 = arith.constant dense<0.000000e+00> : vector<136x128xf32>
      %189 = tpu.matmul %0, %188, %cst_44 {dimension_numbers = #tpu.dot_dimension_numbers<[1], [0], [0], [1], [0, 0, 1, 1], [], []>} : vector<136x32xf32>, vector<32x128xf32>, vector<136x128xf32> -> vector<136x128xf32>
      %190 = vector.extract_strided_slice %189 {offsets = [0, 0], sizes = [128, 128], strides = [1, 1]} : vector<136x128xf32> to vector<128x128xf32>
      %191 = vector.extract_strided_slice %189 {offsets = [128, 0], sizes = [1, 128], strides = [1, 1]} : vector<136x128xf32> to vector<1x128xf32>
      %192 = arith.addf %191, %9 : vector<1x128xf32>
      %193 = vector.extract_strided_slice %33 {offsets = [3, 0], sizes = [1, 128], strides = [1, 1]} : vector<8x128xf32> to vector<1x128xf32>
      %194 = arith.addf %192, %193 : vector<1x128xf32>
      %cst_45 = arith.constant 1.000000e+00 : f32
      %195 = vector.broadcast %cst_45 : f32 to vector<1x128xf32>
      %196 = arith.mulf %194, %195 : vector<1x128xf32>
      %197 = arith.negf %196 : vector<1x128xf32>
      %198 = math.exp %197 : vector<1x128xf32>
      %cst_46 = arith.constant 1.000000e+00 : f32
      %199 = vector.broadcast %cst_46 : f32 to vector<1x128xf32>
      %200 = arith.addf %199, %198 : vector<1x128xf32>
      %201 = arith.divf %199, %200 : vector<1x128xf32>
      %202 = vector.broadcast %201 : vector<1x128xf32> to vector<128x128xf32>
      %203 = arith.mulf %3, %202 : vector<128x128xf32>
      %204 = arith.addf %203, %190 : vector<128x128xf32>
      %205 = arith.addf %204, %6 : vector<128x128xf32>
      %206 = vector.extract_strided_slice %205 {offsets = [0, 0], sizes = [32, 128], strides = [1, 1]} : vector<128x128xf32> to vector<32x128xf32>
      %207 = arith.negf %206 : vector<32x128xf32>
      %208 = math.exp %207 : vector<32x128xf32>
      %cst_47 = arith.constant 1.000000e+00 : f32
      %209 = vector.broadcast %cst_47 : f32 to vector<32x128xf32>
      %210 = arith.addf %209, %208 : vector<32x128xf32>
      %211 = arith.divf %209, %210 : vector<32x128xf32>
      %212 = vector.extract_strided_slice %205 {offsets = [32, 0], sizes = [32, 128], strides = [1, 1]} : vector<128x128xf32> to vector<32x128xf32>
      %213 = arith.negf %212 : vector<32x128xf32>
      %214 = math.exp %213 : vector<32x128xf32>
      %cst_48 = arith.constant 1.000000e+00 : f32
      %215 = vector.broadcast %cst_48 : f32 to vector<32x128xf32>
      %216 = arith.addf %215, %214 : vector<32x128xf32>
      %217 = arith.divf %215, %216 : vector<32x128xf32>
      %218 = vector.extract_strided_slice %205 {offsets = [64, 0], sizes = [32, 128], strides = [1, 1]} : vector<128x128xf32> to vector<32x128xf32>
      %219 = math.tanh %218 : vector<32x128xf32>
      %220 = vector.extract_strided_slice %205 {offsets = [96, 0], sizes = [32, 128], strides = [1, 1]} : vector<128x128xf32> to vector<32x128xf32>
      %221 = arith.negf %220 : vector<32x128xf32>
      %222 = math.exp %221 : vector<32x128xf32>
      %cst_49 = arith.constant 1.000000e+00 : f32
      %223 = vector.broadcast %cst_49 : f32 to vector<32x128xf32>
      %224 = arith.addf %223, %222 : vector<32x128xf32>
      %225 = arith.divf %223, %224 : vector<32x128xf32>
      %226 = arith.mulf %217, %186 : vector<32x128xf32>
      %227 = arith.mulf %211, %219 : vector<32x128xf32>
      %228 = arith.addf %226, %227 : vector<32x128xf32>
      %229 = math.tanh %228 : vector<32x128xf32>
      %230 = arith.mulf %225, %229 : vector<32x128xf32>
      %cst_50 = arith.constant dense<0.000000e+00> : vector<136x128xf32>
      %231 = tpu.matmul %0, %230, %cst_50 {dimension_numbers = #tpu.dot_dimension_numbers<[1], [0], [0], [1], [0, 0, 1, 1], [], []>} : vector<136x32xf32>, vector<32x128xf32>, vector<136x128xf32> -> vector<136x128xf32>
      %232 = vector.extract_strided_slice %231 {offsets = [0, 0], sizes = [128, 128], strides = [1, 1]} : vector<136x128xf32> to vector<128x128xf32>
      %233 = vector.extract_strided_slice %231 {offsets = [128, 0], sizes = [1, 128], strides = [1, 1]} : vector<136x128xf32> to vector<1x128xf32>
      %234 = arith.addf %233, %9 : vector<1x128xf32>
      %235 = vector.extract_strided_slice %33 {offsets = [4, 0], sizes = [1, 128], strides = [1, 1]} : vector<8x128xf32> to vector<1x128xf32>
      %236 = arith.addf %234, %235 : vector<1x128xf32>
      %cst_51 = arith.constant 1.000000e+00 : f32
      %237 = vector.broadcast %cst_51 : f32 to vector<1x128xf32>
      %238 = arith.mulf %236, %237 : vector<1x128xf32>
      %239 = arith.negf %238 : vector<1x128xf32>
      %240 = math.exp %239 : vector<1x128xf32>
      %cst_52 = arith.constant 1.000000e+00 : f32
      %241 = vector.broadcast %cst_52 : f32 to vector<1x128xf32>
      %242 = arith.addf %241, %240 : vector<1x128xf32>
      %243 = arith.divf %241, %242 : vector<1x128xf32>
      %244 = vector.broadcast %243 : vector<1x128xf32> to vector<128x128xf32>
      %245 = arith.mulf %3, %244 : vector<128x128xf32>
      %246 = arith.addf %245, %232 : vector<128x128xf32>
      %247 = arith.addf %246, %6 : vector<128x128xf32>
      %248 = vector.extract_strided_slice %247 {offsets = [0, 0], sizes = [32, 128], strides = [1, 1]} : vector<128x128xf32> to vector<32x128xf32>
      %249 = arith.negf %248 : vector<32x128xf32>
      %250 = math.exp %249 : vector<32x128xf32>
      %cst_53 = arith.constant 1.000000e+00 : f32
      %251 = vector.broadcast %cst_53 : f32 to vector<32x128xf32>
      %252 = arith.addf %251, %250 : vector<32x128xf32>
      %253 = arith.divf %251, %252 : vector<32x128xf32>
      %254 = vector.extract_strided_slice %247 {offsets = [32, 0], sizes = [32, 128], strides = [1, 1]} : vector<128x128xf32> to vector<32x128xf32>
      %255 = arith.negf %254 : vector<32x128xf32>
      %256 = math.exp %255 : vector<32x128xf32>
      %cst_54 = arith.constant 1.000000e+00 : f32
      %257 = vector.broadcast %cst_54 : f32 to vector<32x128xf32>
      %258 = arith.addf %257, %256 : vector<32x128xf32>
      %259 = arith.divf %257, %258 : vector<32x128xf32>
      %260 = vector.extract_strided_slice %247 {offsets = [64, 0], sizes = [32, 128], strides = [1, 1]} : vector<128x128xf32> to vector<32x128xf32>
      %261 = math.tanh %260 : vector<32x128xf32>
      %262 = vector.extract_strided_slice %247 {offsets = [96, 0], sizes = [32, 128], strides = [1, 1]} : vector<128x128xf32> to vector<32x128xf32>
      %263 = arith.negf %262 : vector<32x128xf32>
      %264 = math.exp %263 : vector<32x128xf32>
      %cst_55 = arith.constant 1.000000e+00 : f32
      %265 = vector.broadcast %cst_55 : f32 to vector<32x128xf32>
      %266 = arith.addf %265, %264 : vector<32x128xf32>
      %267 = arith.divf %265, %266 : vector<32x128xf32>
      %268 = arith.mulf %259, %228 : vector<32x128xf32>
      %269 = arith.mulf %253, %261 : vector<32x128xf32>
      %270 = arith.addf %268, %269 : vector<32x128xf32>
      %271 = math.tanh %270 : vector<32x128xf32>
      %272 = arith.mulf %267, %271 : vector<32x128xf32>
      %cst_56 = arith.constant dense<0.000000e+00> : vector<136x128xf32>
      %273 = tpu.matmul %0, %272, %cst_56 {dimension_numbers = #tpu.dot_dimension_numbers<[1], [0], [0], [1], [0, 0, 1, 1], [], []>} : vector<136x32xf32>, vector<32x128xf32>, vector<136x128xf32> -> vector<136x128xf32>
      %274 = vector.extract_strided_slice %273 {offsets = [0, 0], sizes = [128, 128], strides = [1, 1]} : vector<136x128xf32> to vector<128x128xf32>
      %275 = vector.extract_strided_slice %273 {offsets = [128, 0], sizes = [1, 128], strides = [1, 1]} : vector<136x128xf32> to vector<1x128xf32>
      %276 = arith.addf %275, %9 : vector<1x128xf32>
      %277 = vector.extract_strided_slice %33 {offsets = [5, 0], sizes = [1, 128], strides = [1, 1]} : vector<8x128xf32> to vector<1x128xf32>
      %278 = arith.addf %276, %277 : vector<1x128xf32>
      %cst_57 = arith.constant 1.000000e+00 : f32
      %279 = vector.broadcast %cst_57 : f32 to vector<1x128xf32>
      %280 = arith.mulf %278, %279 : vector<1x128xf32>
      %281 = arith.negf %280 : vector<1x128xf32>
      %282 = math.exp %281 : vector<1x128xf32>
      %cst_58 = arith.constant 1.000000e+00 : f32
      %283 = vector.broadcast %cst_58 : f32 to vector<1x128xf32>
      %284 = arith.addf %283, %282 : vector<1x128xf32>
      %285 = arith.divf %283, %284 : vector<1x128xf32>
      %286 = vector.broadcast %285 : vector<1x128xf32> to vector<128x128xf32>
      %287 = arith.mulf %3, %286 : vector<128x128xf32>
      %288 = arith.addf %287, %274 : vector<128x128xf32>
      %289 = arith.addf %288, %6 : vector<128x128xf32>
      %290 = vector.extract_strided_slice %289 {offsets = [0, 0], sizes = [32, 128], strides = [1, 1]} : vector<128x128xf32> to vector<32x128xf32>
      %291 = arith.negf %290 : vector<32x128xf32>
      %292 = math.exp %291 : vector<32x128xf32>
      %cst_59 = arith.constant 1.000000e+00 : f32
      %293 = vector.broadcast %cst_59 : f32 to vector<32x128xf32>
      %294 = arith.addf %293, %292 : vector<32x128xf32>
      %295 = arith.divf %293, %294 : vector<32x128xf32>
      %296 = vector.extract_strided_slice %289 {offsets = [32, 0], sizes = [32, 128], strides = [1, 1]} : vector<128x128xf32> to vector<32x128xf32>
      %297 = arith.negf %296 : vector<32x128xf32>
      %298 = math.exp %297 : vector<32x128xf32>
      %cst_60 = arith.constant 1.000000e+00 : f32
      %299 = vector.broadcast %cst_60 : f32 to vector<32x128xf32>
      %300 = arith.addf %299, %298 : vector<32x128xf32>
      %301 = arith.divf %299, %300 : vector<32x128xf32>
      %302 = vector.extract_strided_slice %289 {offsets = [64, 0], sizes = [32, 128], strides = [1, 1]} : vector<128x128xf32> to vector<32x128xf32>
      %303 = math.tanh %302 : vector<32x128xf32>
      %304 = vector.extract_strided_slice %289 {offsets = [96, 0], sizes = [32, 128], strides = [1, 1]} : vector<128x128xf32> to vector<32x128xf32>
      %305 = arith.negf %304 : vector<32x128xf32>
      %306 = math.exp %305 : vector<32x128xf32>
      %cst_61 = arith.constant 1.000000e+00 : f32
      %307 = vector.broadcast %cst_61 : f32 to vector<32x128xf32>
      %308 = arith.addf %307, %306 : vector<32x128xf32>
      %309 = arith.divf %307, %308 : vector<32x128xf32>
      %310 = arith.mulf %301, %270 : vector<32x128xf32>
      %311 = arith.mulf %295, %303 : vector<32x128xf32>
      %312 = arith.addf %310, %311 : vector<32x128xf32>
      %313 = math.tanh %312 : vector<32x128xf32>
      %314 = arith.mulf %309, %313 : vector<32x128xf32>
      %cst_62 = arith.constant dense<0.000000e+00> : vector<136x128xf32>
      %315 = tpu.matmul %0, %314, %cst_62 {dimension_numbers = #tpu.dot_dimension_numbers<[1], [0], [0], [1], [0, 0, 1, 1], [], []>} : vector<136x32xf32>, vector<32x128xf32>, vector<136x128xf32> -> vector<136x128xf32>
      %316 = vector.extract_strided_slice %315 {offsets = [0, 0], sizes = [128, 128], strides = [1, 1]} : vector<136x128xf32> to vector<128x128xf32>
      %317 = vector.extract_strided_slice %315 {offsets = [128, 0], sizes = [1, 128], strides = [1, 1]} : vector<136x128xf32> to vector<1x128xf32>
      %318 = arith.addf %317, %9 : vector<1x128xf32>
      %319 = vector.extract_strided_slice %33 {offsets = [6, 0], sizes = [1, 128], strides = [1, 1]} : vector<8x128xf32> to vector<1x128xf32>
      %320 = arith.addf %318, %319 : vector<1x128xf32>
      %cst_63 = arith.constant 1.000000e+00 : f32
      %321 = vector.broadcast %cst_63 : f32 to vector<1x128xf32>
      %322 = arith.mulf %320, %321 : vector<1x128xf32>
      %323 = arith.negf %322 : vector<1x128xf32>
      %324 = math.exp %323 : vector<1x128xf32>
      %cst_64 = arith.constant 1.000000e+00 : f32
      %325 = vector.broadcast %cst_64 : f32 to vector<1x128xf32>
      %326 = arith.addf %325, %324 : vector<1x128xf32>
      %327 = arith.divf %325, %326 : vector<1x128xf32>
      %328 = vector.broadcast %327 : vector<1x128xf32> to vector<128x128xf32>
      %329 = arith.mulf %3, %328 : vector<128x128xf32>
      %330 = arith.addf %329, %316 : vector<128x128xf32>
      %331 = arith.addf %330, %6 : vector<128x128xf32>
      %332 = vector.extract_strided_slice %331 {offsets = [0, 0], sizes = [32, 128], strides = [1, 1]} : vector<128x128xf32> to vector<32x128xf32>
      %333 = arith.negf %332 : vector<32x128xf32>
      %334 = math.exp %333 : vector<32x128xf32>
      %cst_65 = arith.constant 1.000000e+00 : f32
      %335 = vector.broadcast %cst_65 : f32 to vector<32x128xf32>
      %336 = arith.addf %335, %334 : vector<32x128xf32>
      %337 = arith.divf %335, %336 : vector<32x128xf32>
      %338 = vector.extract_strided_slice %331 {offsets = [32, 0], sizes = [32, 128], strides = [1, 1]} : vector<128x128xf32> to vector<32x128xf32>
      %339 = arith.negf %338 : vector<32x128xf32>
      %340 = math.exp %339 : vector<32x128xf32>
      %cst_66 = arith.constant 1.000000e+00 : f32
      %341 = vector.broadcast %cst_66 : f32 to vector<32x128xf32>
      %342 = arith.addf %341, %340 : vector<32x128xf32>
      %343 = arith.divf %341, %342 : vector<32x128xf32>
      %344 = vector.extract_strided_slice %331 {offsets = [64, 0], sizes = [32, 128], strides = [1, 1]} : vector<128x128xf32> to vector<32x128xf32>
      %345 = math.tanh %344 : vector<32x128xf32>
      %346 = vector.extract_strided_slice %331 {offsets = [96, 0], sizes = [32, 128], strides = [1, 1]} : vector<128x128xf32> to vector<32x128xf32>
      %347 = arith.negf %346 : vector<32x128xf32>
      %348 = math.exp %347 : vector<32x128xf32>
      %cst_67 = arith.constant 1.000000e+00 : f32
      %349 = vector.broadcast %cst_67 : f32 to vector<32x128xf32>
      %350 = arith.addf %349, %348 : vector<32x128xf32>
      %351 = arith.divf %349, %350 : vector<32x128xf32>
      %352 = arith.mulf %343, %312 : vector<32x128xf32>
      %353 = arith.mulf %337, %345 : vector<32x128xf32>
      %354 = arith.addf %352, %353 : vector<32x128xf32>
      %355 = math.tanh %354 : vector<32x128xf32>
      %356 = arith.mulf %351, %355 : vector<32x128xf32>
      %cst_68 = arith.constant dense<0.000000e+00> : vector<136x128xf32>
      %357 = tpu.matmul %0, %356, %cst_68 {dimension_numbers = #tpu.dot_dimension_numbers<[1], [0], [0], [1], [0, 0, 1, 1], [], []>} : vector<136x32xf32>, vector<32x128xf32>, vector<136x128xf32> -> vector<136x128xf32>
      %358 = vector.extract_strided_slice %357 {offsets = [0, 0], sizes = [128, 128], strides = [1, 1]} : vector<136x128xf32> to vector<128x128xf32>
      %359 = vector.extract_strided_slice %357 {offsets = [128, 0], sizes = [1, 128], strides = [1, 1]} : vector<136x128xf32> to vector<1x128xf32>
      %360 = arith.addf %359, %9 : vector<1x128xf32>
      %361 = vector.extract_strided_slice %33 {offsets = [7, 0], sizes = [1, 128], strides = [1, 1]} : vector<8x128xf32> to vector<1x128xf32>
      %362 = arith.addf %360, %361 : vector<1x128xf32>
      %cst_69 = arith.constant 1.000000e+00 : f32
      %363 = vector.broadcast %cst_69 : f32 to vector<1x128xf32>
      %364 = arith.mulf %362, %363 : vector<1x128xf32>
      %365 = arith.negf %364 : vector<1x128xf32>
      %366 = math.exp %365 : vector<1x128xf32>
      %cst_70 = arith.constant 1.000000e+00 : f32
      %367 = vector.broadcast %cst_70 : f32 to vector<1x128xf32>
      %368 = arith.addf %367, %366 : vector<1x128xf32>
      %369 = arith.divf %367, %368 : vector<1x128xf32>
      %370 = tpu.concatenate %75, %117, %159, %201, %243, %285, %327, %369 in 0 : vector<1x128xf32>, vector<1x128xf32>, vector<1x128xf32>, vector<1x128xf32>, vector<1x128xf32>, vector<1x128xf32>, vector<1x128xf32>, vector<1x128xf32> -> vector<8x128xf32>
      %371 = arith.index_cast %31 : i32 to index
      %c0_71 = arith.constant 0 : index
      %372 = vector.load %arg9[%371, %c0_71] : memref<64x128xf32, #tpu.memory_space<vmem>>, vector<8x128xf32>
      tpu.vector_store %arg9[%371, %c0_71], %370 {strides = array<i32>} : memref<64x128xf32, #tpu.memory_space<vmem>>, vector<8x128xf32>,
      scf.yield %358, %354, %369 : vector<128x128xf32>, vector<32x128xf32>, vector<1x128xf32>
    }
    %c8_i32_9 = arith.constant 8 : i32
    %c0_10 = arith.constant 0 : index
    %c0_11 = arith.constant 0 : index
    %15 = vector.load %arg9[%c0_10, %c0_11] : memref<64x128xf32, #tpu.memory_space<vmem>>, vector<64x128xf32>
    %c0_12 = arith.constant 0 : index
    %c0_13 = arith.constant 0 : index
    %16 = vector.load %arg5[%c0_12, %c0_13] : memref<128x64xf32, #tpu.memory_space<vmem>>, vector<128x64xf32>
    %cst_14 = arith.constant dense<0.000000e+00> : vector<128x128xf32>
    %17 = tpu.matmul %16, %15, %cst_14 {dimension_numbers = #tpu.dot_dimension_numbers<[1], [0], [0], [1], [0, 0, 1, 1], [], []>} : vector<128x64xf32>, vector<64x128xf32>, vector<128x128xf32> -> vector<128x128xf32>
    %c0_15 = arith.constant 0 : index
    %c0_16 = arith.constant 0 : index
    %18 = vector.load %arg6[%c0_15, %c0_16] : memref<128x1xf32, #tpu.memory_space<vmem>>, vector<128x1xf32>
    %19 = vector.shape_cast %18 : vector<128x1xf32> to vector<128x1xf32>
    %20 = vector.broadcast %19 : vector<128x1xf32> to vector<128x128xf32>
    %21 = arith.addf %17, %20 : vector<128x128xf32>
    %22 = vector.extract_strided_slice %21 {offsets = [0, 0], sizes = [64, 128], strides = [1, 1]} : vector<128x128xf32> to vector<64x128xf32>
    %23 = vector.extract_strided_slice %21 {offsets = [64, 0], sizes = [64, 128], strides = [1, 1]} : vector<128x128xf32> to vector<64x128xf32>
    %24 = math.exp %23 : vector<64x128xf32>
    %c0_17 = arith.constant 0 : index
    %c0_18 = arith.constant 0 : index
    %25 = vector.load %arg8[%c0_17, %c0_18] : memref<64x128xf32, #tpu.memory_space<vmem>>, vector<64x128xf32>
    %26 = arith.mulf %24, %25 : vector<64x128xf32>
    %27 = arith.addf %22, %26 : vector<64x128xf32>
    %28 = arith.mulf %27, %15 : vector<64x128xf32>
    %c0_19 = arith.constant 0 : index
    %c0_20 = arith.constant 0 : index
    %29 = vector.load %arg10[%c0_19, %c0_20] : memref<64x128xf32, #tpu.memory_space<vmem>>, vector<64x128xf32>
    tpu.vector_store %arg10[%c0_19, %c0_20], %28 {strides = array<i32>} : memref<64x128xf32, #tpu.memory_space<vmem>>, vector<64x128xf32>,
    return
  }
  func.func @transform_0(%arg0: i32) -> (i32, i32) {
    %c0_i32 = arith.constant 0 : i32
    %c0_i32_0 = arith.constant 0 : i32
    %c0_i32_1 = arith.constant 0 : i32
    return %c0_i32, %c0_i32_0 : i32, i32
  }
  func.func @transform_1(%arg0: i32) -> (i32, i32) {
    %c0_i32 = arith.constant 0 : i32
    %c0_i32_0 = arith.constant 0 : i32
    %c0_i32_1 = arith.constant 0 : i32
    return %c0_i32, %c0_i32_0 : i32, i32
  }
  func.func @transform_2(%arg0: i32) -> (i32, i32) {
    %c0_i32 = arith.constant 0 : i32
    %c0_i32_0 = arith.constant 0 : i32
    %c0_i32_1 = arith.constant 0 : i32
    return %c0_i32, %c0_i32_0 : i32, i32
  }
  func.func @transform_3(%arg0: i32) -> (i32, i32) {
    %c0_i32 = arith.constant 0 : i32
    %c0_i32_0 = arith.constant 0 : i32
    %c0_i32_1 = arith.constant 0 : i32
    return %c0_i32, %c0_i32_0 : i32, i32
  }
  func.func @transform_4(%arg0: i32) -> (i32, i32) {
    %c0_i32 = arith.constant 0 : i32
    %c0_i32_0 = arith.constant 0 : i32
    %c0_i32_1 = arith.constant 0 : i32
    return %c0_i32, %c0_i32_0 : i32, i32
  }
  func.func @transform_5(%arg0: i32) -> (i32, i32) {
    %c0_i32 = arith.constant 0 : i32
    %c0_i32_0 = arith.constant 0 : i32
    %c0_i32_1 = arith.constant 0 : i32
    return %c0_i32, %c0_i32_0 : i32, i32
  }
  func.func @transform_6(%arg0: i32) -> (i32, i32) {
    %c0_i32 = arith.constant 0 : i32
    %c0_i32_0 = arith.constant 0 : i32
    return %c0_i32, %arg0 : i32, i32
  }
  func.func @transform_7(%arg0: i32) -> (i32, i32) {
    %c0_i32 = arith.constant 0 : i32
    %c0_i32_0 = arith.constant 0 : i32
    return %c0_i32, %arg0 : i32, i32
  }
  func.func @transform_8(%arg0: i32) -> (i32, i32) {
    %c0_i32 = arith.constant 0 : i32
    %c0_i32_0 = arith.constant 0 : i32
    return %c0_i32, %arg0 : i32, i32
  }
  func.func @transform_9(%arg0: i32) -> (i32, i32) {
    %c0_i32 = arith.constant 0 : i32
    %c0_i32_0 = arith.constant 0 : i32
    return %c0_i32, %arg0 : i32, i32
  }
}

</mosaic_0001>

<llo_original>
// kernel: tpu_custom_call.1
$region0: #{tpu_custom_call.1}
  #allocation0 [shape = 'u32[]', space=smem, size = 0x4, offset = 0x4, fixed_abs, tag = 'smem constant byte address 0x4 - core index']
  #allocation1 [shape = 'u32[72,128]{1,0:T(1,128)}', space=vmem, size = 0x9000, scoped, tag = 'internal scratch']
  #allocation2 [shape = 'f32[1,1]{1,0:T(1,128)S(1)}', space=vmem, size = 0x200, scoped, tag = 'scoped memory for tpu_custom_call.1']
  %s0 = inlined_call_operand.vmem [shape: f32[128,1], index: 0, kind: input, shape index: {}]
  %s1 = inlined_call_operand.vmem [shape: f32[136,32], index: 1, kind: input, shape index: {}]
  %s2 = inlined_call_operand.vmem [shape: f32[128,1], index: 2, kind: input, shape index: {}]
  %s3 = inlined_call_operand.<no memory space> [shape: f32[1,1], index: 3, kind: input, shape index: {}]
  %s4 = inlined_call_operand.vmem [shape: f32[128,64], index: 4, kind: input, shape index: {}]
  %s5 = inlined_call_operand.vmem [shape: f32[128,1], index: 5, kind: input, shape index: {}]
  %s6 = inlined_call_operand.vmem [shape: f32[64,128], index: 6, kind: input, shape index: {}]
  %s7 = inlined_call_operand.vmem [shape: f32[64,128], index: 7, kind: input, shape index: {}]
  %s8 = inlined_call_operand.hbm [shape: f32[64,128], index: 8, kind: output, shape index: {0}]
  %s9 = inlined_call_operand.hbm [shape: f32[64,128], index: 9, kind: output, shape index: {1}]
  %10 = xla_tuple %s8, %s9
  %s11 = sld [smem:[#allocation0]]
  $region57: #{tpu_custom_call.1} parent=0
    _
  %s13 = ssub.s32 1, %s11
  %s14 = scalar_select 0, %s13, %s11
  %v15 = vstv %s3
  %16 = vst [vmem:[#allocation2] sm:$0x1] %v15
  $region1: #{tpu_custom_call.1} parent=0
    #allocation3 [shape = 'u8[32768]{0}', space=vmem, size = 0x8000, scoped, tag = 'output window, operand 0, single buffered']
    #allocation4 [shape = 's32[1]{0}', space=sflag, size = 0x4, scoped, tag = 'scoped memory for tpu_custom_call.1']
    #allocation5 [shape = 'u8[32768]{0}', space=vmem, size = 0x8000, scoped, tag = 'output window, operand 1, single buffered']
    #allocation6 [shape = 's32[1]{0}', space=sflag, size = 0x4, scoped, tag = 'scoped memory for tpu_custom_call.1']
    %17 = vsyncpa [#allocation4], 0
    %18 = vsyncpa [#allocation6], 0
    // Predicated region
    $region2: #{tpu_custom_call.1} parent=1 // pred_check
      _
    $region3: #{tpu_custom_call.1} parent=1 // pred_check_branch
      %20 = sbr.rel (0) target = $region5
    $region4: #{tpu_custom_call.1} parent=1 // pred_region
      _
    $region5: #{tpu_custom_call.1} parent=1 // pred_fallthru
      _
    // Predicated region
    $region6: #{tpu_custom_call.1} parent=1 // pred_check
      _
    $region7: #{tpu_custom_call.1} parent=1 // pred_check_branch
      %22 = sbr.rel (0) target = $region9
    $region8: #{tpu_custom_call.1} parent=1 // pred_region
      _
    $region9: #{tpu_custom_call.1} parent=1 // pred_fallthru
      _
    // Predicated region
    $region10: #{tpu_custom_call.1} parent=1 // pred_check
      _
    $region11: #{tpu_custom_call.1} parent=1 // pred_check_branch
      %24 = sbr.rel (0) target = $region13
    $region12: #{tpu_custom_call.1} parent=1 // pred_region
      _
    $region13: #{tpu_custom_call.1} parent=1 // pred_fallthru
      _
    // Predicated region
    $region14: #{tpu_custom_call.1} parent=1 // pred_check
      _
    $region15: #{tpu_custom_call.1} parent=1 // pred_check_branch
      %26 = sbr.rel (0) target = $region17
    $region16: #{tpu_custom_call.1} parent=1 // pred_region
      _
    $region17: #{tpu_custom_call.1} parent=1 // pred_fallthru
      _
    // Predicated region
    $region18: #{tpu_custom_call.1} parent=1 // pred_check
      _
    $region19: #{tpu_custom_call.1} parent=1 // pred_check_branch
      %28 = sbr.rel (0) target = $region21
    $region20: #{tpu_custom_call.1} parent=1 // pred_region
      _
    $region21: #{tpu_custom_call.1} parent=1 // pred_fallthru
      _
    // Predicated region
    $region22: #{tpu_custom_call.1} parent=1 // pred_check
      _
    $region23: #{tpu_custom_call.1} parent=1 // pred_check_branch
      %30 = sbr.rel (0) target = $region25
    $region24: #{tpu_custom_call.1} parent=1 // pred_region
      _
    $region25: #{tpu_custom_call.1} parent=1 // pred_fallthru
      _
    // Predicated region
    $region26: #{tpu_custom_call.1} parent=1 // pred_check
      _
    $region27: #{tpu_custom_call.1} parent=1 // pred_check_branch
      %32 = sbr.rel (0) target = $region29
    $region28: #{tpu_custom_call.1} parent=1 // pred_region
      _
    $region29: #{tpu_custom_call.1} parent=1 // pred_fallthru
      _
    // Predicated region
    $region30: #{tpu_custom_call.1} parent=1 // pred_check
      _
    $region31: #{tpu_custom_call.1} parent=1 // pred_check_branch
      %34 = sbr.rel (0) target = $region33
    $region32: #{tpu_custom_call.1} parent=1 // pred_region
      _
    $region33: #{tpu_custom_call.1} parent=1 // pred_fallthru
      _
    %v35 = vld [vmem:[%s1] sm:$0xff]
    %v36 = vld [vmem:[%s1 + $0x8] sm:$0xff]
    %v37 = vld [vmem:[%s1 + $0x10] sm:$0xff]
    %v38 = vld [vmem:[%s1 + $0x18] sm:$0xff]
    %v39 = vld [vmem:[%s1 + $0x20] sm:$0xff]
    %v40 = vld [vmem:[%s1 + $0x28] sm:$0xff]
    %v41 = vld [vmem:[%s1 + $0x30] sm:$0xff]
    %v42 = vld [vmem:[%s1 + $0x38] sm:$0xff]
    %v43 = vld [vmem:[%s1 + $0x40] sm:$0xff]
    %v44 = vld [vmem:[%s1 + $0x48] sm:$0xff]
    %v45 = vld [vmem:[%s1 + $0x50] sm:$0xff]
    %v46 = vld [vmem:[%s1 + $0x58] sm:$0xff]
    %v47 = vld [vmem:[%s1 + $0x60] sm:$0xff]
    %v48 = vld [vmem:[%s1 + $0x68] sm:$0xff]
    %v49 = vld [vmem:[%s1 + $0x70] sm:$0xff]
    %v50 = vld [vmem:[%s1 + $0x78] sm:$0xff]
    %v51 = vld [vmem:[%s1 + $0x80] sm:$0xff]
    %v52 = vld [vmem:[%s0] sm:$0xff]
    %v53 = vld [vmem:[%s0 + $0x8] sm:$0xff]
    %v54 = vld [vmem:[%s0 + $0x10] sm:$0xff]
    %v55 = vld [vmem:[%s0 + $0x18] sm:$0xff]
    %v56 = vld [vmem:[%s0 + $0x20] sm:$0xff]
    %v57 = vld [vmem:[%s0 + $0x28] sm:$0xff]
    %v58 = vld [vmem:[%s0 + $0x30] sm:$0xff]
    %v59 = vld [vmem:[%s0 + $0x38] sm:$0xff]
    %v60 = vld [vmem:[%s0 + $0x40] sm:$0xff]
    %v61 = vld [vmem:[%s0 + $0x48] sm:$0xff]
    %v62 = vld [vmem:[%s0 + $0x50] sm:$0xff]
    %v63 = vld [vmem:[%s0 + $0x58] sm:$0xff]
    %v64 = vld [vmem:[%s0 + $0x60] sm:$0xff]
    %v65 = vld [vmem:[%s0 + $0x68] sm:$0xff]
    %v66 = vld [vmem:[%s0 + $0x70] sm:$0xff]
    %v67 = vld [vmem:[%s0 + $0x78] sm:$0xff]
    %69 = vset.pattern.permute.xlu0 0
    %70 = vperm.xlu0 %69, %v52
    %v71 = vpop.permute.xlu0 %70
    %74 = vset.pattern.permute.xlu0 0
    %75 = vperm.xlu0 %74, %v53
    %v76 = vpop.permute.xlu0 %75
    %79 = vset.pattern.permute.xlu0 0
    %80 = vperm.xlu0 %79, %v54
    %v81 = vpop.permute.xlu0 %80
    %84 = vset.pattern.permute.xlu0 0
    %85 = vperm.xlu0 %84, %v55
    %v86 = vpop.permute.xlu0 %85
    %89 = vset.pattern.permute.xlu0 0
    %90 = vperm.xlu0 %89, %v56
    %v91 = vpop.permute.xlu0 %90
    %94 = vset.pattern.permute.xlu0 0
    %95 = vperm.xlu0 %94, %v57
    %v96 = vpop.permute.xlu0 %95
    %99 = vset.pattern.permute.xlu0 0
    %100 = vperm.xlu0 %99, %v58
    %v101 = vpop.permute.xlu0 %100
    %104 = vset.pattern.permute.xlu0 0
    %105 = vperm.xlu0 %104, %v59
    %v106 = vpop.permute.xlu0 %105
    %109 = vset.pattern.permute.xlu0 0
    %110 = vperm.xlu0 %109, %v60
    %v111 = vpop.permute.xlu0 %110
    %114 = vset.pattern.permute.xlu0 0
    %115 = vperm.xlu0 %114, %v61
    %v116 = vpop.permute.xlu0 %115
    %119 = vset.pattern.permute.xlu0 0
    %120 = vperm.xlu0 %119, %v62
    %v121 = vpop.permute.xlu0 %120
    %124 = vset.pattern.permute.xlu0 0
    %125 = vperm.xlu0 %124, %v63
    %v126 = vpop.permute.xlu0 %125
    %129 = vset.pattern.permute.xlu0 0
    %130 = vperm.xlu0 %129, %v64
    %v131 = vpop.permute.xlu0 %130
    %134 = vset.pattern.permute.xlu0 0
    %135 = vperm.xlu0 %134, %v65
    %v136 = vpop.permute.xlu0 %135
    %139 = vset.pattern.permute.xlu0 0
    %140 = vperm.xlu0 %139, %v66
    %v141 = vpop.permute.xlu0 %140
    %144 = vset.pattern.permute.xlu0 0
    %145 = vperm.xlu0 %144, %v67
    %v146 = vpop.permute.xlu0 %145
    %v148 = vld [vmem:[%s2] sm:$0xff]
    %v149 = vld [vmem:[%s2 + $0x8] sm:$0xff]
    %v150 = vld [vmem:[%s2 + $0x10] sm:$0xff]
    %v151 = vld [vmem:[%s2 + $0x18] sm:$0xff]
    %v152 = vld [vmem:[%s2 + $0x20] sm:$0xff]
    %v153 = vld [vmem:[%s2 + $0x28] sm:$0xff]
    %v154 = vld [vmem:[%s2 + $0x30] sm:$0xff]
    %v155 = vld [vmem:[%s2 + $0x38] sm:$0xff]
    %v156 = vld [vmem:[%s2 + $0x40] sm:$0xff]
    %v157 = vld [vmem:[%s2 + $0x48] sm:$0xff]
    %v158 = vld [vmem:[%s2 + $0x50] sm:$0xff]
    %v159 = vld [vmem:[%s2 + $0x58] sm:$0xff]
    %v160 = vld [vmem:[%s2 + $0x60] sm:$0xff]
    %v161 = vld [vmem:[%s2 + $0x68] sm:$0xff]
    %v162 = vld [vmem:[%s2 + $0x70] sm:$0xff]
    %v163 = vld [vmem:[%s2 + $0x78] sm:$0xff]
    %165 = vset.pattern.permute.xlu0 0
    %166 = vperm.xlu0 %165, %v148
    %v167 = vpop.permute.xlu0 %166
    %170 = vset.pattern.permute.xlu0 0
    %171 = vperm.xlu0 %170, %v149
    %v172 = vpop.permute.xlu0 %171
    %175 = vset.pattern.permute.xlu0 0
    %176 = vperm.xlu0 %175, %v150
    %v177 = vpop.permute.xlu0 %176
    %180 = vset.pattern.permute.xlu0 0
    %181 = vperm.xlu0 %180, %v151
    %v182 = vpop.permute.xlu0 %181
    %185 = vset.pattern.permute.xlu0 0
    %186 = vperm.xlu0 %185, %v152
    %v187 = vpop.permute.xlu0 %186
    %190 = vset.pattern.permute.xlu0 0
    %191 = vperm.xlu0 %190, %v153
    %v192 = vpop.permute.xlu0 %191
    %195 = vset.pattern.permute.xlu0 0
    %196 = vperm.xlu0 %195, %v154
    %v197 = vpop.permute.xlu0 %196
    %200 = vset.pattern.permute.xlu0 0
    %201 = vperm.xlu0 %200, %v155
    %v202 = vpop.permute.xlu0 %201
    %205 = vset.pattern.permute.xlu0 0
    %206 = vperm.xlu0 %205, %v156
    %v207 = vpop.permute.xlu0 %206
    %210 = vset.pattern.permute.xlu0 0
    %211 = vperm.xlu0 %210, %v157
    %v212 = vpop.permute.xlu0 %211
    %215 = vset.pattern.permute.xlu0 0
    %216 = vperm.xlu0 %215, %v158
    %v217 = vpop.permute.xlu0 %216
    %220 = vset.pattern.permute.xlu0 0
    %221 = vperm.xlu0 %220, %v159
    %v222 = vpop.permute.xlu0 %221
    %225 = vset.pattern.permute.xlu0 0
    %226 = vperm.xlu0 %225, %v160
    %v227 = vpop.permute.xlu0 %226
    %230 = vset.pattern.permute.xlu0 0
    %231 = vperm.xlu0 %230, %v161
    %v232 = vpop.permute.xlu0 %231
    %235 = vset.pattern.permute.xlu0 0
    %236 = vperm.xlu0 %235, %v162
    %v237 = vpop.permute.xlu0 %236
    %240 = vset.pattern.permute.xlu0 0
    %241 = vperm.xlu0 %240, %v163
    %v242 = vpop.permute.xlu0 %241
    %v244 = vld [vmem:[#allocation2] sm:$0x1]
    %246 = vset.pattern.permute.xlu0 0
    %247 = vperm.xlu0 %246, %v244
    %v248 = vpop.permute.xlu0 %247
    %v250 = vperm.slane %v248, 0
    loop: start=0, step=1, limit=8
    $region34: #{tpu_custom_call.1} parent=1 // loop_pre_header
      _
    $region35: #{tpu_custom_call.1} parent=1 // loop_header
      %s252 = sphi 0, %s256
      %p253 = scmp.ge.s32.totalorder %s252, 8
      %v257 = vphi 0.0, %v3395
      %v258 = vphi 0.0, %v3398
      %v259 = vphi 0.0, %v3401
      %v260 = vphi 0.0, %v3404
      %v261 = vphi 0.0, %v3407
      %v262 = vphi 0.0, %v3410
      %v263 = vphi 0.0, %v3413
      %v264 = vphi 0.0, %v3416
      %v265 = vphi 0.0, %v3419
      %v266 = vphi 0.0, %v3422
      %v267 = vphi 0.0, %v3425
      %v268 = vphi 0.0, %v3428
      %v269 = vphi 0.0, %v3431
      %v270 = vphi 0.0, %v3434
      %v271 = vphi 0.0, %v3437
      %v272 = vphi 0.0, %v3440
      %v273 = vphi 0.0, %v3365
      %v274 = vphi 0.0, %v3366
      %v275 = vphi 0.0, %v3367
      %v276 = vphi 0.0, %v3368
      %v277 = vphi 0.0, %v3467
    $region36: #{tpu_custom_call.1} parent=1 // loop_header_branch
      %255 = sbr.rel (%p253) target = $region40
    $region37: #{tpu_custom_call.1} parent=1 // loop_body
      %s278 = smul.u32 %s252, 8
      %s279 = scalar_lea.vmem %s6, %s278
      %v280 = vld [vmem:[%s279] sm:$0xff]
      %v281 = vperm.slane %v277, 0
      %v282 = vmul.f32 %v71, %v281
      %v283 = vmul.f32 %v76, %v281
      %v284 = vmul.f32 %v81, %v281
      %v285 = vmul.f32 %v86, %v281
      %v286 = vmul.f32 %v91, %v281
      %v287 = vmul.f32 %v96, %v281
      %v288 = vmul.f32 %v101, %v281
      %v289 = vmul.f32 %v106, %v281
      %v290 = vmul.f32 %v111, %v281
      %v291 = vmul.f32 %v116, %v281
      %v292 = vmul.f32 %v121, %v281
      %v293 = vmul.f32 %v126, %v281
      %v294 = vmul.f32 %v131, %v281
      %v295 = vmul.f32 %v136, %v281
      %v296 = vmul.f32 %v141, %v281
      %v297 = vmul.f32 %v146, %v281
      %v298 = vadd.f32 %v282, %v257
      %v299 = vadd.f32 %v283, %v258
      %v300 = vadd.f32 %v284, %v259
      %v301 = vadd.f32 %v285, %v260
      %v302 = vadd.f32 %v286, %v261
      %v303 = vadd.f32 %v287, %v262
      %v304 = vadd.f32 %v288, %v263
      %v305 = vadd.f32 %v289, %v264
      %v306 = vadd.f32 %v290, %v265
      %v307 = vadd.f32 %v291, %v266
      %v308 = vadd.f32 %v292, %v267
      %v309 = vadd.f32 %v293, %v268
      %v310 = vadd.f32 %v294, %v269
      %v311 = vadd.f32 %v295, %v270
      %v312 = vadd.f32 %v296, %v271
      %v313 = vadd.f32 %v297, %v272
      %v314 = vadd.f32 %v298, %v167
      %v315 = vadd.f32 %v299, %v172
      %v316 = vadd.f32 %v300, %v177
      %v317 = vadd.f32 %v301, %v182
      %v318 = vadd.f32 %v302, %v187
      %v319 = vadd.f32 %v303, %v192
      %v320 = vadd.f32 %v304, %v197
      %v321 = vadd.f32 %v305, %v202
      %v322 = vadd.f32 %v306, %v207
      %v323 = vadd.f32 %v307, %v212
      %v324 = vadd.f32 %v308, %v217
      %v325 = vadd.f32 %v309, %v222
      %v326 = vadd.f32 %v310, %v227
      %v327 = vadd.f32 %v311, %v232
      %v328 = vadd.f32 %v312, %v237
      %v329 = vadd.f32 %v313, %v242
      %v330 = vxor.u32 %v314, 2147483648
      %v331 = vxor.u32 %v315, 2147483648
      %v332 = vxor.u32 %v316, 2147483648
      %v333 = vxor.u32 %v317, 2147483648
      %v334 = vmul.f32 %v330, 1.442695
      %v335 = vpow.pop %v334
      %v336 = vmul.f32 %v331, 1.442695
      %v337 = vpow.pop %v336
      %v338 = vmul.f32 %v332, 1.442695
      %v339 = vpow.pop %v338
      %v340 = vmul.f32 %v333, 1.442695
      %v341 = vpow.pop %v340
      %v342 = vadd.f32 %v335, 1.0
      %v343 = vadd.f32 %v337, 1.0
      %v344 = vadd.f32 %v339, 1.0
      %v345 = vadd.f32 %v341, 1.0
      %v346 = vrcp.pop %v342
      %v347 = vmul.f32 %v342, %v346
      %v348 = vsub.f32 1.0, %v347
      %v349 = vmul.f32 %v346, %v348
      %v350 = vadd.f32 %v346, %v349
      %vm351 = vweird.f32 %v342
      %vm352 = vweird.f32 %v346
      %vm353 = vmor %vm351, %vm352
      %v354 = vsel %vm353, %v346, %v350
      %v355 = vand.u32 2147483647, %v342
      %vm356 = vcmp.eq.f32.partialorder %v355, 8.507059e+37
      %v357 = vand.u32 %v342, 2147483648
      %v358 = vor.u32 1.1754944e-38, %v357
      %v359 = vsel %vm356, %v358, %v354
      %v360 = vmul.f32 1.0, %v359
      %v361 = vrcp.pop %v343
      %v362 = vmul.f32 %v343, %v361
      %v363 = vsub.f32 1.0, %v362
      %v364 = vmul.f32 %v361, %v363
      %v365 = vadd.f32 %v361, %v364
      %vm366 = vweird.f32 %v343
      %vm367 = vweird.f32 %v361
      %vm368 = vmor %vm366, %vm367
      %v369 = vsel %vm368, %v361, %v365
      %v370 = vand.u32 2147483647, %v343
      %vm371 = vcmp.eq.f32.partialorder %v370, 8.507059e+37
      %v372 = vand.u32 %v343, 2147483648
      %v373 = vor.u32 1.1754944e-38, %v372
      %v374 = vsel %vm371, %v373, %v369
      %v375 = vmul.f32 1.0, %v374
      %v376 = vrcp.pop %v344
      %v377 = vmul.f32 %v344, %v376
      %v378 = vsub.f32 1.0, %v377
      %v379 = vmul.f32 %v376, %v378
      %v380 = vadd.f32 %v376, %v379
      %vm381 = vweird.f32 %v344
      %vm382 = vweird.f32 %v376
      %vm383 = vmor %vm381, %vm382
      %v384 = vsel %vm383, %v376, %v380
      %v385 = vand.u32 2147483647, %v344
      %vm386 = vcmp.eq.f32.partialorder %v385, 8.507059e+37
      %v387 = vand.u32 %v344, 2147483648
      %v388 = vor.u32 1.1754944e-38, %v387
      %v389 = vsel %vm386, %v388, %v384
      %v390 = vmul.f32 1.0, %v389
      %v391 = vrcp.pop %v345
      %v392 = vmul.f32 %v345, %v391
      %v393 = vsub.f32 1.0, %v392
      %v394 = vmul.f32 %v391, %v393
      %v395 = vadd.f32 %v391, %v394
      %vm396 = vweird.f32 %v345
      %vm397 = vweird.f32 %v391
      %vm398 = vmor %vm396, %vm397
      %v399 = vsel %vm398, %v391, %v395
      %v400 = vand.u32 2147483647, %v345
      %vm401 = vcmp.eq.f32.partialorder %v400, 8.507059e+37
      %v402 = vand.u32 %v345, 2147483648
      %v403 = vor.u32 1.1754944e-38, %v402
      %v404 = vsel %vm401, %v403, %v399
      %v405 = vmul.f32 1.0, %v404
      %v406 = vxor.u32 %v318, 2147483648
      %v407 = vxor.u32 %v319, 2147483648
      %v408 = vxor.u32 %v320, 2147483648
      %v409 = vxor.u32 %v321, 2147483648
      %v410 = vmul.f32 %v406, 1.442695
      %v411 = vpow.pop %v410
      %v412 = vmul.f32 %v407, 1.442695
      %v413 = vpow.pop %v412
      %v414 = vmul.f32 %v408, 1.442695
      %v415 = vpow.pop %v414
      %v416 = vmul.f32 %v409, 1.442695
      %v417 = vpow.pop %v416
      %v418 = vadd.f32 %v411, 1.0
      %v419 = vadd.f32 %v413, 1.0
      %v420 = vadd.f32 %v415, 1.0
      %v421 = vadd.f32 %v417, 1.0
      %v422 = vrcp.pop %v418
      %v423 = vmul.f32 %v418, %v422
      %v424 = vsub.f32 1.0, %v423
      %v425 = vmul.f32 %v422, %v424
      %v426 = vadd.f32 %v422, %v425
      %vm427 = vweird.f32 %v418
      %vm428 = vweird.f32 %v422
      %vm429 = vmor %vm427, %vm428
      %v430 = vsel %vm429, %v422, %v426
      %v431 = vand.u32 2147483647, %v418
      %vm432 = vcmp.eq.f32.partialorder %v431, 8.507059e+37
      %v433 = vand.u32 %v418, 2147483648
      %v434 = vor.u32 1.1754944e-38, %v433
      %v435 = vsel %vm432, %v434, %v430
      %v436 = vmul.f32 1.0, %v435
      %v437 = vrcp.pop %v419
      %v438 = vmul.f32 %v419, %v437
      %v439 = vsub.f32 1.0, %v438
      %v440 = vmul.f32 %v437, %v439
      %v441 = vadd.f32 %v437, %v440
      %vm442 = vweird.f32 %v419
      %vm443 = vweird.f32 %v437
      %vm444 = vmor %vm442, %vm443
      %v445 = vsel %vm444, %v437, %v441
      %v446 = vand.u32 2147483647, %v419
      %vm447 = vcmp.eq.f32.partialorder %v446, 8.507059e+37
      %v448 = vand.u32 %v419, 2147483648
      %v449 = vor.u32 1.1754944e-38, %v448
      %v450 = vsel %vm447, %v449, %v445
      %v451 = vmul.f32 1.0, %v450
      %v452 = vrcp.pop %v420
      %v453 = vmul.f32 %v420, %v452
      %v454 = vsub.f32 1.0, %v453
      %v455 = vmul.f32 %v452, %v454
      %v456 = vadd.f32 %v452, %v455
      %vm457 = vweird.f32 %v420
      %vm458 = vweird.f32 %v452
      %vm459 = vmor %vm457, %vm458
      %v460 = vsel %vm459, %v452, %v456
      %v461 = vand.u32 2147483647, %v420
      %vm462 = vcmp.eq.f32.partialorder %v461, 8.507059e+37
      %v463 = vand.u32 %v420, 2147483648
      %v464 = vor.u32 1.1754944e-38, %v463
      %v465 = vsel %vm462, %v464, %v460
      %v466 = vmul.f32 1.0, %v465
      %v467 = vrcp.pop %v421
      %v468 = vmul.f32 %v421, %v467
      %v469 = vsub.f32 1.0, %v468
      %v470 = vmul.f32 %v467, %v469
      %v471 = vadd.f32 %v467, %v470
      %vm472 = vweird.f32 %v421
      %vm473 = vweird.f32 %v467
      %vm474 = vmor %vm472, %vm473
      %v475 = vsel %vm474, %v467, %v471
      %v476 = vand.u32 2147483647, %v421
      %vm477 = vcmp.eq.f32.partialorder %v476, 8.507059e+37
      %v478 = vand.u32 %v421, 2147483648
      %v479 = vor.u32 1.1754944e-38, %v478
      %v480 = vsel %vm477, %v479, %v475
      %v481 = vmul.f32 1.0, %v480
      %v482 = vtanh.pop %v322
      %v483 = vtanh.pop %v323
      %v484 = vtanh.pop %v324
      %v485 = vtanh.pop %v325
      %v486 = vxor.u32 %v326, 2147483648
      %v487 = vxor.u32 %v327, 2147483648
      %v488 = vxor.u32 %v328, 2147483648
      %v489 = vxor.u32 %v329, 2147483648
      %v490 = vmul.f32 %v486, 1.442695
      %v491 = vpow.pop %v490
      %v492 = vmul.f32 %v487, 1.442695
      %v493 = vpow.pop %v492
      %v494 = vmul.f32 %v488, 1.442695
      %v495 = vpow.pop %v494
      %v496 = vmul.f32 %v489, 1.442695
      %v497 = vpow.pop %v496
      %v498 = vadd.f32 %v491, 1.0
      %v499 = vadd.f32 %v493, 1.0
      %v500 = vadd.f32 %v495, 1.0
      %v501 = vadd.f32 %v497, 1.0
      %v502 = vrcp.pop %v498
      %v503 = vmul.f32 %v498, %v502
      %v504 = vsub.f32 1.0, %v503
      %v505 = vmul.f32 %v502, %v504
      %v506 = vadd.f32 %v502, %v505
      %vm507 = vweird.f32 %v498
      %vm508 = vweird.f32 %v502
      %vm509 = vmor %vm507, %vm508
      %v510 = vsel %vm509, %v502, %v506
      %v511 = vand.u32 2147483647, %v498
      %vm512 = vcmp.eq.f32.partialorder %v511, 8.507059e+37
      %v513 = vand.u32 %v498, 2147483648
      %v514 = vor.u32 1.1754944e-38, %v513
      %v515 = vsel %vm512, %v514, %v510
      %v516 = vmul.f32 1.0, %v515
      %v517 = vrcp.pop %v499
      %v518 = vmul.f32 %v499, %v517
      %v519 = vsub.f32 1.0, %v518
      %v520 = vmul.f32 %v517, %v519
      %v521 = vadd.f32 %v517, %v520
      %vm522 = vweird.f32 %v499
      %vm523 = vweird.f32 %v517
      %vm524 = vmor %vm522, %vm523
      %v525 = vsel %vm524, %v517, %v521
      %v526 = vand.u32 2147483647, %v499
      %vm527 = vcmp.eq.f32.partialorder %v526, 8.507059e+37
      %v528 = vand.u32 %v499, 2147483648
      %v529 = vor.u32 1.1754944e-38, %v528
      %v530 = vsel %vm527, %v529, %v525
      %v531 = vmul.f32 1.0, %v530
      %v532 = vrcp.pop %v500
      %v533 = vmul.f32 %v500, %v532
      %v534 = vsub.f32 1.0, %v533
      %v535 = vmul.f32 %v532, %v534
      %v536 = vadd.f32 %v532, %v535
      %vm537 = vweird.f32 %v500
      %vm538 = vweird.f32 %v532
      %vm539 = vmor %vm537, %vm538
      %v540 = vsel %vm539, %v532, %v536
      %v541 = vand.u32 2147483647, %v500
      %vm542 = vcmp.eq.f32.partialorder %v541, 8.507059e+37
      %v543 = vand.u32 %v500, 2147483648
      %v544 = vor.u32 1.1754944e-38, %v543
      %v545 = vsel %vm542, %v544, %v540
      %v546 = vmul.f32 1.0, %v545
      %v547 = vrcp.pop %v501
      %v548 = vmul.f32 %v501, %v547
      %v549 = vsub.f32 1.0, %v548
      %v550 = vmul.f32 %v547, %v549
      %v551 = vadd.f32 %v547, %v550
      %vm552 = vweird.f32 %v501
      %vm553 = vweird.f32 %v547
      %vm554 = vmor %vm552, %vm553
      %v555 = vsel %vm554, %v547, %v551
      %v556 = vand.u32 2147483647, %v501
      %vm557 = vcmp.eq.f32.partialorder %v556, 8.507059e+37
      %v558 = vand.u32 %v501, 2147483648
      %v559 = vor.u32 1.1754944e-38, %v558
      %v560 = vsel %vm557, %v559, %v555
      %v561 = vmul.f32 1.0, %v560
      %v562 = vmul.f32 %v436, %v273
      %v563 = vmul.f32 %v451, %v274
      %v564 = vmul.f32 %v466, %v275
      %v565 = vmul.f32 %v481, %v276
      %v566 = vmul.f32 %v360, %v482
      %v567 = vmul.f32 %v375, %v483
      %v568 = vmul.f32 %v390, %v484
      %v569 = vmul.f32 %v405, %v485
      %v570 = vadd.f32 %v562, %v566
      %v571 = vadd.f32 %v563, %v567
      %v572 = vadd.f32 %v564, %v568
      %v573 = vadd.f32 %v565, %v569
      %v574 = vtanh.pop %v570
      %v575 = vtanh.pop %v571
      %v576 = vtanh.pop %v572
      %v577 = vtanh.pop %v573
      %v578 = vmul.f32 %v516, %v574
      %v579 = vmul.f32 %v531, %v575
      %v580 = vmul.f32 %v546, %v576
      %v581 = vmul.f32 %v561, %v577
      %vm582 = vcmask 261120
      %v584 = vsel %vm582, %v35, 0
      %v587 = vsel %vm582, %v36, 0
      %v590 = vsel %vm582, %v37, 0
      %v593 = vsel %vm582, %v38, 0
      %v596 = vsel %vm582, %v39, 0
      %v599 = vsel %vm582, %v40, 0
      %v602 = vsel %vm582, %v41, 0
      %v605 = vsel %vm582, %v42, 0
      %v608 = vsel %vm582, %v43, 0
      %v611 = vsel %vm582, %v44, 0
      %v614 = vsel %vm582, %v45, 0
      %v617 = vsel %vm582, %v46, 0
      %v620 = vsel %vm582, %v47, 0
      %v623 = vsel %vm582, %v48, 0
      %v626 = vsel %vm582, %v49, 0
      %v629 = vsel %vm582, %v50, 0
      %v632 = vsel %vm582, %v51, 0
      %634 = vmatpush.msra.mxu0 0.0
      %635 = vmatpush.msra.mxu0 0.0
      %636 = vmatpush.msra.mxu0 0.0
      %637 = vmatpush.msra.mxu0 0.0
      %638 = vmatpush.msra.mxu0 0.0
      %639 = vmatpush.msra.mxu0 0.0
      %640 = vmatpush.msra.mxu0 0.0
      %641 = vmatpush.msra.mxu0 0.0
      %642 = vmatpush.msra.mxu0 0.0
      %643 = vmatpush.msra.mxu0 0.0
      %644 = vmatpush.msra.mxu0 0.0
      %645 = vmatpush.msra.mxu0 0.0
      %646 = vmatpush.msra.mxu0 %v581
      %647 = vmatpush.msra.mxu0 %v580
      %648 = vmatpush.msra.mxu0 %v579
      %649 = vmatpush.msra.mxu0 %v578
      %650 = vmatmul.f32.gmra.mxu0 %v584
      %v651 = vpop.f32.mrf.mxu0
      %v652 = vadd.f32 0.0, %v651
      %653 = vmatmul.f32.gmra.mxu0 %v587
      %v654 = vpop.f32.mrf.mxu0
      %v655 = vadd.f32 0.0, %v654
      %656 = vmatmul.f32.gmra.mxu0 %v590
      %v657 = vpop.f32.mrf.mxu0
      %v658 = vadd.f32 0.0, %v657
      %659 = vmatmul.f32.gmra.mxu0 %v593
      %v660 = vpop.f32.mrf.mxu0
      %v661 = vadd.f32 0.0, %v660
      %662 = vmatmul.f32.gmra.mxu0 %v596
      %v663 = vpop.f32.mrf.mxu0
      %v664 = vadd.f32 0.0, %v663
      %665 = vmatmul.f32.gmra.mxu0 %v599
      %v666 = vpop.f32.mrf.mxu0
      %v667 = vadd.f32 0.0, %v666
      %668 = vmatmul.f32.gmra.mxu0 %v602
      %v669 = vpop.f32.mrf.mxu0
      %v670 = vadd.f32 0.0, %v669
      %671 = vmatmul.f32.gmra.mxu0 %v605
      %v672 = vpop.f32.mrf.mxu0
      %v673 = vadd.f32 0.0, %v672
      %674 = vmatmul.f32.gmra.mxu0 %v608
      %v675 = vpop.f32.mrf.mxu0
      %v676 = vadd.f32 0.0, %v675
      %677 = vmatmul.f32.gmra.mxu0 %v611
      %v678 = vpop.f32.mrf.mxu0
      %v679 = vadd.f32 0.0, %v678
      %680 = vmatmul.f32.gmra.mxu0 %v614
      %v681 = vpop.f32.mrf.mxu0
      %v682 = vadd.f32 0.0, %v681
      %683 = vmatmul.f32.gmra.mxu0 %v617
      %v684 = vpop.f32.mrf.mxu0
      %v685 = vadd.f32 0.0, %v684
      %686 = vmatmul.f32.gmra.mxu0 %v620
      %v687 = vpop.f32.mrf.mxu0
      %v688 = vadd.f32 0.0, %v687
      %689 = vmatmul.f32.gmra.mxu0 %v623
      %v690 = vpop.f32.mrf.mxu0
      %v691 = vadd.f32 0.0, %v690
      %692 = vmatmul.f32.gmra.mxu0 %v626
      %v693 = vpop.f32.mrf.mxu0
      %v694 = vadd.f32 0.0, %v693
      %695 = vmatmul.f32.gmra.mxu0 %v629
      %v696 = vpop.f32.mrf.mxu0
      %v697 = vadd.f32 0.0, %v696
      %698 = vmatmul.f32.gmra.mxu0 %v632
      %v699 = vpop.f32.mrf.mxu0
      %v700 = vadd.f32 0.0, %v699
      %701 = vdwg.mxu0
      %v702 = vadd.f32 %v700, %v250
      %v703 = vadd.f32 %v702, %v280
      %v704 = vxor.u32 %v703, 2147483648
      %v705 = vmul.f32 %v704, 1.442695
      %v706 = vpow.pop %v705
      %v707 = vadd.f32 %v706, 1.0
      %v708 = vrcp.pop %v707
      %v709 = vmul.f32 %v707, %v708
      %v710 = vsub.f32 1.0, %v709
      %v711 = vmul.f32 %v708, %v710
      %v712 = vadd.f32 %v708, %v711
      %vm713 = vweird.f32 %v707
      %vm714 = vweird.f32 %v708
      %vm715 = vmor %vm713, %vm714
      %v716 = vsel %vm715, %v708, %v712
      %v717 = vand.u32 2147483647, %v707
      %vm718 = vcmp.eq.f32.partialorder %v717, 8.507059e+37
      %v719 = vand.u32 %v707, 2147483648
      %v720 = vor.u32 1.1754944e-38, %v719
      %v721 = vsel %vm718, %v720, %v716
      %v722 = vmul.f32 1.0, %v721
      %v723 = vperm.slane %v722, 0
      %v724 = vmul.f32 %v71, %v723
      %v725 = vmul.f32 %v76, %v723
      %v726 = vmul.f32 %v81, %v723
      %v727 = vmul.f32 %v86, %v723
      %v728 = vmul.f32 %v91, %v723
      %v729 = vmul.f32 %v96, %v723
      %v730 = vmul.f32 %v101, %v723
      %v731 = vmul.f32 %v106, %v723
      %v732 = vmul.f32 %v111, %v723
      %v733 = vmul.f32 %v116, %v723
      %v734 = vmul.f32 %v121, %v723
      %v735 = vmul.f32 %v126, %v723
      %v736 = vmul.f32 %v131, %v723
      %v737 = vmul.f32 %v136, %v723
      %v738 = vmul.f32 %v141, %v723
      %v739 = vmul.f32 %v146, %v723
      %v740 = vadd.f32 %v724, %v652
      %v741 = vadd.f32 %v725, %v655
      %v742 = vadd.f32 %v726, %v658
      %v743 = vadd.f32 %v727, %v661
      %v744 = vadd.f32 %v728, %v664
      %v745 = vadd.f32 %v729, %v667
      %v746 = vadd.f32 %v730, %v670
      %v747 = vadd.f32 %v731, %v673
      %v748 = vadd.f32 %v732, %v676
      %v749 = vadd.f32 %v733, %v679
      %v750 = vadd.f32 %v734, %v682
      %v751 = vadd.f32 %v735, %v685
      %v752 = vadd.f32 %v736, %v688
      %v753 = vadd.f32 %v737, %v691
      %v754 = vadd.f32 %v738, %v694
      %v755 = vadd.f32 %v739, %v697
      %v756 = vadd.f32 %v740, %v167
      %v757 = vadd.f32 %v741, %v172
      %v758 = vadd.f32 %v742, %v177
      %v759 = vadd.f32 %v743, %v182
      %v760 = vadd.f32 %v744, %v187
      %v761 = vadd.f32 %v745, %v192
      %v762 = vadd.f32 %v746, %v197
      %v763 = vadd.f32 %v747, %v202
      %v764 = vadd.f32 %v748, %v207
      %v765 = vadd.f32 %v749, %v212
      %v766 = vadd.f32 %v750, %v217
      %v767 = vadd.f32 %v751, %v222
      %v768 = vadd.f32 %v752, %v227
      %v769 = vadd.f32 %v753, %v232
      %v770 = vadd.f32 %v754, %v237
      %v771 = vadd.f32 %v755, %v242
      %v772 = vxor.u32 %v756, 2147483648
      %v773 = vxor.u32 %v757, 2147483648
      %v774 = vxor.u32 %v758, 2147483648
      %v775 = vxor.u32 %v759, 2147483648
      %v776 = vmul.f32 %v772, 1.442695
      %v777 = vpow.pop %v776
      %v778 = vmul.f32 %v773, 1.442695
      %v779 = vpow.pop %v778
      %v780 = vmul.f32 %v774, 1.442695
      %v781 = vpow.pop %v780
      %v782 = vmul.f32 %v775, 1.442695
      %v783 = vpow.pop %v782
      %v784 = vadd.f32 %v777, 1.0
      %v785 = vadd.f32 %v779, 1.0
      %v786 = vadd.f32 %v781, 1.0
      %v787 = vadd.f32 %v783, 1.0
      %v788 = vrcp.pop %v784
      %v789 = vmul.f32 %v784, %v788
      %v790 = vsub.f32 1.0, %v789
      %v791 = vmul.f32 %v788, %v790
      %v792 = vadd.f32 %v788, %v791
      %vm793 = vweird.f32 %v784
      %vm794 = vweird.f32 %v788
      %vm795 = vmor %vm793, %vm794
      %v796 = vsel %vm795, %v788, %v792
      %v797 = vand.u32 2147483647, %v784
      %vm798 = vcmp.eq.f32.partialorder %v797, 8.507059e+37
      %v799 = vand.u32 %v784, 2147483648
      %v800 = vor.u32 1.1754944e-38, %v799
      %v801 = vsel %vm798, %v800, %v796
      %v802 = vmul.f32 1.0, %v801
      %v803 = vrcp.pop %v785
      %v804 = vmul.f32 %v785, %v803
      %v805 = vsub.f32 1.0, %v804
      %v806 = vmul.f32 %v803, %v805
      %v807 = vadd.f32 %v803, %v806
      %vm808 = vweird.f32 %v785
      %vm809 = vweird.f32 %v803
      %vm810 = vmor %vm808, %vm809
      %v811 = vsel %vm810, %v803, %v807
      %v812 = vand.u32 2147483647, %v785
      %vm813 = vcmp.eq.f32.partialorder %v812, 8.507059e+37
      %v814 = vand.u32 %v785, 2147483648
      %v815 = vor.u32 1.1754944e-38, %v814
      %v816 = vsel %vm813, %v815, %v811
      %v817 = vmul.f32 1.0, %v816
      %v818 = vrcp.pop %v786
      %v819 = vmul.f32 %v786, %v818
      %v820 = vsub.f32 1.0, %v819
      %v821 = vmul.f32 %v818, %v820
      %v822 = vadd.f32 %v818, %v821
      %vm823 = vweird.f32 %v786
      %vm824 = vweird.f32 %v818
      %vm825 = vmor %vm823, %vm824
      %v826 = vsel %vm825, %v818, %v822
      %v827 = vand.u32 2147483647, %v786
      %vm828 = vcmp.eq.f32.partialorder %v827, 8.507059e+37
      %v829 = vand.u32 %v786, 2147483648
      %v830 = vor.u32 1.1754944e-38, %v829
      %v831 = vsel %vm828, %v830, %v826
      %v832 = vmul.f32 1.0, %v831
      %v833 = vrcp.pop %v787
      %v834 = vmul.f32 %v787, %v833
      %v835 = vsub.f32 1.0, %v834
      %v836 = vmul.f32 %v833, %v835
      %v837 = vadd.f32 %v833, %v836
      %vm838 = vweird.f32 %v787
      %vm839 = vweird.f32 %v833
      %vm840 = vmor %vm838, %vm839
      %v841 = vsel %vm840, %v833, %v837
      %v842 = vand.u32 2147483647, %v787
      %vm843 = vcmp.eq.f32.partialorder %v842, 8.507059e+37
      %v844 = vand.u32 %v787, 2147483648
      %v845 = vor.u32 1.1754944e-38, %v844
      %v846 = vsel %vm843, %v845, %v841
      %v847 = vmul.f32 1.0, %v846
      %v848 = vxor.u32 %v760, 2147483648
      %v849 = vxor.u32 %v761, 2147483648
      %v850 = vxor.u32 %v762, 2147483648
      %v851 = vxor.u32 %v763, 2147483648
      %v852 = vmul.f32 %v848, 1.442695
      %v853 = vpow.pop %v852
      %v854 = vmul.f32 %v849, 1.442695
      %v855 = vpow.pop %v854
      %v856 = vmul.f32 %v850, 1.442695
      %v857 = vpow.pop %v856
      %v858 = vmul.f32 %v851, 1.442695
      %v859 = vpow.pop %v858
      %v860 = vadd.f32 %v853, 1.0
      %v861 = vadd.f32 %v855, 1.0
      %v862 = vadd.f32 %v857, 1.0
      %v863 = vadd.f32 %v859, 1.0
      %v864 = vrcp.pop %v860
      %v865 = vmul.f32 %v860, %v864
      %v866 = vsub.f32 1.0, %v865
      %v867 = vmul.f32 %v864, %v866
      %v868 = vadd.f32 %v864, %v867
      %vm869 = vweird.f32 %v860
      %vm870 = vweird.f32 %v864
      %vm871 = vmor %vm869, %vm870
      %v872 = vsel %vm871, %v864, %v868
      %v873 = vand.u32 2147483647, %v860
      %vm874 = vcmp.eq.f32.partialorder %v873, 8.507059e+37
      %v875 = vand.u32 %v860, 2147483648
      %v876 = vor.u32 1.1754944e-38, %v875
      %v877 = vsel %vm874, %v876, %v872
      %v878 = vmul.f32 1.0, %v877
      %v879 = vrcp.pop %v861
      %v880 = vmul.f32 %v861, %v879
      %v881 = vsub.f32 1.0, %v880
      %v882 = vmul.f32 %v879, %v881
      %v883 = vadd.f32 %v879, %v882
      %vm884 = vweird.f32 %v861
      %vm885 = vweird.f32 %v879
      %vm886 = vmor %vm884, %vm885
      %v887 = vsel %vm886, %v879, %v883
      %v888 = vand.u32 2147483647, %v861
      %vm889 = vcmp.eq.f32.partialorder %v888, 8.507059e+37
      %v890 = vand.u32 %v861, 2147483648
      %v891 = vor.u32 1.1754944e-38, %v890
      %v892 = vsel %vm889, %v891, %v887
      %v893 = vmul.f32 1.0, %v892
      %v894 = vrcp.pop %v862
      %v895 = vmul.f32 %v862, %v894
      %v896 = vsub.f32 1.0, %v895
      %v897 = vmul.f32 %v894, %v896
      %v898 = vadd.f32 %v894, %v897
      %vm899 = vweird.f32 %v862
      %vm900 = vweird.f32 %v894
      %vm901 = vmor %vm899, %vm900
      %v902 = vsel %vm901, %v894, %v898
      %v903 = vand.u32 2147483647, %v862
      %vm904 = vcmp.eq.f32.partialorder %v903, 8.507059e+37
      %v905 = vand.u32 %v862, 2147483648
      %v906 = vor.u32 1.1754944e-38, %v905
      %v907 = vsel %vm904, %v906, %v902
      %v908 = vmul.f32 1.0, %v907
      %v909 = vrcp.pop %v863
      %v910 = vmul.f32 %v863, %v909
      %v911 = vsub.f32 1.0, %v910
      %v912 = vmul.f32 %v909, %v911
      %v913 = vadd.f32 %v909, %v912
      %vm914 = vweird.f32 %v863
      %vm915 = vweird.f32 %v909
      %vm916 = vmor %vm914, %vm915
      %v917 = vsel %vm916, %v909, %v913
      %v918 = vand.u32 2147483647, %v863
      %vm919 = vcmp.eq.f32.partialorder %v918, 8.507059e+37
      %v920 = vand.u32 %v863, 2147483648
      %v921 = vor.u32 1.1754944e-38, %v920
      %v922 = vsel %vm919, %v921, %v917
      %v923 = vmul.f32 1.0, %v922
      %v924 = vtanh.pop %v764
      %v925 = vtanh.pop %v765
      %v926 = vtanh.pop %v766
      %v927 = vtanh.pop %v767
      %v928 = vxor.u32 %v768, 2147483648
      %v929 = vxor.u32 %v769, 2147483648
      %v930 = vxor.u32 %v770, 2147483648
      %v931 = vxor.u32 %v771, 2147483648
      %v932 = vmul.f32 %v928, 1.442695
      %v933 = vpow.pop %v932
      %v934 = vmul.f32 %v929, 1.442695
      %v935 = vpow.pop %v934
      %v936 = vmul.f32 %v930, 1.442695
      %v937 = vpow.pop %v936
      %v938 = vmul.f32 %v931, 1.442695
      %v939 = vpow.pop %v938
      %v940 = vadd.f32 %v933, 1.0
      %v941 = vadd.f32 %v935, 1.0
      %v942 = vadd.f32 %v937, 1.0
      %v943 = vadd.f32 %v939, 1.0
      %v944 = vrcp.pop %v940
      %v945 = vmul.f32 %v940, %v944
      %v946 = vsub.f32 1.0, %v945
      %v947 = vmul.f32 %v944, %v946
      %v948 = vadd.f32 %v944, %v947
      %vm949 = vweird.f32 %v940
      %vm950 = vweird.f32 %v944
      %vm951 = vmor %vm949, %vm950
      %v952 = vsel %vm951, %v944, %v948
      %v953 = vand.u32 2147483647, %v940
      %vm954 = vcmp.eq.f32.partialorder %v953, 8.507059e+37
      %v955 = vand.u32 %v940, 2147483648
      %v956 = vor.u32 1.1754944e-38, %v955
      %v957 = vsel %vm954, %v956, %v952
      %v958 = vmul.f32 1.0, %v957
      %v959 = vrcp.pop %v941
      %v960 = vmul.f32 %v941, %v959
      %v961 = vsub.f32 1.0, %v960
      %v962 = vmul.f32 %v959, %v961
      %v963 = vadd.f32 %v959, %v962
      %vm964 = vweird.f32 %v941
      %vm965 = vweird.f32 %v959
      %vm966 = vmor %vm964, %vm965
      %v967 = vsel %vm966, %v959, %v963
      %v968 = vand.u32 2147483647, %v941
      %vm969 = vcmp.eq.f32.partialorder %v968, 8.507059e+37
      %v970 = vand.u32 %v941, 2147483648
      %v971 = vor.u32 1.1754944e-38, %v970
      %v972 = vsel %vm969, %v971, %v967
      %v973 = vmul.f32 1.0, %v972
      %v974 = vrcp.pop %v942
      %v975 = vmul.f32 %v942, %v974
      %v976 = vsub.f32 1.0, %v975
      %v977 = vmul.f32 %v974, %v976
      %v978 = vadd.f32 %v974, %v977
      %vm979 = vweird.f32 %v942
      %vm980 = vweird.f32 %v974
      %vm981 = vmor %vm979, %vm980
      %v982 = vsel %vm981, %v974, %v978
      %v983 = vand.u32 2147483647, %v942
      %vm984 = vcmp.eq.f32.partialorder %v983, 8.507059e+37
      %v985 = vand.u32 %v942, 2147483648
      %v986 = vor.u32 1.1754944e-38, %v985
      %v987 = vsel %vm984, %v986, %v982
      %v988 = vmul.f32 1.0, %v987
      %v989 = vrcp.pop %v943
      %v990 = vmul.f32 %v943, %v989
      %v991 = vsub.f32 1.0, %v990
      %v992 = vmul.f32 %v989, %v991
      %v993 = vadd.f32 %v989, %v992
      %vm994 = vweird.f32 %v943
      %vm995 = vweird.f32 %v989
      %vm996 = vmor %vm994, %vm995
      %v997 = vsel %vm996, %v989, %v993
      %v998 = vand.u32 2147483647, %v943
      %vm999 = vcmp.eq.f32.partialorder %v998, 8.507059e+37
      %v1000 = vand.u32 %v943, 2147483648
      %v1001 = vor.u32 1.1754944e-38, %v1000
      %v1002 = vsel %vm999, %v1001, %v997
      %v1003 = vmul.f32 1.0, %v1002
      %v1004 = vmul.f32 %v878, %v570
      %v1005 = vmul.f32 %v893, %v571
      %v1006 = vmul.f32 %v908, %v572
      %v1007 = vmul.f32 %v923, %v573
      %v1008 = vmul.f32 %v802, %v924
      %v1009 = vmul.f32 %v817, %v925
      %v1010 = vmul.f32 %v832, %v926
      %v1011 = vmul.f32 %v847, %v927
      %v1012 = vadd.f32 %v1004, %v1008
      %v1013 = vadd.f32 %v1005, %v1009
      %v1014 = vadd.f32 %v1006, %v1010
      %v1015 = vadd.f32 %v1007, %v1011
      %v1016 = vtanh.pop %v1012
      %v1017 = vtanh.pop %v1013
      %v1018 = vtanh.pop %v1014
      %v1019 = vtanh.pop %v1015
      %v1020 = vmul.f32 %v958, %v1016
      %v1021 = vmul.f32 %v973, %v1017
      %v1022 = vmul.f32 %v988, %v1018
      %v1023 = vmul.f32 %v1003, %v1019
      %1024 = vmatpush.msra.mxu0 0.0
      %1025 = vmatpush.msra.mxu0 0.0
      %1026 = vmatpush.msra.mxu0 0.0
      %1027 = vmatpush.msra.mxu0 0.0
      %1028 = vmatpush.msra.mxu0 0.0
      %1029 = vmatpush.msra.mxu0 0.0
      %1030 = vmatpush.msra.mxu0 0.0
      %1031 = vmatpush.msra.mxu0 0.0
      %1032 = vmatpush.msra.mxu0 0.0
      %1033 = vmatpush.msra.mxu0 0.0
      %1034 = vmatpush.msra.mxu0 0.0
      %1035 = vmatpush.msra.mxu0 0.0
      %1036 = vmatpush.msra.mxu0 %v1023
      %1037 = vmatpush.msra.mxu0 %v1022
      %1038 = vmatpush.msra.mxu0 %v1021
      %1039 = vmatpush.msra.mxu0 %v1020
      %1040 = vmatmul.f32.gmra.mxu0 %v584
      %v1041 = vpop.f32.mrf.mxu0
      %v1042 = vadd.f32 0.0, %v1041
      %1043 = vmatmul.f32.gmra.mxu0 %v587
      %v1044 = vpop.f32.mrf.mxu0
      %v1045 = vadd.f32 0.0, %v1044
      %1046 = vmatmul.f32.gmra.mxu0 %v590
      %v1047 = vpop.f32.mrf.mxu0
      %v1048 = vadd.f32 0.0, %v1047
      %1049 = vmatmul.f32.gmra.mxu0 %v593
      %v1050 = vpop.f32.mrf.mxu0
      %v1051 = vadd.f32 0.0, %v1050
      %1052 = vmatmul.f32.gmra.mxu0 %v596
      %v1053 = vpop.f32.mrf.mxu0
      %v1054 = vadd.f32 0.0, %v1053
      %1055 = vmatmul.f32.gmra.mxu0 %v599
      %v1056 = vpop.f32.mrf.mxu0
      %v1057 = vadd.f32 0.0, %v1056
      %1058 = vmatmul.f32.gmra.mxu0 %v602
      %v1059 = vpop.f32.mrf.mxu0
      %v1060 = vadd.f32 0.0, %v1059
      %1061 = vmatmul.f32.gmra.mxu0 %v605
      %v1062 = vpop.f32.mrf.mxu0
      %v1063 = vadd.f32 0.0, %v1062
      %1064 = vmatmul.f32.gmra.mxu0 %v608
      %v1065 = vpop.f32.mrf.mxu0
      %v1066 = vadd.f32 0.0, %v1065
      %1067 = vmatmul.f32.gmra.mxu0 %v611
      %v1068 = vpop.f32.mrf.mxu0
      %v1069 = vadd.f32 0.0, %v1068
      %1070 = vmatmul.f32.gmra.mxu0 %v614
      %v1071 = vpop.f32.mrf.mxu0
      %v1072 = vadd.f32 0.0, %v1071
      %1073 = vmatmul.f32.gmra.mxu0 %v617
      %v1074 = vpop.f32.mrf.mxu0
      %v1075 = vadd.f32 0.0, %v1074
      %1076 = vmatmul.f32.gmra.mxu0 %v620
      %v1077 = vpop.f32.mrf.mxu0
      %v1078 = vadd.f32 0.0, %v1077
      %1079 = vmatmul.f32.gmra.mxu0 %v623
      %v1080 = vpop.f32.mrf.mxu0
      %v1081 = vadd.f32 0.0, %v1080
      %1082 = vmatmul.f32.gmra.mxu0 %v626
      %v1083 = vpop.f32.mrf.mxu0
      %v1084 = vadd.f32 0.0, %v1083
      %1085 = vmatmul.f32.gmra.mxu0 %v629
      %v1086 = vpop.f32.mrf.mxu0
      %v1087 = vadd.f32 0.0, %v1086
      %1088 = vmatmul.f32.gmra.mxu0 %v632
      %v1089 = vpop.f32.mrf.mxu0
      %v1090 = vadd.f32 0.0, %v1089
      %1091 = vdwg.mxu0
      %v1092 = vadd.f32 %v1090, %v250
      %v1094 = vrot.slane %v280, 1
      %v1096 = vadd.f32 %v1092, %v1094
      %v1097 = vxor.u32 %v1096, 2147483648
      %v1098 = vmul.f32 %v1097, 1.442695
      %v1099 = vpow.pop %v1098
      %v1100 = vadd.f32 %v1099, 1.0
      %v1101 = vrcp.pop %v1100
      %v1102 = vmul.f32 %v1100, %v1101
      %v1103 = vsub.f32 1.0, %v1102
      %v1104 = vmul.f32 %v1101, %v1103
      %v1105 = vadd.f32 %v1101, %v1104
      %vm1106 = vweird.f32 %v1100
      %vm1107 = vweird.f32 %v1101
      %vm1108 = vmor %vm1106, %vm1107
      %v1109 = vsel %vm1108, %v1101, %v1105
      %v1110 = vand.u32 2147483647, %v1100
      %vm1111 = vcmp.eq.f32.partialorder %v1110, 8.507059e+37
      %v1112 = vand.u32 %v1100, 2147483648
      %v1113 = vor.u32 1.1754944e-38, %v1112
      %v1114 = vsel %vm1111, %v1113, %v1109
      %v1115 = vmul.f32 1.0, %v1114
      %v1116 = vperm.slane %v1115, 0
      %v1117 = vmul.f32 %v71, %v1116
      %v1118 = vmul.f32 %v76, %v1116
      %v1119 = vmul.f32 %v81, %v1116
      %v1120 = vmul.f32 %v86, %v1116
      %v1121 = vmul.f32 %v91, %v1116
      %v1122 = vmul.f32 %v96, %v1116
      %v1123 = vmul.f32 %v101, %v1116
      %v1124 = vmul.f32 %v106, %v1116
      %v1125 = vmul.f32 %v111, %v1116
      %v1126 = vmul.f32 %v116, %v1116
      %v1127 = vmul.f32 %v121, %v1116
      %v1128 = vmul.f32 %v126, %v1116
      %v1129 = vmul.f32 %v131, %v1116
      %v1130 = vmul.f32 %v136, %v1116
      %v1131 = vmul.f32 %v141, %v1116
      %v1132 = vmul.f32 %v146, %v1116
      %v1133 = vadd.f32 %v1117, %v1042
      %v1134 = vadd.f32 %v1118, %v1045
      %v1135 = vadd.f32 %v1119, %v1048
      %v1136 = vadd.f32 %v1120, %v1051
      %v1137 = vadd.f32 %v1121, %v1054
      %v1138 = vadd.f32 %v1122, %v1057
      %v1139 = vadd.f32 %v1123, %v1060
      %v1140 = vadd.f32 %v1124, %v1063
      %v1141 = vadd.f32 %v1125, %v1066
      %v1142 = vadd.f32 %v1126, %v1069
      %v1143 = vadd.f32 %v1127, %v1072
      %v1144 = vadd.f32 %v1128, %v1075
      %v1145 = vadd.f32 %v1129, %v1078
      %v1146 = vadd.f32 %v1130, %v1081
      %v1147 = vadd.f32 %v1131, %v1084
      %v1148 = vadd.f32 %v1132, %v1087
      %v1149 = vadd.f32 %v1133, %v167
      %v1150 = vadd.f32 %v1134, %v172
      %v1151 = vadd.f32 %v1135, %v177
      %v1152 = vadd.f32 %v1136, %v182
      %v1153 = vadd.f32 %v1137, %v187
      %v1154 = vadd.f32 %v1138, %v192
      %v1155 = vadd.f32 %v1139, %v197
      %v1156 = vadd.f32 %v1140, %v202
      %v1157 = vadd.f32 %v1141, %v207
      %v1158 = vadd.f32 %v1142, %v212
      %v1159 = vadd.f32 %v1143, %v217
      %v1160 = vadd.f32 %v1144, %v222
      %v1161 = vadd.f32 %v1145, %v227
      %v1162 = vadd.f32 %v1146, %v232
      %v1163 = vadd.f32 %v1147, %v237
      %v1164 = vadd.f32 %v1148, %v242
      %v1165 = vxor.u32 %v1149, 2147483648
      %v1166 = vxor.u32 %v1150, 2147483648
      %v1167 = vxor.u32 %v1151, 2147483648
      %v1168 = vxor.u32 %v1152, 2147483648
      %v1169 = vmul.f32 %v1165, 1.442695
      %v1170 = vpow.pop %v1169
      %v1171 = vmul.f32 %v1166, 1.442695
      %v1172 = vpow.pop %v1171
      %v1173 = vmul.f32 %v1167, 1.442695
      %v1174 = vpow.pop %v1173
      %v1175 = vmul.f32 %v1168, 1.442695
      %v1176 = vpow.pop %v1175
      %v1177 = vadd.f32 %v1170, 1.0
      %v1178 = vadd.f32 %v1172, 1.0
      %v1179 = vadd.f32 %v1174, 1.0
      %v1180 = vadd.f32 %v1176, 1.0
      %v1181 = vrcp.pop %v1177
      %v1182 = vmul.f32 %v1177, %v1181
      %v1183 = vsub.f32 1.0, %v1182
      %v1184 = vmul.f32 %v1181, %v1183
      %v1185 = vadd.f32 %v1181, %v1184
      %vm1186 = vweird.f32 %v1177
      %vm1187 = vweird.f32 %v1181
      %vm1188 = vmor %vm1186, %vm1187
      %v1189 = vsel %vm1188, %v1181, %v1185
      %v1190 = vand.u32 2147483647, %v1177
      %vm1191 = vcmp.eq.f32.partialorder %v1190, 8.507059e+37
      %v1192 = vand.u32 %v1177, 2147483648
      %v1193 = vor.u32 1.1754944e-38, %v1192
      %v1194 = vsel %vm1191, %v1193, %v1189
      %v1195 = vmul.f32 1.0, %v1194
      %v1196 = vrcp.pop %v1178
      %v1197 = vmul.f32 %v1178, %v1196
      %v1198 = vsub.f32 1.0, %v1197
      %v1199 = vmul.f32 %v1196, %v1198
      %v1200 = vadd.f32 %v1196, %v1199
      %vm1201 = vweird.f32 %v1178
      %vm1202 = vweird.f32 %v1196
      %vm1203 = vmor %vm1201, %vm1202
      %v1204 = vsel %vm1203, %v1196, %v1200
      %v1205 = vand.u32 2147483647, %v1178
      %vm1206 = vcmp.eq.f32.partialorder %v1205, 8.507059e+37
      %v1207 = vand.u32 %v1178, 2147483648
      %v1208 = vor.u32 1.1754944e-38, %v1207
      %v1209 = vsel %vm1206, %v1208, %v1204
      %v1210 = vmul.f32 1.0, %v1209
      %v1211 = vrcp.pop %v1179
      %v1212 = vmul.f32 %v1179, %v1211
      %v1213 = vsub.f32 1.0, %v1212
      %v1214 = vmul.f32 %v1211, %v1213
      %v1215 = vadd.f32 %v1211, %v1214
      %vm1216 = vweird.f32 %v1179
      %vm1217 = vweird.f32 %v1211
      %vm1218 = vmor %vm1216, %vm1217
      %v1219 = vsel %vm1218, %v1211, %v1215
      %v1220 = vand.u32 2147483647, %v1179
      %vm1221 = vcmp.eq.f32.partialorder %v1220, 8.507059e+37
      %v1222 = vand.u32 %v1179, 2147483648
      %v1223 = vor.u32 1.1754944e-38, %v1222
      %v1224 = vsel %vm1221, %v1223, %v1219
      %v1225 = vmul.f32 1.0, %v1224
      %v1226 = vrcp.pop %v1180
      %v1227 = vmul.f32 %v1180, %v1226
      %v1228 = vsub.f32 1.0, %v1227
      %v1229 = vmul.f32 %v1226, %v1228
      %v1230 = vadd.f32 %v1226, %v1229
      %vm1231 = vweird.f32 %v1180
      %vm1232 = vweird.f32 %v1226
      %vm1233 = vmor %vm1231, %vm1232
      %v1234 = vsel %vm1233, %v1226, %v1230
      %v1235 = vand.u32 2147483647, %v1180
      %vm1236 = vcmp.eq.f32.partialorder %v1235, 8.507059e+37
      %v1237 = vand.u32 %v1180, 2147483648
      %v1238 = vor.u32 1.1754944e-38, %v1237
      %v1239 = vsel %vm1236, %v1238, %v1234
      %v1240 = vmul.f32 1.0, %v1239
      %v1241 = vxor.u32 %v1153, 2147483648
      %v1242 = vxor.u32 %v1154, 2147483648
      %v1243 = vxor.u32 %v1155, 2147483648
      %v1244 = vxor.u32 %v1156, 2147483648
      %v1245 = vmul.f32 %v1241, 1.442695
      %v1246 = vpow.pop %v1245
      %v1247 = vmul.f32 %v1242, 1.442695
      %v1248 = vpow.pop %v1247
      %v1249 = vmul.f32 %v1243, 1.442695
      %v1250 = vpow.pop %v1249
      %v1251 = vmul.f32 %v1244, 1.442695
      %v1252 = vpow.pop %v1251
      %v1253 = vadd.f32 %v1246, 1.0
      %v1254 = vadd.f32 %v1248, 1.0
      %v1255 = vadd.f32 %v1250, 1.0
      %v1256 = vadd.f32 %v1252, 1.0
      %v1257 = vrcp.pop %v1253
      %v1258 = vmul.f32 %v1253, %v1257
      %v1259 = vsub.f32 1.0, %v1258
      %v1260 = vmul.f32 %v1257, %v1259
      %v1261 = vadd.f32 %v1257, %v1260
      %vm1262 = vweird.f32 %v1253
      %vm1263 = vweird.f32 %v1257
      %vm1264 = vmor %vm1262, %vm1263
      %v1265 = vsel %vm1264, %v1257, %v1261
      %v1266 = vand.u32 2147483647, %v1253
      %vm1267 = vcmp.eq.f32.partialorder %v1266, 8.507059e+37
      %v1268 = vand.u32 %v1253, 2147483648
      %v1269 = vor.u32 1.1754944e-38, %v1268
      %v1270 = vsel %vm1267, %v1269, %v1265
      %v1271 = vmul.f32 1.0, %v1270
      %v1272 = vrcp.pop %v1254
      %v1273 = vmul.f32 %v1254, %v1272
      %v1274 = vsub.f32 1.0, %v1273
      %v1275 = vmul.f32 %v1272, %v1274
      %v1276 = vadd.f32 %v1272, %v1275
      %vm1277 = vweird.f32 %v1254
      %vm1278 = vweird.f32 %v1272
      %vm1279 = vmor %vm1277, %vm1278
      %v1280 = vsel %vm1279, %v1272, %v1276
      %v1281 = vand.u32 2147483647, %v1254
      %vm1282 = vcmp.eq.f32.partialorder %v1281, 8.507059e+37
      %v1283 = vand.u32 %v1254, 2147483648
      %v1284 = vor.u32 1.1754944e-38, %v1283
      %v1285 = vsel %vm1282, %v1284, %v1280
      %v1286 = vmul.f32 1.0, %v1285
      %v1287 = vrcp.pop %v1255
      %v1288 = vmul.f32 %v1255, %v1287
      %v1289 = vsub.f32 1.0, %v1288
      %v1290 = vmul.f32 %v1287, %v1289
      %v1291 = vadd.f32 %v1287, %v1290
      %vm1292 = vweird.f32 %v1255
      %vm1293 = vweird.f32 %v1287
      %vm1294 = vmor %vm1292, %vm1293
      %v1295 = vsel %vm1294, %v1287, %v1291
      %v1296 = vand.u32 2147483647, %v1255
      %vm1297 = vcmp.eq.f32.partialorder %v1296, 8.507059e+37
      %v1298 = vand.u32 %v1255, 2147483648
      %v1299 = vor.u32 1.1754944e-38, %v1298
      %v1300 = vsel %vm1297, %v1299, %v1295
      %v1301 = vmul.f32 1.0, %v1300
      %v1302 = vrcp.pop %v1256
      %v1303 = vmul.f32 %v1256, %v1302
      %v1304 = vsub.f32 1.0, %v1303
      %v1305 = vmul.f32 %v1302, %v1304
      %v1306 = vadd.f32 %v1302, %v1305
      %vm1307 = vweird.f32 %v1256
      %vm1308 = vweird.f32 %v1302
      %vm1309 = vmor %vm1307, %vm1308
      %v1310 = vsel %vm1309, %v1302, %v1306
      %v1311 = vand.u32 2147483647, %v1256
      %vm1312 = vcmp.eq.f32.partialorder %v1311, 8.507059e+37
      %v1313 = vand.u32 %v1256, 2147483648
      %v1314 = vor.u32 1.1754944e-38, %v1313
      %v1315 = vsel %vm1312, %v1314, %v1310
      %v1316 = vmul.f32 1.0, %v1315
      %v1317 = vtanh.pop %v1157
      %v1318 = vtanh.pop %v1158
      %v1319 = vtanh.pop %v1159
      %v1320 = vtanh.pop %v1160
      %v1321 = vxor.u32 %v1161, 2147483648
      %v1322 = vxor.u32 %v1162, 2147483648
      %v1323 = vxor.u32 %v1163, 2147483648
      %v1324 = vxor.u32 %v1164, 2147483648
      %v1325 = vmul.f32 %v1321, 1.442695
      %v1326 = vpow.pop %v1325
      %v1327 = vmul.f32 %v1322, 1.442695
      %v1328 = vpow.pop %v1327
      %v1329 = vmul.f32 %v1323, 1.442695
      %v1330 = vpow.pop %v1329
      %v1331 = vmul.f32 %v1324, 1.442695
      %v1332 = vpow.pop %v1331
      %v1333 = vadd.f32 %v1326, 1.0
      %v1334 = vadd.f32 %v1328, 1.0
      %v1335 = vadd.f32 %v1330, 1.0
      %v1336 = vadd.f32 %v1332, 1.0
      %v1337 = vrcp.pop %v1333
      %v1338 = vmul.f32 %v1333, %v1337
      %v1339 = vsub.f32 1.0, %v1338
      %v1340 = vmul.f32 %v1337, %v1339
      %v1341 = vadd.f32 %v1337, %v1340
      %vm1342 = vweird.f32 %v1333
      %vm1343 = vweird.f32 %v1337
      %vm1344 = vmor %vm1342, %vm1343
      %v1345 = vsel %vm1344, %v1337, %v1341
      %v1346 = vand.u32 2147483647, %v1333
      %vm1347 = vcmp.eq.f32.partialorder %v1346, 8.507059e+37
      %v1348 = vand.u32 %v1333, 2147483648
      %v1349 = vor.u32 1.1754944e-38, %v1348
      %v1350 = vsel %vm1347, %v1349, %v1345
      %v1351 = vmul.f32 1.0, %v1350
      %v1352 = vrcp.pop %v1334
      %v1353 = vmul.f32 %v1334, %v1352
      %v1354 = vsub.f32 1.0, %v1353
      %v1355 = vmul.f32 %v1352, %v1354
      %v1356 = vadd.f32 %v1352, %v1355
      %vm1357 = vweird.f32 %v1334
      %vm1358 = vweird.f32 %v1352
      %vm1359 = vmor %vm1357, %vm1358
      %v1360 = vsel %vm1359, %v1352, %v1356
      %v1361 = vand.u32 2147483647, %v1334
      %vm1362 = vcmp.eq.f32.partialorder %v1361, 8.507059e+37
      %v1363 = vand.u32 %v1334, 2147483648
      %v1364 = vor.u32 1.1754944e-38, %v1363
      %v1365 = vsel %vm1362, %v1364, %v1360
      %v1366 = vmul.f32 1.0, %v1365
      %v1367 = vrcp.pop %v1335
      %v1368 = vmul.f32 %v1335, %v1367
      %v1369 = vsub.f32 1.0, %v1368
      %v1370 = vmul.f32 %v1367, %v1369
      %v1371 = vadd.f32 %v1367, %v1370
      %vm1372 = vweird.f32 %v1335
      %vm1373 = vweird.f32 %v1367
      %vm1374 = vmor %vm1372, %vm1373
      %v1375 = vsel %vm1374, %v1367, %v1371
      %v1376 = vand.u32 2147483647, %v1335
      %vm1377 = vcmp.eq.f32.partialorder %v1376, 8.507059e+37
      %v1378 = vand.u32 %v1335, 2147483648
      %v1379 = vor.u32 1.1754944e-38, %v1378
      %v1380 = vsel %vm1377, %v1379, %v1375
      %v1381 = vmul.f32 1.0, %v1380
      %v1382 = vrcp.pop %v1336
      %v1383 = vmul.f32 %v1336, %v1382
      %v1384 = vsub.f32 1.0, %v1383
      %v1385 = vmul.f32 %v1382, %v1384
      %v1386 = vadd.f32 %v1382, %v1385
      %vm1387 = vweird.f32 %v1336
      %vm1388 = vweird.f32 %v1382
      %vm1389 = vmor %vm1387, %vm1388
      %v1390 = vsel %vm1389, %v1382, %v1386
      %v1391 = vand.u32 2147483647, %v1336
      %vm1392 = vcmp.eq.f32.partialorder %v1391, 8.507059e+37
      %v1393 = vand.u32 %v1336, 2147483648
      %v1394 = vor.u32 1.1754944e-38, %v1393
      %v1395 = vsel %vm1392, %v1394, %v1390
      %v1396 = vmul.f32 1.0, %v1395
      %v1397 = vmul.f32 %v1271, %v1012
      %v1398 = vmul.f32 %v1286, %v1013
      %v1399 = vmul.f32 %v1301, %v1014
      %v1400 = vmul.f32 %v1316, %v1015
      %v1401 = vmul.f32 %v1195, %v1317
      %v1402 = vmul.f32 %v1210, %v1318
      %v1403 = vmul.f32 %v1225, %v1319
      %v1404 = vmul.f32 %v1240, %v1320
      %v1405 = vadd.f32 %v1397, %v1401
      %v1406 = vadd.f32 %v1398, %v1402
      %v1407 = vadd.f32 %v1399, %v1403
      %v1408 = vadd.f32 %v1400, %v1404
      %v1409 = vtanh.pop %v1405
      %v1410 = vtanh.pop %v1406
      %v1411 = vtanh.pop %v1407
      %v1412 = vtanh.pop %v1408
      %v1413 = vmul.f32 %v1351, %v1409
      %v1414 = vmul.f32 %v1366, %v1410
      %v1415 = vmul.f32 %v1381, %v1411
      %v1416 = vmul.f32 %v1396, %v1412
      %1417 = vmatpush.msra.mxu0 0.0
      %1418 = vmatpush.msra.mxu0 0.0
      %1419 = vmatpush.msra.mxu0 0.0
      %1420 = vmatpush.msra.mxu0 0.0
      %1421 = vmatpush.msra.mxu0 0.0
      %1422 = vmatpush.msra.mxu0 0.0
      %1423 = vmatpush.msra.mxu0 0.0
      %1424 = vmatpush.msra.mxu0 0.0
      %1425 = vmatpush.msra.mxu0 0.0
      %1426 = vmatpush.msra.mxu0 0.0
      %1427 = vmatpush.msra.mxu0 0.0
      %1428 = vmatpush.msra.mxu0 0.0
      %1429 = vmatpush.msra.mxu0 %v1416
      %1430 = vmatpush.msra.mxu0 %v1415
      %1431 = vmatpush.msra.mxu0 %v1414
      %1432 = vmatpush.msra.mxu0 %v1413
      %1433 = vmatmul.f32.gmra.mxu0 %v584
      %v1434 = vpop.f32.mrf.mxu0
      %v1435 = vadd.f32 0.0, %v1434
      %1436 = vmatmul.f32.gmra.mxu0 %v587
      %v1437 = vpop.f32.mrf.mxu0
      %v1438 = vadd.f32 0.0, %v1437
      %1439 = vmatmul.f32.gmra.mxu0 %v590
      %v1440 = vpop.f32.mrf.mxu0
      %v1441 = vadd.f32 0.0, %v1440
      %1442 = vmatmul.f32.gmra.mxu0 %v593
      %v1443 = vpop.f32.mrf.mxu0
      %v1444 = vadd.f32 0.0, %v1443
      %1445 = vmatmul.f32.gmra.mxu0 %v596
      %v1446 = vpop.f32.mrf.mxu0
      %v1447 = vadd.f32 0.0, %v1446
      %1448 = vmatmul.f32.gmra.mxu0 %v599
      %v1449 = vpop.f32.mrf.mxu0
      %v1450 = vadd.f32 0.0, %v1449
      %1451 = vmatmul.f32.gmra.mxu0 %v602
      %v1452 = vpop.f32.mrf.mxu0
      %v1453 = vadd.f32 0.0, %v1452
      %1454 = vmatmul.f32.gmra.mxu0 %v605
      %v1455 = vpop.f32.mrf.mxu0
      %v1456 = vadd.f32 0.0, %v1455
      %1457 = vmatmul.f32.gmra.mxu0 %v608
      %v1458 = vpop.f32.mrf.mxu0
      %v1459 = vadd.f32 0.0, %v1458
      %1460 = vmatmul.f32.gmra.mxu0 %v611
      %v1461 = vpop.f32.mrf.mxu0
      %v1462 = vadd.f32 0.0, %v1461
      %1463 = vmatmul.f32.gmra.mxu0 %v614
      %v1464 = vpop.f32.mrf.mxu0
      %v1465 = vadd.f32 0.0, %v1464
      %1466 = vmatmul.f32.gmra.mxu0 %v617
      %v1467 = vpop.f32.mrf.mxu0
      %v1468 = vadd.f32 0.0, %v1467
      %1469 = vmatmul.f32.gmra.mxu0 %v620
      %v1470 = vpop.f32.mrf.mxu0
      %v1471 = vadd.f32 0.0, %v1470
      %1472 = vmatmul.f32.gmra.mxu0 %v623
      %v1473 = vpop.f32.mrf.mxu0
      %v1474 = vadd.f32 0.0, %v1473
      %1475 = vmatmul.f32.gmra.mxu0 %v626
      %v1476 = vpop.f32.mrf.mxu0
      %v1477 = vadd.f32 0.0, %v1476
      %1478 = vmatmul.f32.gmra.mxu0 %v629
      %v1479 = vpop.f32.mrf.mxu0
      %v1480 = vadd.f32 0.0, %v1479
      %1481 = vmatmul.f32.gmra.mxu0 %v632
      %v1482 = vpop.f32.mrf.mxu0
      %v1483 = vadd.f32 0.0, %v1482
      %1484 = vdwg.mxu0
      %v1485 = vadd.f32 %v1483, %v250
      %v1486 = vrot.slane %v280, 2
      %v1488 = vadd.f32 %v1485, %v1486
      %v1489 = vxor.u32 %v1488, 2147483648
      %v1490 = vmul.f32 %v1489, 1.442695
      %v1491 = vpow.pop %v1490
      %v1492 = vadd.f32 %v1491, 1.0
      %v1493 = vrcp.pop %v1492
      %v1494 = vmul.f32 %v1492, %v1493
      %v1495 = vsub.f32 1.0, %v1494
      %v1496 = vmul.f32 %v1493, %v1495
      %v1497 = vadd.f32 %v1493, %v1496
      %vm1498 = vweird.f32 %v1492
      %vm1499 = vweird.f32 %v1493
      %vm1500 = vmor %vm1498, %vm1499
      %v1501 = vsel %vm1500, %v1493, %v1497
      %v1502 = vand.u32 2147483647, %v1492
      %vm1503 = vcmp.eq.f32.partialorder %v1502, 8.507059e+37
      %v1504 = vand.u32 %v1492, 2147483648
      %v1505 = vor.u32 1.1754944e-38, %v1504
      %v1506 = vsel %vm1503, %v1505, %v1501
      %v1507 = vmul.f32 1.0, %v1506
      %v1508 = vperm.slane %v1507, 0
      %v1509 = vmul.f32 %v71, %v1508
      %v1510 = vmul.f32 %v76, %v1508
      %v1511 = vmul.f32 %v81, %v1508
      %v1512 = vmul.f32 %v86, %v1508
      %v1513 = vmul.f32 %v91, %v1508
      %v1514 = vmul.f32 %v96, %v1508
      %v1515 = vmul.f32 %v101, %v1508
      %v1516 = vmul.f32 %v106, %v1508
      %v1517 = vmul.f32 %v111, %v1508
      %v1518 = vmul.f32 %v116, %v1508
      %v1519 = vmul.f32 %v121, %v1508
      %v1520 = vmul.f32 %v126, %v1508
      %v1521 = vmul.f32 %v131, %v1508
      %v1522 = vmul.f32 %v136, %v1508
      %v1523 = vmul.f32 %v141, %v1508
      %v1524 = vmul.f32 %v146, %v1508
      %v1525 = vadd.f32 %v1509, %v1435
      %v1526 = vadd.f32 %v1510, %v1438
      %v1527 = vadd.f32 %v1511, %v1441
      %v1528 = vadd.f32 %v1512, %v1444
      %v1529 = vadd.f32 %v1513, %v1447
      %v1530 = vadd.f32 %v1514, %v1450
      %v1531 = vadd.f32 %v1515, %v1453
      %v1532 = vadd.f32 %v1516, %v1456
      %v1533 = vadd.f32 %v1517, %v1459
      %v1534 = vadd.f32 %v1518, %v1462
      %v1535 = vadd.f32 %v1519, %v1465
      %v1536 = vadd.f32 %v1520, %v1468
      %v1537 = vadd.f32 %v1521, %v1471
      %v1538 = vadd.f32 %v1522, %v1474
      %v1539 = vadd.f32 %v1523, %v1477
      %v1540 = vadd.f32 %v1524, %v1480
      %v1541 = vadd.f32 %v1525, %v167
      %v1542 = vadd.f32 %v1526, %v172
      %v1543 = vadd.f32 %v1527, %v177
      %v1544 = vadd.f32 %v1528, %v182
      %v1545 = vadd.f32 %v1529, %v187
      %v1546 = vadd.f32 %v1530, %v192
      %v1547 = vadd.f32 %v1531, %v197
      %v1548 = vadd.f32 %v1532, %v202
      %v1549 = vadd.f32 %v1533, %v207
      %v1550 = vadd.f32 %v1534, %v212
      %v1551 = vadd.f32 %v1535, %v217
      %v1552 = vadd.f32 %v1536, %v222
      %v1553 = vadd.f32 %v1537, %v227
      %v1554 = vadd.f32 %v1538, %v232
      %v1555 = vadd.f32 %v1539, %v237
      %v1556 = vadd.f32 %v1540, %v242
      %v1557 = vxor.u32 %v1541, 2147483648
      %v1558 = vxor.u32 %v1542, 2147483648
      %v1559 = vxor.u32 %v1543, 2147483648
      %v1560 = vxor.u32 %v1544, 2147483648
      %v1561 = vmul.f32 %v1557, 1.442695
      %v1562 = vpow.pop %v1561
      %v1563 = vmul.f32 %v1558, 1.442695
      %v1564 = vpow.pop %v1563
      %v1565 = vmul.f32 %v1559, 1.442695
      %v1566 = vpow.pop %v1565
      %v1567 = vmul.f32 %v1560, 1.442695
      %v1568 = vpow.pop %v1567
      %v1569 = vadd.f32 %v1562, 1.0
      %v1570 = vadd.f32 %v1564, 1.0
      %v1571 = vadd.f32 %v1566, 1.0
      %v1572 = vadd.f32 %v1568, 1.0
      %v1573 = vrcp.pop %v1569
      %v1574 = vmul.f32 %v1569, %v1573
      %v1575 = vsub.f32 1.0, %v1574
      %v1576 = vmul.f32 %v1573, %v1575
      %v1577 = vadd.f32 %v1573, %v1576
      %vm1578 = vweird.f32 %v1569
      %vm1579 = vweird.f32 %v1573
      %vm1580 = vmor %vm1578, %vm1579
      %v1581 = vsel %vm1580, %v1573, %v1577
      %v1582 = vand.u32 2147483647, %v1569
      %vm1583 = vcmp.eq.f32.partialorder %v1582, 8.507059e+37
      %v1584 = vand.u32 %v1569, 2147483648
      %v1585 = vor.u32 1.1754944e-38, %v1584
      %v1586 = vsel %vm1583, %v1585, %v1581
      %v1587 = vmul.f32 1.0, %v1586
      %v1588 = vrcp.pop %v1570
      %v1589 = vmul.f32 %v1570, %v1588
      %v1590 = vsub.f32 1.0, %v1589
      %v1591 = vmul.f32 %v1588, %v1590
      %v1592 = vadd.f32 %v1588, %v1591
      %vm1593 = vweird.f32 %v1570
      %vm1594 = vweird.f32 %v1588
      %vm1595 = vmor %vm1593, %vm1594
      %v1596 = vsel %vm1595, %v1588, %v1592
      %v1597 = vand.u32 2147483647, %v1570
      %vm1598 = vcmp.eq.f32.partialorder %v1597, 8.507059e+37
      %v1599 = vand.u32 %v1570, 2147483648
      %v1600 = vor.u32 1.1754944e-38, %v1599
      %v1601 = vsel %vm1598, %v1600, %v1596
      %v1602 = vmul.f32 1.0, %v1601
      %v1603 = vrcp.pop %v1571
      %v1604 = vmul.f32 %v1571, %v1603
      %v1605 = vsub.f32 1.0, %v1604
      %v1606 = vmul.f32 %v1603, %v1605
      %v1607 = vadd.f32 %v1603, %v1606
      %vm1608 = vweird.f32 %v1571
      %vm1609 = vweird.f32 %v1603
      %vm1610 = vmor %vm1608, %vm1609
      %v1611 = vsel %vm1610, %v1603, %v1607
      %v1612 = vand.u32 2147483647, %v1571
      %vm1613 = vcmp.eq.f32.partialorder %v1612, 8.507059e+37
      %v1614 = vand.u32 %v1571, 2147483648
      %v1615 = vor.u32 1.1754944e-38, %v1614
      %v1616 = vsel %vm1613, %v1615, %v1611
      %v1617 = vmul.f32 1.0, %v1616
      %v1618 = vrcp.pop %v1572
      %v1619 = vmul.f32 %v1572, %v1618
      %v1620 = vsub.f32 1.0, %v1619
      %v1621 = vmul.f32 %v1618, %v1620
      %v1622 = vadd.f32 %v1618, %v1621
      %vm1623 = vweird.f32 %v1572
      %vm1624 = vweird.f32 %v1618
      %vm1625 = vmor %vm1623, %vm1624
      %v1626 = vsel %vm1625, %v1618, %v1622
      %v1627 = vand.u32 2147483647, %v1572
      %vm1628 = vcmp.eq.f32.partialorder %v1627, 8.507059e+37
      %v1629 = vand.u32 %v1572, 2147483648
      %v1630 = vor.u32 1.1754944e-38, %v1629
      %v1631 = vsel %vm1628, %v1630, %v1626
      %v1632 = vmul.f32 1.0, %v1631
      %v1633 = vxor.u32 %v1545, 2147483648
      %v1634 = vxor.u32 %v1546, 2147483648
      %v1635 = vxor.u32 %v1547, 2147483648
      %v1636 = vxor.u32 %v1548, 2147483648
      %v1637 = vmul.f32 %v1633, 1.442695
      %v1638 = vpow.pop %v1637
      %v1639 = vmul.f32 %v1634, 1.442695
      %v1640 = vpow.pop %v1639
      %v1641 = vmul.f32 %v1635, 1.442695
      %v1642 = vpow.pop %v1641
      %v1643 = vmul.f32 %v1636, 1.442695
      %v1644 = vpow.pop %v1643
      %v1645 = vadd.f32 %v1638, 1.0
      %v1646 = vadd.f32 %v1640, 1.0
      %v1647 = vadd.f32 %v1642, 1.0
      %v1648 = vadd.f32 %v1644, 1.0
      %v1649 = vrcp.pop %v1645
      %v1650 = vmul.f32 %v1645, %v1649
      %v1651 = vsub.f32 1.0, %v1650
      %v1652 = vmul.f32 %v1649, %v1651
      %v1653 = vadd.f32 %v1649, %v1652
      %vm1654 = vweird.f32 %v1645
      %vm1655 = vweird.f32 %v1649
      %vm1656 = vmor %vm1654, %vm1655
      %v1657 = vsel %vm1656, %v1649, %v1653
      %v1658 = vand.u32 2147483647, %v1645
      %vm1659 = vcmp.eq.f32.partialorder %v1658, 8.507059e+37
      %v1660 = vand.u32 %v1645, 2147483648
      %v1661 = vor.u32 1.1754944e-38, %v1660
      %v1662 = vsel %vm1659, %v1661, %v1657
      %v1663 = vmul.f32 1.0, %v1662
      %v1664 = vrcp.pop %v1646
      %v1665 = vmul.f32 %v1646, %v1664
      %v1666 = vsub.f32 1.0, %v1665
      %v1667 = vmul.f32 %v1664, %v1666
      %v1668 = vadd.f32 %v1664, %v1667
      %vm1669 = vweird.f32 %v1646
      %vm1670 = vweird.f32 %v1664
      %vm1671 = vmor %vm1669, %vm1670
      %v1672 = vsel %vm1671, %v1664, %v1668
      %v1673 = vand.u32 2147483647, %v1646
      %vm1674 = vcmp.eq.f32.partialorder %v1673, 8.507059e+37
      %v1675 = vand.u32 %v1646, 2147483648
      %v1676 = vor.u32 1.1754944e-38, %v1675
      %v1677 = vsel %vm1674, %v1676, %v1672
      %v1678 = vmul.f32 1.0, %v1677
      %v1679 = vrcp.pop %v1647
      %v1680 = vmul.f32 %v1647, %v1679
      %v1681 = vsub.f32 1.0, %v1680
      %v1682 = vmul.f32 %v1679, %v1681
      %v1683 = vadd.f32 %v1679, %v1682
      %vm1684 = vweird.f32 %v1647
      %vm1685 = vweird.f32 %v1679
      %vm1686 = vmor %vm1684, %vm1685
      %v1687 = vsel %vm1686, %v1679, %v1683
      %v1688 = vand.u32 2147483647, %v1647
      %vm1689 = vcmp.eq.f32.partialorder %v1688, 8.507059e+37
      %v1690 = vand.u32 %v1647, 2147483648
      %v1691 = vor.u32 1.1754944e-38, %v1690
      %v1692 = vsel %vm1689, %v1691, %v1687
      %v1693 = vmul.f32 1.0, %v1692
      %v1694 = vrcp.pop %v1648
      %v1695 = vmul.f32 %v1648, %v1694
      %v1696 = vsub.f32 1.0, %v1695
      %v1697 = vmul.f32 %v1694, %v1696
      %v1698 = vadd.f32 %v1694, %v1697
      %vm1699 = vweird.f32 %v1648
      %vm1700 = vweird.f32 %v1694
      %vm1701 = vmor %vm1699, %vm1700
      %v1702 = vsel %vm1701, %v1694, %v1698
      %v1703 = vand.u32 2147483647, %v1648
      %vm1704 = vcmp.eq.f32.partialorder %v1703, 8.507059e+37
      %v1705 = vand.u32 %v1648, 2147483648
      %v1706 = vor.u32 1.1754944e-38, %v1705
      %v1707 = vsel %vm1704, %v1706, %v1702
      %v1708 = vmul.f32 1.0, %v1707
      %v1709 = vtanh.pop %v1549
      %v1710 = vtanh.pop %v1550
      %v1711 = vtanh.pop %v1551
      %v1712 = vtanh.pop %v1552
      %v1713 = vxor.u32 %v1553, 2147483648
      %v1714 = vxor.u32 %v1554, 2147483648
      %v1715 = vxor.u32 %v1555, 2147483648
      %v1716 = vxor.u32 %v1556, 2147483648
      %v1717 = vmul.f32 %v1713, 1.442695
      %v1718 = vpow.pop %v1717
      %v1719 = vmul.f32 %v1714, 1.442695
      %v1720 = vpow.pop %v1719
      %v1721 = vmul.f32 %v1715, 1.442695
      %v1722 = vpow.pop %v1721
      %v1723 = vmul.f32 %v1716, 1.442695
      %v1724 = vpow.pop %v1723
      %v1725 = vadd.f32 %v1718, 1.0
      %v1726 = vadd.f32 %v1720, 1.0
      %v1727 = vadd.f32 %v1722, 1.0
      %v1728 = vadd.f32 %v1724, 1.0
      %v1729 = vrcp.pop %v1725
      %v1730 = vmul.f32 %v1725, %v1729
      %v1731 = vsub.f32 1.0, %v1730
      %v1732 = vmul.f32 %v1729, %v1731
      %v1733 = vadd.f32 %v1729, %v1732
      %vm1734 = vweird.f32 %v1725
      %vm1735 = vweird.f32 %v1729
      %vm1736 = vmor %vm1734, %vm1735
      %v1737 = vsel %vm1736, %v1729, %v1733
      %v1738 = vand.u32 2147483647, %v1725
      %vm1739 = vcmp.eq.f32.partialorder %v1738, 8.507059e+37
      %v1740 = vand.u32 %v1725, 2147483648
      %v1741 = vor.u32 1.1754944e-38, %v1740
      %v1742 = vsel %vm1739, %v1741, %v1737
      %v1743 = vmul.f32 1.0, %v1742
      %v1744 = vrcp.pop %v1726
      %v1745 = vmul.f32 %v1726, %v1744
      %v1746 = vsub.f32 1.0, %v1745
      %v1747 = vmul.f32 %v1744, %v1746
      %v1748 = vadd.f32 %v1744, %v1747
      %vm1749 = vweird.f32 %v1726
      %vm1750 = vweird.f32 %v1744
      %vm1751 = vmor %vm1749, %vm1750
      %v1752 = vsel %vm1751, %v1744, %v1748
      %v1753 = vand.u32 2147483647, %v1726
      %vm1754 = vcmp.eq.f32.partialorder %v1753, 8.507059e+37
      %v1755 = vand.u32 %v1726, 2147483648
      %v1756 = vor.u32 1.1754944e-38, %v1755
      %v1757 = vsel %vm1754, %v1756, %v1752
      %v1758 = vmul.f32 1.0, %v1757
      %v1759 = vrcp.pop %v1727
      %v1760 = vmul.f32 %v1727, %v1759
      %v1761 = vsub.f32 1.0, %v1760
      %v1762 = vmul.f32 %v1759, %v1761
      %v1763 = vadd.f32 %v1759, %v1762
      %vm1764 = vweird.f32 %v1727
      %vm1765 = vweird.f32 %v1759
      %vm1766 = vmor %vm1764, %vm1765
      %v1767 = vsel %vm1766, %v1759, %v1763
      %v1768 = vand.u32 2147483647, %v1727
      %vm1769 = vcmp.eq.f32.partialorder %v1768, 8.507059e+37
      %v1770 = vand.u32 %v1727, 2147483648
      %v1771 = vor.u32 1.1754944e-38, %v1770
      %v1772 = vsel %vm1769, %v1771, %v1767
      %v1773 = vmul.f32 1.0, %v1772
      %v1774 = vrcp.pop %v1728
      %v1775 = vmul.f32 %v1728, %v1774
      %v1776 = vsub.f32 1.0, %v1775
      %v1777 = vmul.f32 %v1774, %v1776
      %v1778 = vadd.f32 %v1774, %v1777
      %vm1779 = vweird.f32 %v1728
      %vm1780 = vweird.f32 %v1774
      %vm1781 = vmor %vm1779, %vm1780
      %v1782 = vsel %vm1781, %v1774, %v1778
      %v1783 = vand.u32 2147483647, %v1728
      %vm1784 = vcmp.eq.f32.partialorder %v1783, 8.507059e+37
      %v1785 = vand.u32 %v1728, 2147483648
      %v1786 = vor.u32 1.1754944e-38, %v1785
      %v1787 = vsel %vm1784, %v1786, %v1782
      %v1788 = vmul.f32 1.0, %v1787
      %v1789 = vmul.f32 %v1663, %v1405
      %v1790 = vmul.f32 %v1678, %v1406
      %v1791 = vmul.f32 %v1693, %v1407
      %v1792 = vmul.f32 %v1708, %v1408
      %v1793 = vmul.f32 %v1587, %v1709
      %v1794 = vmul.f32 %v1602, %v1710
      %v1795 = vmul.f32 %v1617, %v1711
      %v1796 = vmul.f32 %v1632, %v1712
      %v1797 = vadd.f32 %v1789, %v1793
      %v1798 = vadd.f32 %v1790, %v1794
      %v1799 = vadd.f32 %v1791, %v1795
      %v1800 = vadd.f32 %v1792, %v1796
      %v1801 = vtanh.pop %v1797
      %v1802 = vtanh.pop %v1798
      %v1803 = vtanh.pop %v1799
      %v1804 = vtanh.pop %v1800
      %v1805 = vmul.f32 %v1743, %v1801
      %v1806 = vmul.f32 %v1758, %v1802
      %v1807 = vmul.f32 %v1773, %v1803
      %v1808 = vmul.f32 %v1788, %v1804
      %1809 = vmatpush.msra.mxu0 0.0
      %1810 = vmatpush.msra.mxu0 0.0
      %1811 = vmatpush.msra.mxu0 0.0
      %1812 = vmatpush.msra.mxu0 0.0
      %1813 = vmatpush.msra.mxu0 0.0
      %1814 = vmatpush.msra.mxu0 0.0
      %1815 = vmatpush.msra.mxu0 0.0
      %1816 = vmatpush.msra.mxu0 0.0
      %1817 = vmatpush.msra.mxu0 0.0
      %1818 = vmatpush.msra.mxu0 0.0
      %1819 = vmatpush.msra.mxu0 0.0
      %1820 = vmatpush.msra.mxu0 0.0
      %1821 = vmatpush.msra.mxu0 %v1808
      %1822 = vmatpush.msra.mxu0 %v1807
      %1823 = vmatpush.msra.mxu0 %v1806
      %1824 = vmatpush.msra.mxu0 %v1805
      %1825 = vmatmul.f32.gmra.mxu0 %v584
      %v1826 = vpop.f32.mrf.mxu0
      %v1827 = vadd.f32 0.0, %v1826
      %1828 = vmatmul.f32.gmra.mxu0 %v587
      %v1829 = vpop.f32.mrf.mxu0
      %v1830 = vadd.f32 0.0, %v1829
      %1831 = vmatmul.f32.gmra.mxu0 %v590
      %v1832 = vpop.f32.mrf.mxu0
      %v1833 = vadd.f32 0.0, %v1832
      %1834 = vmatmul.f32.gmra.mxu0 %v593
      %v1835 = vpop.f32.mrf.mxu0
      %v1836 = vadd.f32 0.0, %v1835
      %1837 = vmatmul.f32.gmra.mxu0 %v596
      %v1838 = vpop.f32.mrf.mxu0
      %v1839 = vadd.f32 0.0, %v1838
      %1840 = vmatmul.f32.gmra.mxu0 %v599
      %v1841 = vpop.f32.mrf.mxu0
      %v1842 = vadd.f32 0.0, %v1841
      %1843 = vmatmul.f32.gmra.mxu0 %v602
      %v1844 = vpop.f32.mrf.mxu0
      %v1845 = vadd.f32 0.0, %v1844
      %1846 = vmatmul.f32.gmra.mxu0 %v605
      %v1847 = vpop.f32.mrf.mxu0
      %v1848 = vadd.f32 0.0, %v1847
      %1849 = vmatmul.f32.gmra.mxu0 %v608
      %v1850 = vpop.f32.mrf.mxu0
      %v1851 = vadd.f32 0.0, %v1850
      %1852 = vmatmul.f32.gmra.mxu0 %v611
      %v1853 = vpop.f32.mrf.mxu0
      %v1854 = vadd.f32 0.0, %v1853
      %1855 = vmatmul.f32.gmra.mxu0 %v614
      %v1856 = vpop.f32.mrf.mxu0
      %v1857 = vadd.f32 0.0, %v1856
      %1858 = vmatmul.f32.gmra.mxu0 %v617
      %v1859 = vpop.f32.mrf.mxu0
      %v1860 = vadd.f32 0.0, %v1859
      %1861 = vmatmul.f32.gmra.mxu0 %v620
      %v1862 = vpop.f32.mrf.mxu0
      %v1863 = vadd.f32 0.0, %v1862
      %1864 = vmatmul.f32.gmra.mxu0 %v623
      %v1865 = vpop.f32.mrf.mxu0
      %v1866 = vadd.f32 0.0, %v1865
      %1867 = vmatmul.f32.gmra.mxu0 %v626
      %v1868 = vpop.f32.mrf.mxu0
      %v1869 = vadd.f32 0.0, %v1868
      %1870 = vmatmul.f32.gmra.mxu0 %v629
      %v1871 = vpop.f32.mrf.mxu0
      %v1872 = vadd.f32 0.0, %v1871
      %1873 = vmatmul.f32.gmra.mxu0 %v632
      %v1874 = vpop.f32.mrf.mxu0
      %v1875 = vadd.f32 0.0, %v1874
      %1876 = vdwg.mxu0
      %v1877 = vadd.f32 %v1875, %v250
      %v1878 = vrot.slane %v280, 3
      %v1880 = vadd.f32 %v1877, %v1878
      %v1881 = vxor.u32 %v1880, 2147483648
      %v1882 = vmul.f32 %v1881, 1.442695
      %v1883 = vpow.pop %v1882
      %v1884 = vadd.f32 %v1883, 1.0
      %v1885 = vrcp.pop %v1884
      %v1886 = vmul.f32 %v1884, %v1885
      %v1887 = vsub.f32 1.0, %v1886
      %v1888 = vmul.f32 %v1885, %v1887
      %v1889 = vadd.f32 %v1885, %v1888
      %vm1890 = vweird.f32 %v1884
      %vm1891 = vweird.f32 %v1885
      %vm1892 = vmor %vm1890, %vm1891
      %v1893 = vsel %vm1892, %v1885, %v1889
      %v1894 = vand.u32 2147483647, %v1884
      %vm1895 = vcmp.eq.f32.partialorder %v1894, 8.507059e+37
      %v1896 = vand.u32 %v1884, 2147483648
      %v1897 = vor.u32 1.1754944e-38, %v1896
      %v1898 = vsel %vm1895, %v1897, %v1893
      %v1899 = vmul.f32 1.0, %v1898
      %v1900 = vperm.slane %v1899, 0
      %v1901 = vmul.f32 %v71, %v1900
      %v1902 = vmul.f32 %v76, %v1900
      %v1903 = vmul.f32 %v81, %v1900
      %v1904 = vmul.f32 %v86, %v1900
      %v1905 = vmul.f32 %v91, %v1900
      %v1906 = vmul.f32 %v96, %v1900
      %v1907 = vmul.f32 %v101, %v1900
      %v1908 = vmul.f32 %v106, %v1900
      %v1909 = vmul.f32 %v111, %v1900
      %v1910 = vmul.f32 %v116, %v1900
      %v1911 = vmul.f32 %v121, %v1900
      %v1912 = vmul.f32 %v126, %v1900
      %v1913 = vmul.f32 %v131, %v1900
      %v1914 = vmul.f32 %v136, %v1900
      %v1915 = vmul.f32 %v141, %v1900
      %v1916 = vmul.f32 %v146, %v1900
      %v1917 = vadd.f32 %v1901, %v1827
      %v1918 = vadd.f32 %v1902, %v1830
      %v1919 = vadd.f32 %v1903, %v1833
      %v1920 = vadd.f32 %v1904, %v1836
      %v1921 = vadd.f32 %v1905, %v1839
      %v1922 = vadd.f32 %v1906, %v1842
      %v1923 = vadd.f32 %v1907, %v1845
      %v1924 = vadd.f32 %v1908, %v1848
      %v1925 = vadd.f32 %v1909, %v1851
      %v1926 = vadd.f32 %v1910, %v1854
      %v1927 = vadd.f32 %v1911, %v1857
      %v1928 = vadd.f32 %v1912, %v1860
      %v1929 = vadd.f32 %v1913, %v1863
      %v1930 = vadd.f32 %v1914, %v1866
      %v1931 = vadd.f32 %v1915, %v1869
      %v1932 = vadd.f32 %v1916, %v1872
      %v1933 = vadd.f32 %v1917, %v167
      %v1934 = vadd.f32 %v1918, %v172
      %v1935 = vadd.f32 %v1919, %v177
      %v1936 = vadd.f32 %v1920, %v182
      %v1937 = vadd.f32 %v1921, %v187
      %v1938 = vadd.f32 %v1922, %v192
      %v1939 = vadd.f32 %v1923, %v197
      %v1940 = vadd.f32 %v1924, %v202
      %v1941 = vadd.f32 %v1925, %v207
      %v1942 = vadd.f32 %v1926, %v212
      %v1943 = vadd.f32 %v1927, %v217
      %v1944 = vadd.f32 %v1928, %v222
      %v1945 = vadd.f32 %v1929, %v227
      %v1946 = vadd.f32 %v1930, %v232
      %v1947 = vadd.f32 %v1931, %v237
      %v1948 = vadd.f32 %v1932, %v242
      %v1949 = vxor.u32 %v1933, 2147483648
      %v1950 = vxor.u32 %v1934, 2147483648
      %v1951 = vxor.u32 %v1935, 2147483648
      %v1952 = vxor.u32 %v1936, 2147483648
      %v1953 = vmul.f32 %v1949, 1.442695
      %v1954 = vpow.pop %v1953
      %v1955 = vmul.f32 %v1950, 1.442695
      %v1956 = vpow.pop %v1955
      %v1957 = vmul.f32 %v1951, 1.442695
      %v1958 = vpow.pop %v1957
      %v1959 = vmul.f32 %v1952, 1.442695
      %v1960 = vpow.pop %v1959
      %v1961 = vadd.f32 %v1954, 1.0
      %v1962 = vadd.f32 %v1956, 1.0
      %v1963 = vadd.f32 %v1958, 1.0
      %v1964 = vadd.f32 %v1960, 1.0
      %v1965 = vrcp.pop %v1961
      %v1966 = vmul.f32 %v1961, %v1965
      %v1967 = vsub.f32 1.0, %v1966
      %v1968 = vmul.f32 %v1965, %v1967
      %v1969 = vadd.f32 %v1965, %v1968
      %vm1970 = vweird.f32 %v1961
      %vm1971 = vweird.f32 %v1965
      %vm1972 = vmor %vm1970, %vm1971
      %v1973 = vsel %vm1972, %v1965, %v1969
      %v1974 = vand.u32 2147483647, %v1961
      %vm1975 = vcmp.eq.f32.partialorder %v1974, 8.507059e+37
      %v1976 = vand.u32 %v1961, 2147483648
      %v1977 = vor.u32 1.1754944e-38, %v1976
      %v1978 = vsel %vm1975, %v1977, %v1973
      %v1979 = vmul.f32 1.0, %v1978
      %v1980 = vrcp.pop %v1962
      %v1981 = vmul.f32 %v1962, %v1980
      %v1982 = vsub.f32 1.0, %v1981
      %v1983 = vmul.f32 %v1980, %v1982
      %v1984 = vadd.f32 %v1980, %v1983
      %vm1985 = vweird.f32 %v1962
      %vm1986 = vweird.f32 %v1980
      %vm1987 = vmor %vm1985, %vm1986
      %v1988 = vsel %vm1987, %v1980, %v1984
      %v1989 = vand.u32 2147483647, %v1962
      %vm1990 = vcmp.eq.f32.partialorder %v1989, 8.507059e+37
      %v1991 = vand.u32 %v1962, 2147483648
      %v1992 = vor.u32 1.1754944e-38, %v1991
      %v1993 = vsel %vm1990, %v1992, %v1988
      %v1994 = vmul.f32 1.0, %v1993
      %v1995 = vrcp.pop %v1963
      %v1996 = vmul.f32 %v1963, %v1995
      %v1997 = vsub.f32 1.0, %v1996
      %v1998 = vmul.f32 %v1995, %v1997
      %v1999 = vadd.f32 %v1995, %v1998
      %vm2000 = vweird.f32 %v1963
      %vm2001 = vweird.f32 %v1995
      %vm2002 = vmor %vm2000, %vm2001
      %v2003 = vsel %vm2002, %v1995, %v1999
      %v2004 = vand.u32 2147483647, %v1963
      %vm2005 = vcmp.eq.f32.partialorder %v2004, 8.507059e+37
      %v2006 = vand.u32 %v1963, 2147483648
      %v2007 = vor.u32 1.1754944e-38, %v2006
      %v2008 = vsel %vm2005, %v2007, %v2003
      %v2009 = vmul.f32 1.0, %v2008
      %v2010 = vrcp.pop %v1964
      %v2011 = vmul.f32 %v1964, %v2010
      %v2012 = vsub.f32 1.0, %v2011
      %v2013 = vmul.f32 %v2010, %v2012
      %v2014 = vadd.f32 %v2010, %v2013
      %vm2015 = vweird.f32 %v1964
      %vm2016 = vweird.f32 %v2010
      %vm2017 = vmor %vm2015, %vm2016
      %v2018 = vsel %vm2017, %v2010, %v2014
      %v2019 = vand.u32 2147483647, %v1964
      %vm2020 = vcmp.eq.f32.partialorder %v2019, 8.507059e+37
      %v2021 = vand.u32 %v1964, 2147483648
      %v2022 = vor.u32 1.1754944e-38, %v2021
      %v2023 = vsel %vm2020, %v2022, %v2018
      %v2024 = vmul.f32 1.0, %v2023
      %v2025 = vxor.u32 %v1937, 2147483648
      %v2026 = vxor.u32 %v1938, 2147483648
      %v2027 = vxor.u32 %v1939, 2147483648
      %v2028 = vxor.u32 %v1940, 2147483648
      %v2029 = vmul.f32 %v2025, 1.442695
      %v2030 = vpow.pop %v2029
      %v2031 = vmul.f32 %v2026, 1.442695
      %v2032 = vpow.pop %v2031
      %v2033 = vmul.f32 %v2027, 1.442695
      %v2034 = vpow.pop %v2033
      %v2035 = vmul.f32 %v2028, 1.442695
      %v2036 = vpow.pop %v2035
      %v2037 = vadd.f32 %v2030, 1.0
      %v2038 = vadd.f32 %v2032, 1.0
      %v2039 = vadd.f32 %v2034, 1.0
      %v2040 = vadd.f32 %v2036, 1.0
      %v2041 = vrcp.pop %v2037
      %v2042 = vmul.f32 %v2037, %v2041
      %v2043 = vsub.f32 1.0, %v2042
      %v2044 = vmul.f32 %v2041, %v2043
      %v2045 = vadd.f32 %v2041, %v2044
      %vm2046 = vweird.f32 %v2037
      %vm2047 = vweird.f32 %v2041
      %vm2048 = vmor %vm2046, %vm2047
      %v2049 = vsel %vm2048, %v2041, %v2045
      %v2050 = vand.u32 2147483647, %v2037
      %vm2051 = vcmp.eq.f32.partialorder %v2050, 8.507059e+37
      %v2052 = vand.u32 %v2037, 2147483648
      %v2053 = vor.u32 1.1754944e-38, %v2052
      %v2054 = vsel %vm2051, %v2053, %v2049
      %v2055 = vmul.f32 1.0, %v2054
      %v2056 = vrcp.pop %v2038
      %v2057 = vmul.f32 %v2038, %v2056
      %v2058 = vsub.f32 1.0, %v2057
      %v2059 = vmul.f32 %v2056, %v2058
      %v2060 = vadd.f32 %v2056, %v2059
      %vm2061 = vweird.f32 %v2038
      %vm2062 = vweird.f32 %v2056
      %vm2063 = vmor %vm2061, %vm2062
      %v2064 = vsel %vm2063, %v2056, %v2060
      %v2065 = vand.u32 2147483647, %v2038
      %vm2066 = vcmp.eq.f32.partialorder %v2065, 8.507059e+37
      %v2067 = vand.u32 %v2038, 2147483648
      %v2068 = vor.u32 1.1754944e-38, %v2067
      %v2069 = vsel %vm2066, %v2068, %v2064
      %v2070 = vmul.f32 1.0, %v2069
      %v2071 = vrcp.pop %v2039
      %v2072 = vmul.f32 %v2039, %v2071
      %v2073 = vsub.f32 1.0, %v2072
      %v2074 = vmul.f32 %v2071, %v2073
      %v2075 = vadd.f32 %v2071, %v2074
      %vm2076 = vweird.f32 %v2039
      %vm2077 = vweird.f32 %v2071
      %vm2078 = vmor %vm2076, %vm2077
      %v2079 = vsel %vm2078, %v2071, %v2075
      %v2080 = vand.u32 2147483647, %v2039
      %vm2081 = vcmp.eq.f32.partialorder %v2080, 8.507059e+37
      %v2082 = vand.u32 %v2039, 2147483648
      %v2083 = vor.u32 1.1754944e-38, %v2082
      %v2084 = vsel %vm2081, %v2083, %v2079
      %v2085 = vmul.f32 1.0, %v2084
      %v2086 = vrcp.pop %v2040
      %v2087 = vmul.f32 %v2040, %v2086
      %v2088 = vsub.f32 1.0, %v2087
      %v2089 = vmul.f32 %v2086, %v2088
      %v2090 = vadd.f32 %v2086, %v2089
      %vm2091 = vweird.f32 %v2040
      %vm2092 = vweird.f32 %v2086
      %vm2093 = vmor %vm2091, %vm2092
      %v2094 = vsel %vm2093, %v2086, %v2090
      %v2095 = vand.u32 2147483647, %v2040
      %vm2096 = vcmp.eq.f32.partialorder %v2095, 8.507059e+37
      %v2097 = vand.u32 %v2040, 2147483648
      %v2098 = vor.u32 1.1754944e-38, %v2097
      %v2099 = vsel %vm2096, %v2098, %v2094
      %v2100 = vmul.f32 1.0, %v2099
      %v2101 = vtanh.pop %v1941
      %v2102 = vtanh.pop %v1942
      %v2103 = vtanh.pop %v1943
      %v2104 = vtanh.pop %v1944
      %v2105 = vxor.u32 %v1945, 2147483648
      %v2106 = vxor.u32 %v1946, 2147483648
      %v2107 = vxor.u32 %v1947, 2147483648
      %v2108 = vxor.u32 %v1948, 2147483648
      %v2109 = vmul.f32 %v2105, 1.442695
      %v2110 = vpow.pop %v2109
      %v2111 = vmul.f32 %v2106, 1.442695
      %v2112 = vpow.pop %v2111
      %v2113 = vmul.f32 %v2107, 1.442695
      %v2114 = vpow.pop %v2113
      %v2115 = vmul.f32 %v2108, 1.442695
      %v2116 = vpow.pop %v2115
      %v2117 = vadd.f32 %v2110, 1.0
      %v2118 = vadd.f32 %v2112, 1.0
      %v2119 = vadd.f32 %v2114, 1.0
      %v2120 = vadd.f32 %v2116, 1.0
      %v2121 = vrcp.pop %v2117
      %v2122 = vmul.f32 %v2117, %v2121
      %v2123 = vsub.f32 1.0, %v2122
      %v2124 = vmul.f32 %v2121, %v2123
      %v2125 = vadd.f32 %v2121, %v2124
      %vm2126 = vweird.f32 %v2117
      %vm2127 = vweird.f32 %v2121
      %vm2128 = vmor %vm2126, %vm2127
      %v2129 = vsel %vm2128, %v2121, %v2125
      %v2130 = vand.u32 2147483647, %v2117
      %vm2131 = vcmp.eq.f32.partialorder %v2130, 8.507059e+37
      %v2132 = vand.u32 %v2117, 2147483648
      %v2133 = vor.u32 1.1754944e-38, %v2132
      %v2134 = vsel %vm2131, %v2133, %v2129
      %v2135 = vmul.f32 1.0, %v2134
      %v2136 = vrcp.pop %v2118
      %v2137 = vmul.f32 %v2118, %v2136
      %v2138 = vsub.f32 1.0, %v2137
      %v2139 = vmul.f32 %v2136, %v2138
      %v2140 = vadd.f32 %v2136, %v2139
      %vm2141 = vweird.f32 %v2118
      %vm2142 = vweird.f32 %v2136
      %vm2143 = vmor %vm2141, %vm2142
      %v2144 = vsel %vm2143, %v2136, %v2140
      %v2145 = vand.u32 2147483647, %v2118
      %vm2146 = vcmp.eq.f32.partialorder %v2145, 8.507059e+37
      %v2147 = vand.u32 %v2118, 2147483648
      %v2148 = vor.u32 1.1754944e-38, %v2147
      %v2149 = vsel %vm2146, %v2148, %v2144
      %v2150 = vmul.f32 1.0, %v2149
      %v2151 = vrcp.pop %v2119
      %v2152 = vmul.f32 %v2119, %v2151
      %v2153 = vsub.f32 1.0, %v2152
      %v2154 = vmul.f32 %v2151, %v2153
      %v2155 = vadd.f32 %v2151, %v2154
      %vm2156 = vweird.f32 %v2119
      %vm2157 = vweird.f32 %v2151
      %vm2158 = vmor %vm2156, %vm2157
      %v2159 = vsel %vm2158, %v2151, %v2155
      %v2160 = vand.u32 2147483647, %v2119
      %vm2161 = vcmp.eq.f32.partialorder %v2160, 8.507059e+37
      %v2162 = vand.u32 %v2119, 2147483648
      %v2163 = vor.u32 1.1754944e-38, %v2162
      %v2164 = vsel %vm2161, %v2163, %v2159
      %v2165 = vmul.f32 1.0, %v2164
      %v2166 = vrcp.pop %v2120
      %v2167 = vmul.f32 %v2120, %v2166
      %v2168 = vsub.f32 1.0, %v2167
      %v2169 = vmul.f32 %v2166, %v2168
      %v2170 = vadd.f32 %v2166, %v2169
      %vm2171 = vweird.f32 %v2120
      %vm2172 = vweird.f32 %v2166
      %vm2173 = vmor %vm2171, %vm2172
      %v2174 = vsel %vm2173, %v2166, %v2170
      %v2175 = vand.u32 2147483647, %v2120
      %vm2176 = vcmp.eq.f32.partialorder %v2175, 8.507059e+37
      %v2177 = vand.u32 %v2120, 2147483648
      %v2178 = vor.u32 1.1754944e-38, %v2177
      %v2179 = vsel %vm2176, %v2178, %v2174
      %v2180 = vmul.f32 1.0, %v2179
      %v2181 = vmul.f32 %v2055, %v1797
      %v2182 = vmul.f32 %v2070, %v1798
      %v2183 = vmul.f32 %v2085, %v1799
      %v2184 = vmul.f32 %v2100, %v1800
      %v2185 = vmul.f32 %v1979, %v2101
      %v2186 = vmul.f32 %v1994, %v2102
      %v2187 = vmul.f32 %v2009, %v2103
      %v2188 = vmul.f32 %v2024, %v2104
      %v2189 = vadd.f32 %v2181, %v2185
      %v2190 = vadd.f32 %v2182, %v2186
      %v2191 = vadd.f32 %v2183, %v2187
      %v2192 = vadd.f32 %v2184, %v2188
      %v2193 = vtanh.pop %v2189
      %v2194 = vtanh.pop %v2190
      %v2195 = vtanh.pop %v2191
      %v2196 = vtanh.pop %v2192
      %v2197 = vmul.f32 %v2135, %v2193
      %v2198 = vmul.f32 %v2150, %v2194
      %v2199 = vmul.f32 %v2165, %v2195
      %v2200 = vmul.f32 %v2180, %v2196
      %2201 = vmatpush.msra.mxu0 0.0
      %2202 = vmatpush.msra.mxu0 0.0
      %2203 = vmatpush.msra.mxu0 0.0
      %2204 = vmatpush.msra.mxu0 0.0
      %2205 = vmatpush.msra.mxu0 0.0
      %2206 = vmatpush.msra.mxu0 0.0
      %2207 = vmatpush.msra.mxu0 0.0
      %2208 = vmatpush.msra.mxu0 0.0
      %2209 = vmatpush.msra.mxu0 0.0
      %2210 = vmatpush.msra.mxu0 0.0
      %2211 = vmatpush.msra.mxu0 0.0
      %2212 = vmatpush.msra.mxu0 0.0
      %2213 = vmatpush.msra.mxu0 %v2200
      %2214 = vmatpush.msra.mxu0 %v2199
      %2215 = vmatpush.msra.mxu0 %v2198
      %2216 = vmatpush.msra.mxu0 %v2197
      %2217 = vmatmul.f32.gmra.mxu0 %v584
      %v2218 = vpop.f32.mrf.mxu0
      %v2219 = vadd.f32 0.0, %v2218
      %2220 = vmatmul.f32.gmra.mxu0 %v587
      %v2221 = vpop.f32.mrf.mxu0
      %v2222 = vadd.f32 0.0, %v2221
      %2223 = vmatmul.f32.gmra.mxu0 %v590
      %v2224 = vpop.f32.mrf.mxu0
      %v2225 = vadd.f32 0.0, %v2224
      %2226 = vmatmul.f32.gmra.mxu0 %v593
      %v2227 = vpop.f32.mrf.mxu0
      %v2228 = vadd.f32 0.0, %v2227
      %2229 = vmatmul.f32.gmra.mxu0 %v596
      %v2230 = vpop.f32.mrf.mxu0
      %v2231 = vadd.f32 0.0, %v2230
      %2232 = vmatmul.f32.gmra.mxu0 %v599
      %v2233 = vpop.f32.mrf.mxu0
      %v2234 = vadd.f32 0.0, %v2233
      %2235 = vmatmul.f32.gmra.mxu0 %v602
      %v2236 = vpop.f32.mrf.mxu0
      %v2237 = vadd.f32 0.0, %v2236
      %2238 = vmatmul.f32.gmra.mxu0 %v605
      %v2239 = vpop.f32.mrf.mxu0
      %v2240 = vadd.f32 0.0, %v2239
      %2241 = vmatmul.f32.gmra.mxu0 %v608
      %v2242 = vpop.f32.mrf.mxu0
      %v2243 = vadd.f32 0.0, %v2242
      %2244 = vmatmul.f32.gmra.mxu0 %v611
      %v2245 = vpop.f32.mrf.mxu0
      %v2246 = vadd.f32 0.0, %v2245
      %2247 = vmatmul.f32.gmra.mxu0 %v614
      %v2248 = vpop.f32.mrf.mxu0
      %v2249 = vadd.f32 0.0, %v2248
      %2250 = vmatmul.f32.gmra.mxu0 %v617
      %v2251 = vpop.f32.mrf.mxu0
      %v2252 = vadd.f32 0.0, %v2251
      %2253 = vmatmul.f32.gmra.mxu0 %v620
      %v2254 = vpop.f32.mrf.mxu0
      %v2255 = vadd.f32 0.0, %v2254
      %2256 = vmatmul.f32.gmra.mxu0 %v623
      %v2257 = vpop.f32.mrf.mxu0
      %v2258 = vadd.f32 0.0, %v2257
      %2259 = vmatmul.f32.gmra.mxu0 %v626
      %v2260 = vpop.f32.mrf.mxu0
      %v2261 = vadd.f32 0.0, %v2260
      %2262 = vmatmul.f32.gmra.mxu0 %v629
      %v2263 = vpop.f32.mrf.mxu0
      %v2264 = vadd.f32 0.0, %v2263
      %2265 = vmatmul.f32.gmra.mxu0 %v632
      %v2266 = vpop.f32.mrf.mxu0
      %v2267 = vadd.f32 0.0, %v2266
      %2268 = vdwg.mxu0
      %v2269 = vadd.f32 %v2267, %v250
      %v2270 = vrot.slane %v280, 4
      %v2272 = vadd.f32 %v2269, %v2270
      %v2273 = vxor.u32 %v2272, 2147483648
      %v2274 = vmul.f32 %v2273, 1.442695
      %v2275 = vpow.pop %v2274
      %v2276 = vadd.f32 %v2275, 1.0
      %v2277 = vrcp.pop %v2276
      %v2278 = vmul.f32 %v2276, %v2277
      %v2279 = vsub.f32 1.0, %v2278
      %v2280 = vmul.f32 %v2277, %v2279
      %v2281 = vadd.f32 %v2277, %v2280
      %vm2282 = vweird.f32 %v2276
      %vm2283 = vweird.f32 %v2277
      %vm2284 = vmor %vm2282, %vm2283
      %v2285 = vsel %vm2284, %v2277, %v2281
      %v2286 = vand.u32 2147483647, %v2276
      %vm2287 = vcmp.eq.f32.partialorder %v2286, 8.507059e+37
      %v2288 = vand.u32 %v2276, 2147483648
      %v2289 = vor.u32 1.1754944e-38, %v2288
      %v2290 = vsel %vm2287, %v2289, %v2285
      %v2291 = vmul.f32 1.0, %v2290
      %v2292 = vperm.slane %v2291, 0
      %v2293 = vmul.f32 %v71, %v2292
      %v2294 = vmul.f32 %v76, %v2292
      %v2295 = vmul.f32 %v81, %v2292
      %v2296 = vmul.f32 %v86, %v2292
      %v2297 = vmul.f32 %v91, %v2292
      %v2298 = vmul.f32 %v96, %v2292
      %v2299 = vmul.f32 %v101, %v2292
      %v2300 = vmul.f32 %v106, %v2292
      %v2301 = vmul.f32 %v111, %v2292
      %v2302 = vmul.f32 %v116, %v2292
      %v2303 = vmul.f32 %v121, %v2292
      %v2304 = vmul.f32 %v126, %v2292
      %v2305 = vmul.f32 %v131, %v2292
      %v2306 = vmul.f32 %v136, %v2292
      %v2307 = vmul.f32 %v141, %v2292
      %v2308 = vmul.f32 %v146, %v2292
      %v2309 = vadd.f32 %v2293, %v2219
      %v2310 = vadd.f32 %v2294, %v2222
      %v2311 = vadd.f32 %v2295, %v2225
      %v2312 = vadd.f32 %v2296, %v2228
      %v2313 = vadd.f32 %v2297, %v2231
      %v2314 = vadd.f32 %v2298, %v2234
      %v2315 = vadd.f32 %v2299, %v2237
      %v2316 = vadd.f32 %v2300, %v2240
      %v2317 = vadd.f32 %v2301, %v2243
      %v2318 = vadd.f32 %v2302, %v2246
      %v2319 = vadd.f32 %v2303, %v2249
      %v2320 = vadd.f32 %v2304, %v2252
      %v2321 = vadd.f32 %v2305, %v2255
      %v2322 = vadd.f32 %v2306, %v2258
      %v2323 = vadd.f32 %v2307, %v2261
      %v2324 = vadd.f32 %v2308, %v2264
      %v2325 = vadd.f32 %v2309, %v167
      %v2326 = vadd.f32 %v2310, %v172
      %v2327 = vadd.f32 %v2311, %v177
      %v2328 = vadd.f32 %v2312, %v182
      %v2329 = vadd.f32 %v2313, %v187
      %v2330 = vadd.f32 %v2314, %v192
      %v2331 = vadd.f32 %v2315, %v197
      %v2332 = vadd.f32 %v2316, %v202
      %v2333 = vadd.f32 %v2317, %v207
      %v2334 = vadd.f32 %v2318, %v212
      %v2335 = vadd.f32 %v2319, %v217
      %v2336 = vadd.f32 %v2320, %v222
      %v2337 = vadd.f32 %v2321, %v227
      %v2338 = vadd.f32 %v2322, %v232
      %v2339 = vadd.f32 %v2323, %v237
      %v2340 = vadd.f32 %v2324, %v242
      %v2341 = vxor.u32 %v2325, 2147483648
      %v2342 = vxor.u32 %v2326, 2147483648
      %v2343 = vxor.u32 %v2327, 2147483648
      %v2344 = vxor.u32 %v2328, 2147483648
      %v2345 = vmul.f32 %v2341, 1.442695
      %v2346 = vpow.pop %v2345
      %v2347 = vmul.f32 %v2342, 1.442695
      %v2348 = vpow.pop %v2347
      %v2349 = vmul.f32 %v2343, 1.442695
      %v2350 = vpow.pop %v2349
      %v2351 = vmul.f32 %v2344, 1.442695
      %v2352 = vpow.pop %v2351
      %v2353 = vadd.f32 %v2346, 1.0
      %v2354 = vadd.f32 %v2348, 1.0
      %v2355 = vadd.f32 %v2350, 1.0
      %v2356 = vadd.f32 %v2352, 1.0
      %v2357 = vrcp.pop %v2353
      %v2358 = vmul.f32 %v2353, %v2357
      %v2359 = vsub.f32 1.0, %v2358
      %v2360 = vmul.f32 %v2357, %v2359
      %v2361 = vadd.f32 %v2357, %v2360
      %vm2362 = vweird.f32 %v2353
      %vm2363 = vweird.f32 %v2357
      %vm2364 = vmor %vm2362, %vm2363
      %v2365 = vsel %vm2364, %v2357, %v2361
      %v2366 = vand.u32 2147483647, %v2353
      %vm2367 = vcmp.eq.f32.partialorder %v2366, 8.507059e+37
      %v2368 = vand.u32 %v2353, 2147483648
      %v2369 = vor.u32 1.1754944e-38, %v2368
      %v2370 = vsel %vm2367, %v2369, %v2365
      %v2371 = vmul.f32 1.0, %v2370
      %v2372 = vrcp.pop %v2354
      %v2373 = vmul.f32 %v2354, %v2372
      %v2374 = vsub.f32 1.0, %v2373
      %v2375 = vmul.f32 %v2372, %v2374
      %v2376 = vadd.f32 %v2372, %v2375
      %vm2377 = vweird.f32 %v2354
      %vm2378 = vweird.f32 %v2372
      %vm2379 = vmor %vm2377, %vm2378
      %v2380 = vsel %vm2379, %v2372, %v2376
      %v2381 = vand.u32 2147483647, %v2354
      %vm2382 = vcmp.eq.f32.partialorder %v2381, 8.507059e+37
      %v2383 = vand.u32 %v2354, 2147483648
      %v2384 = vor.u32 1.1754944e-38, %v2383
      %v2385 = vsel %vm2382, %v2384, %v2380
      %v2386 = vmul.f32 1.0, %v2385
      %v2387 = vrcp.pop %v2355
      %v2388 = vmul.f32 %v2355, %v2387
      %v2389 = vsub.f32 1.0, %v2388
      %v2390 = vmul.f32 %v2387, %v2389
      %v2391 = vadd.f32 %v2387, %v2390
      %vm2392 = vweird.f32 %v2355
      %vm2393 = vweird.f32 %v2387
      %vm2394 = vmor %vm2392, %vm2393
      %v2395 = vsel %vm2394, %v2387, %v2391
      %v2396 = vand.u32 2147483647, %v2355
      %vm2397 = vcmp.eq.f32.partialorder %v2396, 8.507059e+37
      %v2398 = vand.u32 %v2355, 2147483648
      %v2399 = vor.u32 1.1754944e-38, %v2398
      %v2400 = vsel %vm2397, %v2399, %v2395
      %v2401 = vmul.f32 1.0, %v2400
      %v2402 = vrcp.pop %v2356
      %v2403 = vmul.f32 %v2356, %v2402
      %v2404 = vsub.f32 1.0, %v2403
      %v2405 = vmul.f32 %v2402, %v2404
      %v2406 = vadd.f32 %v2402, %v2405
      %vm2407 = vweird.f32 %v2356
      %vm2408 = vweird.f32 %v2402
      %vm2409 = vmor %vm2407, %vm2408
      %v2410 = vsel %vm2409, %v2402, %v2406
      %v2411 = vand.u32 2147483647, %v2356
      %vm2412 = vcmp.eq.f32.partialorder %v2411, 8.507059e+37
      %v2413 = vand.u32 %v2356, 2147483648
      %v2414 = vor.u32 1.1754944e-38, %v2413
      %v2415 = vsel %vm2412, %v2414, %v2410
      %v2416 = vmul.f32 1.0, %v2415
      %v2417 = vxor.u32 %v2329, 2147483648
      %v2418 = vxor.u32 %v2330, 2147483648
      %v2419 = vxor.u32 %v2331, 2147483648
      %v2420 = vxor.u32 %v2332, 2147483648
      %v2421 = vmul.f32 %v2417, 1.442695
      %v2422 = vpow.pop %v2421
      %v2423 = vmul.f32 %v2418, 1.442695
      %v2424 = vpow.pop %v2423
      %v2425 = vmul.f32 %v2419, 1.442695
      %v2426 = vpow.pop %v2425
      %v2427 = vmul.f32 %v2420, 1.442695
      %v2428 = vpow.pop %v2427
      %v2429 = vadd.f32 %v2422, 1.0
      %v2430 = vadd.f32 %v2424, 1.0
      %v2431 = vadd.f32 %v2426, 1.0
      %v2432 = vadd.f32 %v2428, 1.0
      %v2433 = vrcp.pop %v2429
      %v2434 = vmul.f32 %v2429, %v2433
      %v2435 = vsub.f32 1.0, %v2434
      %v2436 = vmul.f32 %v2433, %v2435
      %v2437 = vadd.f32 %v2433, %v2436
      %vm2438 = vweird.f32 %v2429
      %vm2439 = vweird.f32 %v2433
      %vm2440 = vmor %vm2438, %vm2439
      %v2441 = vsel %vm2440, %v2433, %v2437
      %v2442 = vand.u32 2147483647, %v2429
      %vm2443 = vcmp.eq.f32.partialorder %v2442, 8.507059e+37
      %v2444 = vand.u32 %v2429, 2147483648
      %v2445 = vor.u32 1.1754944e-38, %v2444
      %v2446 = vsel %vm2443, %v2445, %v2441
      %v2447 = vmul.f32 1.0, %v2446
      %v2448 = vrcp.pop %v2430
      %v2449 = vmul.f32 %v2430, %v2448
      %v2450 = vsub.f32 1.0, %v2449
      %v2451 = vmul.f32 %v2448, %v2450
      %v2452 = vadd.f32 %v2448, %v2451
      %vm2453 = vweird.f32 %v2430
      %vm2454 = vweird.f32 %v2448
      %vm2455 = vmor %vm2453, %vm2454
      %v2456 = vsel %vm2455, %v2448, %v2452
      %v2457 = vand.u32 2147483647, %v2430
      %vm2458 = vcmp.eq.f32.partialorder %v2457, 8.507059e+37
      %v2459 = vand.u32 %v2430, 2147483648
      %v2460 = vor.u32 1.1754944e-38, %v2459
      %v2461 = vsel %vm2458, %v2460, %v2456
      %v2462 = vmul.f32 1.0, %v2461
      %v2463 = vrcp.pop %v2431
      %v2464 = vmul.f32 %v2431, %v2463
      %v2465 = vsub.f32 1.0, %v2464
      %v2466 = vmul.f32 %v2463, %v2465
      %v2467 = vadd.f32 %v2463, %v2466
      %vm2468 = vweird.f32 %v2431
      %vm2469 = vweird.f32 %v2463
      %vm2470 = vmor %vm2468, %vm2469
      %v2471 = vsel %vm2470, %v2463, %v2467
      %v2472 = vand.u32 2147483647, %v2431
      %vm2473 = vcmp.eq.f32.partialorder %v2472, 8.507059e+37
      %v2474 = vand.u32 %v2431, 2147483648
      %v2475 = vor.u32 1.1754944e-38, %v2474
      %v2476 = vsel %vm2473, %v2475, %v2471
      %v2477 = vmul.f32 1.0, %v2476
      %v2478 = vrcp.pop %v2432
      %v2479 = vmul.f32 %v2432, %v2478
      %v2480 = vsub.f32 1.0, %v2479
      %v2481 = vmul.f32 %v2478, %v2480
      %v2482 = vadd.f32 %v2478, %v2481
      %vm2483 = vweird.f32 %v2432
      %vm2484 = vweird.f32 %v2478
      %vm2485 = vmor %vm2483, %vm2484
      %v2486 = vsel %vm2485, %v2478, %v2482
      %v2487 = vand.u32 2147483647, %v2432
      %vm2488 = vcmp.eq.f32.partialorder %v2487, 8.507059e+37
      %v2489 = vand.u32 %v2432, 2147483648
      %v2490 = vor.u32 1.1754944e-38, %v2489
      %v2491 = vsel %vm2488, %v2490, %v2486
      %v2492 = vmul.f32 1.0, %v2491
      %v2493 = vtanh.pop %v2333
      %v2494 = vtanh.pop %v2334
      %v2495 = vtanh.pop %v2335
      %v2496 = vtanh.pop %v2336
      %v2497 = vxor.u32 %v2337, 2147483648
      %v2498 = vxor.u32 %v2338, 2147483648
      %v2499 = vxor.u32 %v2339, 2147483648
      %v2500 = vxor.u32 %v2340, 2147483648
      %v2501 = vmul.f32 %v2497, 1.442695
      %v2502 = vpow.pop %v2501
      %v2503 = vmul.f32 %v2498, 1.442695
      %v2504 = vpow.pop %v2503
      %v2505 = vmul.f32 %v2499, 1.442695
      %v2506 = vpow.pop %v2505
      %v2507 = vmul.f32 %v2500, 1.442695
      %v2508 = vpow.pop %v2507
      %v2509 = vadd.f32 %v2502, 1.0
      %v2510 = vadd.f32 %v2504, 1.0
      %v2511 = vadd.f32 %v2506, 1.0
      %v2512 = vadd.f32 %v2508, 1.0
      %v2513 = vrcp.pop %v2509
      %v2514 = vmul.f32 %v2509, %v2513
      %v2515 = vsub.f32 1.0, %v2514
      %v2516 = vmul.f32 %v2513, %v2515
      %v2517 = vadd.f32 %v2513, %v2516
      %vm2518 = vweird.f32 %v2509
      %vm2519 = vweird.f32 %v2513
      %vm2520 = vmor %vm2518, %vm2519
      %v2521 = vsel %vm2520, %v2513, %v2517
      %v2522 = vand.u32 2147483647, %v2509
      %vm2523 = vcmp.eq.f32.partialorder %v2522, 8.507059e+37
      %v2524 = vand.u32 %v2509, 2147483648
      %v2525 = vor.u32 1.1754944e-38, %v2524
      %v2526 = vsel %vm2523, %v2525, %v2521
      %v2527 = vmul.f32 1.0, %v2526
      %v2528 = vrcp.pop %v2510
      %v2529 = vmul.f32 %v2510, %v2528
      %v2530 = vsub.f32 1.0, %v2529
      %v2531 = vmul.f32 %v2528, %v2530
      %v2532 = vadd.f32 %v2528, %v2531
      %vm2533 = vweird.f32 %v2510
      %vm2534 = vweird.f32 %v2528
      %vm2535 = vmor %vm2533, %vm2534
      %v2536 = vsel %vm2535, %v2528, %v2532
      %v2537 = vand.u32 2147483647, %v2510
      %vm2538 = vcmp.eq.f32.partialorder %v2537, 8.507059e+37
      %v2539 = vand.u32 %v2510, 2147483648
      %v2540 = vor.u32 1.1754944e-38, %v2539
      %v2541 = vsel %vm2538, %v2540, %v2536
      %v2542 = vmul.f32 1.0, %v2541
      %v2543 = vrcp.pop %v2511
      %v2544 = vmul.f32 %v2511, %v2543
      %v2545 = vsub.f32 1.0, %v2544
      %v2546 = vmul.f32 %v2543, %v2545
      %v2547 = vadd.f32 %v2543, %v2546
      %vm2548 = vweird.f32 %v2511
      %vm2549 = vweird.f32 %v2543
      %vm2550 = vmor %vm2548, %vm2549
      %v2551 = vsel %vm2550, %v2543, %v2547
      %v2552 = vand.u32 2147483647, %v2511
      %vm2553 = vcmp.eq.f32.partialorder %v2552, 8.507059e+37
      %v2554 = vand.u32 %v2511, 2147483648
      %v2555 = vor.u32 1.1754944e-38, %v2554
      %v2556 = vsel %vm2553, %v2555, %v2551
      %v2557 = vmul.f32 1.0, %v2556
      %v2558 = vrcp.pop %v2512
      %v2559 = vmul.f32 %v2512, %v2558
      %v2560 = vsub.f32 1.0, %v2559
      %v2561 = vmul.f32 %v2558, %v2560
      %v2562 = vadd.f32 %v2558, %v2561
      %vm2563 = vweird.f32 %v2512
      %vm2564 = vweird.f32 %v2558
      %vm2565 = vmor %vm2563, %vm2564
      %v2566 = vsel %vm2565, %v2558, %v2562
      %v2567 = vand.u32 2147483647, %v2512
      %vm2568 = vcmp.eq.f32.partialorder %v2567, 8.507059e+37
      %v2569 = vand.u32 %v2512, 2147483648
      %v2570 = vor.u32 1.1754944e-38, %v2569
      %v2571 = vsel %vm2568, %v2570, %v2566
      %v2572 = vmul.f32 1.0, %v2571
      %v2573 = vmul.f32 %v2447, %v2189
      %v2574 = vmul.f32 %v2462, %v2190
      %v2575 = vmul.f32 %v2477, %v2191
      %v2576 = vmul.f32 %v2492, %v2192
      %v2577 = vmul.f32 %v2371, %v2493
      %v2578 = vmul.f32 %v2386, %v2494
      %v2579 = vmul.f32 %v2401, %v2495
      %v2580 = vmul.f32 %v2416, %v2496
      %v2581 = vadd.f32 %v2573, %v2577
      %v2582 = vadd.f32 %v2574, %v2578
      %v2583 = vadd.f32 %v2575, %v2579
      %v2584 = vadd.f32 %v2576, %v2580
      %v2585 = vtanh.pop %v2581
      %v2586 = vtanh.pop %v2582
      %v2587 = vtanh.pop %v2583
      %v2588 = vtanh.pop %v2584
      %v2589 = vmul.f32 %v2527, %v2585
      %v2590 = vmul.f32 %v2542, %v2586
      %v2591 = vmul.f32 %v2557, %v2587
      %v2592 = vmul.f32 %v2572, %v2588
      %2593 = vmatpush.msra.mxu0 0.0
      %2594 = vmatpush.msra.mxu0 0.0
      %2595 = vmatpush.msra.mxu0 0.0
      %2596 = vmatpush.msra.mxu0 0.0
      %2597 = vmatpush.msra.mxu0 0.0
      %2598 = vmatpush.msra.mxu0 0.0
      %2599 = vmatpush.msra.mxu0 0.0
      %2600 = vmatpush.msra.mxu0 0.0
      %2601 = vmatpush.msra.mxu0 0.0
      %2602 = vmatpush.msra.mxu0 0.0
      %2603 = vmatpush.msra.mxu0 0.0
      %2604 = vmatpush.msra.mxu0 0.0
      %2605 = vmatpush.msra.mxu0 %v2592
      %2606 = vmatpush.msra.mxu0 %v2591
      %2607 = vmatpush.msra.mxu0 %v2590
      %2608 = vmatpush.msra.mxu0 %v2589
      %2609 = vmatmul.f32.gmra.mxu0 %v584
      %v2610 = vpop.f32.mrf.mxu0
      %v2611 = vadd.f32 0.0, %v2610
      %2612 = vmatmul.f32.gmra.mxu0 %v587
      %v2613 = vpop.f32.mrf.mxu0
      %v2614 = vadd.f32 0.0, %v2613
      %2615 = vmatmul.f32.gmra.mxu0 %v590
      %v2616 = vpop.f32.mrf.mxu0
      %v2617 = vadd.f32 0.0, %v2616
      %2618 = vmatmul.f32.gmra.mxu0 %v593
      %v2619 = vpop.f32.mrf.mxu0
      %v2620 = vadd.f32 0.0, %v2619
      %2621 = vmatmul.f32.gmra.mxu0 %v596
      %v2622 = vpop.f32.mrf.mxu0
      %v2623 = vadd.f32 0.0, %v2622
      %2624 = vmatmul.f32.gmra.mxu0 %v599
      %v2625 = vpop.f32.mrf.mxu0
      %v2626 = vadd.f32 0.0, %v2625
      %2627 = vmatmul.f32.gmra.mxu0 %v602
      %v2628 = vpop.f32.mrf.mxu0
      %v2629 = vadd.f32 0.0, %v2628
      %2630 = vmatmul.f32.gmra.mxu0 %v605
      %v2631 = vpop.f32.mrf.mxu0
      %v2632 = vadd.f32 0.0, %v2631
      %2633 = vmatmul.f32.gmra.mxu0 %v608
      %v2634 = vpop.f32.mrf.mxu0
      %v2635 = vadd.f32 0.0, %v2634
      %2636 = vmatmul.f32.gmra.mxu0 %v611
      %v2637 = vpop.f32.mrf.mxu0
      %v2638 = vadd.f32 0.0, %v2637
      %2639 = vmatmul.f32.gmra.mxu0 %v614
      %v2640 = vpop.f32.mrf.mxu0
      %v2641 = vadd.f32 0.0, %v2640
      %2642 = vmatmul.f32.gmra.mxu0 %v617
      %v2643 = vpop.f32.mrf.mxu0
      %v2644 = vadd.f32 0.0, %v2643
      %2645 = vmatmul.f32.gmra.mxu0 %v620
      %v2646 = vpop.f32.mrf.mxu0
      %v2647 = vadd.f32 0.0, %v2646
      %2648 = vmatmul.f32.gmra.mxu0 %v623
      %v2649 = vpop.f32.mrf.mxu0
      %v2650 = vadd.f32 0.0, %v2649
      %2651 = vmatmul.f32.gmra.mxu0 %v626
      %v2652 = vpop.f32.mrf.mxu0
      %v2653 = vadd.f32 0.0, %v2652
      %2654 = vmatmul.f32.gmra.mxu0 %v629
      %v2655 = vpop.f32.mrf.mxu0
      %v2656 = vadd.f32 0.0, %v2655
      %2657 = vmatmul.f32.gmra.mxu0 %v632
      %v2658 = vpop.f32.mrf.mxu0
      %v2659 = vadd.f32 0.0, %v2658
      %2660 = vdwg.mxu0
      %v2661 = vadd.f32 %v2659, %v250
      %v2662 = vrot.slane %v280, 5
      %v2664 = vadd.f32 %v2661, %v2662
      %v2665 = vxor.u32 %v2664, 2147483648
      %v2666 = vmul.f32 %v2665, 1.442695
      %v2667 = vpow.pop %v2666
      %v2668 = vadd.f32 %v2667, 1.0
      %v2669 = vrcp.pop %v2668
      %v2670 = vmul.f32 %v2668, %v2669
      %v2671 = vsub.f32 1.0, %v2670
      %v2672 = vmul.f32 %v2669, %v2671
      %v2673 = vadd.f32 %v2669, %v2672
      %vm2674 = vweird.f32 %v2668
      %vm2675 = vweird.f32 %v2669
      %vm2676 = vmor %vm2674, %vm2675
      %v2677 = vsel %vm2676, %v2669, %v2673
      %v2678 = vand.u32 2147483647, %v2668
      %vm2679 = vcmp.eq.f32.partialorder %v2678, 8.507059e+37
      %v2680 = vand.u32 %v2668, 2147483648
      %v2681 = vor.u32 1.1754944e-38, %v2680
      %v2682 = vsel %vm2679, %v2681, %v2677
      %v2683 = vmul.f32 1.0, %v2682
      %v2684 = vperm.slane %v2683, 0
      %v2685 = vmul.f32 %v71, %v2684
      %v2686 = vmul.f32 %v76, %v2684
      %v2687 = vmul.f32 %v81, %v2684
      %v2688 = vmul.f32 %v86, %v2684
      %v2689 = vmul.f32 %v91, %v2684
      %v2690 = vmul.f32 %v96, %v2684
      %v2691 = vmul.f32 %v101, %v2684
      %v2692 = vmul.f32 %v106, %v2684
      %v2693 = vmul.f32 %v111, %v2684
      %v2694 = vmul.f32 %v116, %v2684
      %v2695 = vmul.f32 %v121, %v2684
      %v2696 = vmul.f32 %v126, %v2684
      %v2697 = vmul.f32 %v131, %v2684
      %v2698 = vmul.f32 %v136, %v2684
      %v2699 = vmul.f32 %v141, %v2684
      %v2700 = vmul.f32 %v146, %v2684
      %v2701 = vadd.f32 %v2685, %v2611
      %v2702 = vadd.f32 %v2686, %v2614
      %v2703 = vadd.f32 %v2687, %v2617
      %v2704 = vadd.f32 %v2688, %v2620
      %v2705 = vadd.f32 %v2689, %v2623
      %v2706 = vadd.f32 %v2690, %v2626
      %v2707 = vadd.f32 %v2691, %v2629
      %v2708 = vadd.f32 %v2692, %v2632
      %v2709 = vadd.f32 %v2693, %v2635
      %v2710 = vadd.f32 %v2694, %v2638
      %v2711 = vadd.f32 %v2695, %v2641
      %v2712 = vadd.f32 %v2696, %v2644
      %v2713 = vadd.f32 %v2697, %v2647
      %v2714 = vadd.f32 %v2698, %v2650
      %v2715 = vadd.f32 %v2699, %v2653
      %v2716 = vadd.f32 %v2700, %v2656
      %v2717 = vadd.f32 %v2701, %v167
      %v2718 = vadd.f32 %v2702, %v172
      %v2719 = vadd.f32 %v2703, %v177
      %v2720 = vadd.f32 %v2704, %v182
      %v2721 = vadd.f32 %v2705, %v187
      %v2722 = vadd.f32 %v2706, %v192
      %v2723 = vadd.f32 %v2707, %v197
      %v2724 = vadd.f32 %v2708, %v202
      %v2725 = vadd.f32 %v2709, %v207
      %v2726 = vadd.f32 %v2710, %v212
      %v2727 = vadd.f32 %v2711, %v217
      %v2728 = vadd.f32 %v2712, %v222
      %v2729 = vadd.f32 %v2713, %v227
      %v2730 = vadd.f32 %v2714, %v232
      %v2731 = vadd.f32 %v2715, %v237
      %v2732 = vadd.f32 %v2716, %v242
      %v2733 = vxor.u32 %v2717, 2147483648
      %v2734 = vxor.u32 %v2718, 2147483648
      %v2735 = vxor.u32 %v2719, 2147483648
      %v2736 = vxor.u32 %v2720, 2147483648
      %v2737 = vmul.f32 %v2733, 1.442695
      %v2738 = vpow.pop %v2737
      %v2739 = vmul.f32 %v2734, 1.442695
      %v2740 = vpow.pop %v2739
      %v2741 = vmul.f32 %v2735, 1.442695
      %v2742 = vpow.pop %v2741
      %v2743 = vmul.f32 %v2736, 1.442695
      %v2744 = vpow.pop %v2743
      %v2745 = vadd.f32 %v2738, 1.0
      %v2746 = vadd.f32 %v2740, 1.0
      %v2747 = vadd.f32 %v2742, 1.0
      %v2748 = vadd.f32 %v2744, 1.0
      %v2749 = vrcp.pop %v2745
      %v2750 = vmul.f32 %v2745, %v2749
      %v2751 = vsub.f32 1.0, %v2750
      %v2752 = vmul.f32 %v2749, %v2751
      %v2753 = vadd.f32 %v2749, %v2752
      %vm2754 = vweird.f32 %v2745
      %vm2755 = vweird.f32 %v2749
      %vm2756 = vmor %vm2754, %vm2755
      %v2757 = vsel %vm2756, %v2749, %v2753
      %v2758 = vand.u32 2147483647, %v2745
      %vm2759 = vcmp.eq.f32.partialorder %v2758, 8.507059e+37
      %v2760 = vand.u32 %v2745, 2147483648
      %v2761 = vor.u32 1.1754944e-38, %v2760
      %v2762 = vsel %vm2759, %v2761, %v2757
      %v2763 = vmul.f32 1.0, %v2762
      %v2764 = vrcp.pop %v2746
      %v2765 = vmul.f32 %v2746, %v2764
      %v2766 = vsub.f32 1.0, %v2765
      %v2767 = vmul.f32 %v2764, %v2766
      %v2768 = vadd.f32 %v2764, %v2767
      %vm2769 = vweird.f32 %v2746
      %vm2770 = vweird.f32 %v2764
      %vm2771 = vmor %vm2769, %vm2770
      %v2772 = vsel %vm2771, %v2764, %v2768
      %v2773 = vand.u32 2147483647, %v2746
      %vm2774 = vcmp.eq.f32.partialorder %v2773, 8.507059e+37
      %v2775 = vand.u32 %v2746, 2147483648
      %v2776 = vor.u32 1.1754944e-38, %v2775
      %v2777 = vsel %vm2774, %v2776, %v2772
      %v2778 = vmul.f32 1.0, %v2777
      %v2779 = vrcp.pop %v2747
      %v2780 = vmul.f32 %v2747, %v2779
      %v2781 = vsub.f32 1.0, %v2780
      %v2782 = vmul.f32 %v2779, %v2781
      %v2783 = vadd.f32 %v2779, %v2782
      %vm2784 = vweird.f32 %v2747
      %vm2785 = vweird.f32 %v2779
      %vm2786 = vmor %vm2784, %vm2785
      %v2787 = vsel %vm2786, %v2779, %v2783
      %v2788 = vand.u32 2147483647, %v2747
      %vm2789 = vcmp.eq.f32.partialorder %v2788, 8.507059e+37
      %v2790 = vand.u32 %v2747, 2147483648
      %v2791 = vor.u32 1.1754944e-38, %v2790
      %v2792 = vsel %vm2789, %v2791, %v2787
      %v2793 = vmul.f32 1.0, %v2792
      %v2794 = vrcp.pop %v2748
      %v2795 = vmul.f32 %v2748, %v2794
      %v2796 = vsub.f32 1.0, %v2795
      %v2797 = vmul.f32 %v2794, %v2796
      %v2798 = vadd.f32 %v2794, %v2797
      %vm2799 = vweird.f32 %v2748
      %vm2800 = vweird.f32 %v2794
      %vm2801 = vmor %vm2799, %vm2800
      %v2802 = vsel %vm2801, %v2794, %v2798
      %v2803 = vand.u32 2147483647, %v2748
      %vm2804 = vcmp.eq.f32.partialorder %v2803, 8.507059e+37
      %v2805 = vand.u32 %v2748, 2147483648
      %v2806 = vor.u32 1.1754944e-38, %v2805
      %v2807 = vsel %vm2804, %v2806, %v2802
      %v2808 = vmul.f32 1.0, %v2807
      %v2809 = vxor.u32 %v2721, 2147483648
      %v2810 = vxor.u32 %v2722, 2147483648
      %v2811 = vxor.u32 %v2723, 2147483648
      %v2812 = vxor.u32 %v2724, 2147483648
      %v2813 = vmul.f32 %v2809, 1.442695
      %v2814 = vpow.pop %v2813
      %v2815 = vmul.f32 %v2810, 1.442695
      %v2816 = vpow.pop %v2815
      %v2817 = vmul.f32 %v2811, 1.442695
      %v2818 = vpow.pop %v2817
      %v2819 = vmul.f32 %v2812, 1.442695
      %v2820 = vpow.pop %v2819
      %v2821 = vadd.f32 %v2814, 1.0
      %v2822 = vadd.f32 %v2816, 1.0
      %v2823 = vadd.f32 %v2818, 1.0
      %v2824 = vadd.f32 %v2820, 1.0
      %v2825 = vrcp.pop %v2821
      %v2826 = vmul.f32 %v2821, %v2825
      %v2827 = vsub.f32 1.0, %v2826
      %v2828 = vmul.f32 %v2825, %v2827
      %v2829 = vadd.f32 %v2825, %v2828
      %vm2830 = vweird.f32 %v2821
      %vm2831 = vweird.f32 %v2825
      %vm2832 = vmor %vm2830, %vm2831
      %v2833 = vsel %vm2832, %v2825, %v2829
      %v2834 = vand.u32 2147483647, %v2821
      %vm2835 = vcmp.eq.f32.partialorder %v2834, 8.507059e+37
      %v2836 = vand.u32 %v2821, 2147483648
      %v2837 = vor.u32 1.1754944e-38, %v2836
      %v2838 = vsel %vm2835, %v2837, %v2833
      %v2839 = vmul.f32 1.0, %v2838
      %v2840 = vrcp.pop %v2822
      %v2841 = vmul.f32 %v2822, %v2840
      %v2842 = vsub.f32 1.0, %v2841
      %v2843 = vmul.f32 %v2840, %v2842
      %v2844 = vadd.f32 %v2840, %v2843
      %vm2845 = vweird.f32 %v2822
      %vm2846 = vweird.f32 %v2840
      %vm2847 = vmor %vm2845, %vm2846
      %v2848 = vsel %vm2847, %v2840, %v2844
      %v2849 = vand.u32 2147483647, %v2822
      %vm2850 = vcmp.eq.f32.partialorder %v2849, 8.507059e+37
      %v2851 = vand.u32 %v2822, 2147483648
      %v2852 = vor.u32 1.1754944e-38, %v2851
      %v2853 = vsel %vm2850, %v2852, %v2848
      %v2854 = vmul.f32 1.0, %v2853
      %v2855 = vrcp.pop %v2823
      %v2856 = vmul.f32 %v2823, %v2855
      %v2857 = vsub.f32 1.0, %v2856
      %v2858 = vmul.f32 %v2855, %v2857
      %v2859 = vadd.f32 %v2855, %v2858
      %vm2860 = vweird.f32 %v2823
      %vm2861 = vweird.f32 %v2855
      %vm2862 = vmor %vm2860, %vm2861
      %v2863 = vsel %vm2862, %v2855, %v2859
      %v2864 = vand.u32 2147483647, %v2823
      %vm2865 = vcmp.eq.f32.partialorder %v2864, 8.507059e+37
      %v2866 = vand.u32 %v2823, 2147483648
      %v2867 = vor.u32 1.1754944e-38, %v2866
      %v2868 = vsel %vm2865, %v2867, %v2863
      %v2869 = vmul.f32 1.0, %v2868
      %v2870 = vrcp.pop %v2824
      %v2871 = vmul.f32 %v2824, %v2870
      %v2872 = vsub.f32 1.0, %v2871
      %v2873 = vmul.f32 %v2870, %v2872
      %v2874 = vadd.f32 %v2870, %v2873
      %vm2875 = vweird.f32 %v2824
      %vm2876 = vweird.f32 %v2870
      %vm2877 = vmor %vm2875, %vm2876
      %v2878 = vsel %vm2877, %v2870, %v2874
      %v2879 = vand.u32 2147483647, %v2824
      %vm2880 = vcmp.eq.f32.partialorder %v2879, 8.507059e+37
      %v2881 = vand.u32 %v2824, 2147483648
      %v2882 = vor.u32 1.1754944e-38, %v2881
      %v2883 = vsel %vm2880, %v2882, %v2878
      %v2884 = vmul.f32 1.0, %v2883
      %v2885 = vtanh.pop %v2725
      %v2886 = vtanh.pop %v2726
      %v2887 = vtanh.pop %v2727
      %v2888 = vtanh.pop %v2728
      %v2889 = vxor.u32 %v2729, 2147483648
      %v2890 = vxor.u32 %v2730, 2147483648
      %v2891 = vxor.u32 %v2731, 2147483648
      %v2892 = vxor.u32 %v2732, 2147483648
      %v2893 = vmul.f32 %v2889, 1.442695
      %v2894 = vpow.pop %v2893
      %v2895 = vmul.f32 %v2890, 1.442695
      %v2896 = vpow.pop %v2895
      %v2897 = vmul.f32 %v2891, 1.442695
      %v2898 = vpow.pop %v2897
      %v2899 = vmul.f32 %v2892, 1.442695
      %v2900 = vpow.pop %v2899
      %v2901 = vadd.f32 %v2894, 1.0
      %v2902 = vadd.f32 %v2896, 1.0
      %v2903 = vadd.f32 %v2898, 1.0
      %v2904 = vadd.f32 %v2900, 1.0
      %v2905 = vrcp.pop %v2901
      %v2906 = vmul.f32 %v2901, %v2905
      %v2907 = vsub.f32 1.0, %v2906
      %v2908 = vmul.f32 %v2905, %v2907
      %v2909 = vadd.f32 %v2905, %v2908
      %vm2910 = vweird.f32 %v2901
      %vm2911 = vweird.f32 %v2905
      %vm2912 = vmor %vm2910, %vm2911
      %v2913 = vsel %vm2912, %v2905, %v2909
      %v2914 = vand.u32 2147483647, %v2901
      %vm2915 = vcmp.eq.f32.partialorder %v2914, 8.507059e+37
      %v2916 = vand.u32 %v2901, 2147483648
      %v2917 = vor.u32 1.1754944e-38, %v2916
      %v2918 = vsel %vm2915, %v2917, %v2913
      %v2919 = vmul.f32 1.0, %v2918
      %v2920 = vrcp.pop %v2902
      %v2921 = vmul.f32 %v2902, %v2920
      %v2922 = vsub.f32 1.0, %v2921
      %v2923 = vmul.f32 %v2920, %v2922
      %v2924 = vadd.f32 %v2920, %v2923
      %vm2925 = vweird.f32 %v2902
      %vm2926 = vweird.f32 %v2920
      %vm2927 = vmor %vm2925, %vm2926
      %v2928 = vsel %vm2927, %v2920, %v2924
      %v2929 = vand.u32 2147483647, %v2902
      %vm2930 = vcmp.eq.f32.partialorder %v2929, 8.507059e+37
      %v2931 = vand.u32 %v2902, 2147483648
      %v2932 = vor.u32 1.1754944e-38, %v2931
      %v2933 = vsel %vm2930, %v2932, %v2928
      %v2934 = vmul.f32 1.0, %v2933
      %v2935 = vrcp.pop %v2903
      %v2936 = vmul.f32 %v2903, %v2935
      %v2937 = vsub.f32 1.0, %v2936
      %v2938 = vmul.f32 %v2935, %v2937
      %v2939 = vadd.f32 %v2935, %v2938
      %vm2940 = vweird.f32 %v2903
      %vm2941 = vweird.f32 %v2935
      %vm2942 = vmor %vm2940, %vm2941
      %v2943 = vsel %vm2942, %v2935, %v2939
      %v2944 = vand.u32 2147483647, %v2903
      %vm2945 = vcmp.eq.f32.partialorder %v2944, 8.507059e+37
      %v2946 = vand.u32 %v2903, 2147483648
      %v2947 = vor.u32 1.1754944e-38, %v2946
      %v2948 = vsel %vm2945, %v2947, %v2943
      %v2949 = vmul.f32 1.0, %v2948
      %v2950 = vrcp.pop %v2904
      %v2951 = vmul.f32 %v2904, %v2950
      %v2952 = vsub.f32 1.0, %v2951
      %v2953 = vmul.f32 %v2950, %v2952
      %v2954 = vadd.f32 %v2950, %v2953
      %vm2955 = vweird.f32 %v2904
      %vm2956 = vweird.f32 %v2950
      %vm2957 = vmor %vm2955, %vm2956
      %v2958 = vsel %vm2957, %v2950, %v2954
      %v2959 = vand.u32 2147483647, %v2904
      %vm2960 = vcmp.eq.f32.partialorder %v2959, 8.507059e+37
      %v2961 = vand.u32 %v2904, 2147483648
      %v2962 = vor.u32 1.1754944e-38, %v2961
      %v2963 = vsel %vm2960, %v2962, %v2958
      %v2964 = vmul.f32 1.0, %v2963
      %v2965 = vmul.f32 %v2839, %v2581
      %v2966 = vmul.f32 %v2854, %v2582
      %v2967 = vmul.f32 %v2869, %v2583
      %v2968 = vmul.f32 %v2884, %v2584
      %v2969 = vmul.f32 %v2763, %v2885
      %v2970 = vmul.f32 %v2778, %v2886
      %v2971 = vmul.f32 %v2793, %v2887
      %v2972 = vmul.f32 %v2808, %v2888
      %v2973 = vadd.f32 %v2965, %v2969
      %v2974 = vadd.f32 %v2966, %v2970
      %v2975 = vadd.f32 %v2967, %v2971
      %v2976 = vadd.f32 %v2968, %v2972
      %v2977 = vtanh.pop %v2973
      %v2978 = vtanh.pop %v2974
      %v2979 = vtanh.pop %v2975
      %v2980 = vtanh.pop %v2976
      %v2981 = vmul.f32 %v2919, %v2977
      %v2982 = vmul.f32 %v2934, %v2978
      %v2983 = vmul.f32 %v2949, %v2979
      %v2984 = vmul.f32 %v2964, %v2980
      %2985 = vmatpush.msra.mxu0 0.0
      %2986 = vmatpush.msra.mxu0 0.0
      %2987 = vmatpush.msra.mxu0 0.0
      %2988 = vmatpush.msra.mxu0 0.0
      %2989 = vmatpush.msra.mxu0 0.0
      %2990 = vmatpush.msra.mxu0 0.0
      %2991 = vmatpush.msra.mxu0 0.0
      %2992 = vmatpush.msra.mxu0 0.0
      %2993 = vmatpush.msra.mxu0 0.0
      %2994 = vmatpush.msra.mxu0 0.0
      %2995 = vmatpush.msra.mxu0 0.0
      %2996 = vmatpush.msra.mxu0 0.0
      %2997 = vmatpush.msra.mxu0 %v2984
      %2998 = vmatpush.msra.mxu0 %v2983
      %2999 = vmatpush.msra.mxu0 %v2982
      %3000 = vmatpush.msra.mxu0 %v2981
      %3001 = vmatmul.f32.gmra.mxu0 %v584
      %v3002 = vpop.f32.mrf.mxu0
      %v3003 = vadd.f32 0.0, %v3002
      %3004 = vmatmul.f32.gmra.mxu0 %v587
      %v3005 = vpop.f32.mrf.mxu0
      %v3006 = vadd.f32 0.0, %v3005
      %3007 = vmatmul.f32.gmra.mxu0 %v590
      %v3008 = vpop.f32.mrf.mxu0
      %v3009 = vadd.f32 0.0, %v3008
      %3010 = vmatmul.f32.gmra.mxu0 %v593
      %v3011 = vpop.f32.mrf.mxu0
      %v3012 = vadd.f32 0.0, %v3011
      %3013 = vmatmul.f32.gmra.mxu0 %v596
      %v3014 = vpop.f32.mrf.mxu0
      %v3015 = vadd.f32 0.0, %v3014
      %3016 = vmatmul.f32.gmra.mxu0 %v599
      %v3017 = vpop.f32.mrf.mxu0
      %v3018 = vadd.f32 0.0, %v3017
      %3019 = vmatmul.f32.gmra.mxu0 %v602
      %v3020 = vpop.f32.mrf.mxu0
      %v3021 = vadd.f32 0.0, %v3020
      %3022 = vmatmul.f32.gmra.mxu0 %v605
      %v3023 = vpop.f32.mrf.mxu0
      %v3024 = vadd.f32 0.0, %v3023
      %3025 = vmatmul.f32.gmra.mxu0 %v608
      %v3026 = vpop.f32.mrf.mxu0
      %v3027 = vadd.f32 0.0, %v3026
      %3028 = vmatmul.f32.gmra.mxu0 %v611
      %v3029 = vpop.f32.mrf.mxu0
      %v3030 = vadd.f32 0.0, %v3029
      %3031 = vmatmul.f32.gmra.mxu0 %v614
      %v3032 = vpop.f32.mrf.mxu0
      %v3033 = vadd.f32 0.0, %v3032
      %3034 = vmatmul.f32.gmra.mxu0 %v617
      %v3035 = vpop.f32.mrf.mxu0
      %v3036 = vadd.f32 0.0, %v3035
      %3037 = vmatmul.f32.gmra.mxu0 %v620
      %v3038 = vpop.f32.mrf.mxu0
      %v3039 = vadd.f32 0.0, %v3038
      %3040 = vmatmul.f32.gmra.mxu0 %v623
      %v3041 = vpop.f32.mrf.mxu0
      %v3042 = vadd.f32 0.0, %v3041
      %3043 = vmatmul.f32.gmra.mxu0 %v626
      %v3044 = vpop.f32.mrf.mxu0
      %v3045 = vadd.f32 0.0, %v3044
      %3046 = vmatmul.f32.gmra.mxu0 %v629
      %v3047 = vpop.f32.mrf.mxu0
      %v3048 = vadd.f32 0.0, %v3047
      %3049 = vmatmul.f32.gmra.mxu0 %v632
      %v3050 = vpop.f32.mrf.mxu0
      %v3051 = vadd.f32 0.0, %v3050
      %3052 = vdwg.mxu0
      %v3053 = vadd.f32 %v3051, %v250
      %v3054 = vrot.slane %v280, 6
      %v3056 = vadd.f32 %v3053, %v3054
      %v3057 = vxor.u32 %v3056, 2147483648
      %v3058 = vmul.f32 %v3057, 1.442695
      %v3059 = vpow.pop %v3058
      %v3060 = vadd.f32 %v3059, 1.0
      %v3061 = vrcp.pop %v3060
      %v3062 = vmul.f32 %v3060, %v3061
      %v3063 = vsub.f32 1.0, %v3062
      %v3064 = vmul.f32 %v3061, %v3063
      %v3065 = vadd.f32 %v3061, %v3064
      %vm3066 = vweird.f32 %v3060
      %vm3067 = vweird.f32 %v3061
      %vm3068 = vmor %vm3066, %vm3067
      %v3069 = vsel %vm3068, %v3061, %v3065
      %v3070 = vand.u32 2147483647, %v3060
      %vm3071 = vcmp.eq.f32.partialorder %v3070, 8.507059e+37
      %v3072 = vand.u32 %v3060, 2147483648
      %v3073 = vor.u32 1.1754944e-38, %v3072
      %v3074 = vsel %vm3071, %v3073, %v3069
      %v3075 = vmul.f32 1.0, %v3074
      %v3076 = vperm.slane %v3075, 0
      %v3077 = vmul.f32 %v71, %v3076
      %v3078 = vmul.f32 %v76, %v3076
      %v3079 = vmul.f32 %v81, %v3076
      %v3080 = vmul.f32 %v86, %v3076
      %v3081 = vmul.f32 %v91, %v3076
      %v3082 = vmul.f32 %v96, %v3076
      %v3083 = vmul.f32 %v101, %v3076
      %v3084 = vmul.f32 %v106, %v3076
      %v3085 = vmul.f32 %v111, %v3076
      %v3086 = vmul.f32 %v116, %v3076
      %v3087 = vmul.f32 %v121, %v3076
      %v3088 = vmul.f32 %v126, %v3076
      %v3089 = vmul.f32 %v131, %v3076
      %v3090 = vmul.f32 %v136, %v3076
      %v3091 = vmul.f32 %v141, %v3076
      %v3092 = vmul.f32 %v146, %v3076
      %v3093 = vadd.f32 %v3077, %v3003
      %v3094 = vadd.f32 %v3078, %v3006
      %v3095 = vadd.f32 %v3079, %v3009
      %v3096 = vadd.f32 %v3080, %v3012
      %v3097 = vadd.f32 %v3081, %v3015
      %v3098 = vadd.f32 %v3082, %v3018
      %v3099 = vadd.f32 %v3083, %v3021
      %v3100 = vadd.f32 %v3084, %v3024
      %v3101 = vadd.f32 %v3085, %v3027
      %v3102 = vadd.f32 %v3086, %v3030
      %v3103 = vadd.f32 %v3087, %v3033
      %v3104 = vadd.f32 %v3088, %v3036
      %v3105 = vadd.f32 %v3089, %v3039
      %v3106 = vadd.f32 %v3090, %v3042
      %v3107 = vadd.f32 %v3091, %v3045
      %v3108 = vadd.f32 %v3092, %v3048
      %v3109 = vadd.f32 %v3093, %v167
      %v3110 = vadd.f32 %v3094, %v172
      %v3111 = vadd.f32 %v3095, %v177
      %v3112 = vadd.f32 %v3096, %v182
      %v3113 = vadd.f32 %v3097, %v187
      %v3114 = vadd.f32 %v3098, %v192
      %v3115 = vadd.f32 %v3099, %v197
      %v3116 = vadd.f32 %v3100, %v202
      %v3117 = vadd.f32 %v3101, %v207
      %v3118 = vadd.f32 %v3102, %v212
      %v3119 = vadd.f32 %v3103, %v217
      %v3120 = vadd.f32 %v3104, %v222
      %v3121 = vadd.f32 %v3105, %v227
      %v3122 = vadd.f32 %v3106, %v232
      %v3123 = vadd.f32 %v3107, %v237
      %v3124 = vadd.f32 %v3108, %v242
      %v3125 = vxor.u32 %v3109, 2147483648
      %v3126 = vxor.u32 %v3110, 2147483648
      %v3127 = vxor.u32 %v3111, 2147483648
      %v3128 = vxor.u32 %v3112, 2147483648
      %v3129 = vmul.f32 %v3125, 1.442695
      %v3130 = vpow.pop %v3129
      %v3131 = vmul.f32 %v3126, 1.442695
      %v3132 = vpow.pop %v3131
      %v3133 = vmul.f32 %v3127, 1.442695
      %v3134 = vpow.pop %v3133
      %v3135 = vmul.f32 %v3128, 1.442695
      %v3136 = vpow.pop %v3135
      %v3137 = vadd.f32 %v3130, 1.0
      %v3138 = vadd.f32 %v3132, 1.0
      %v3139 = vadd.f32 %v3134, 1.0
      %v3140 = vadd.f32 %v3136, 1.0
      %v3141 = vrcp.pop %v3137
      %v3142 = vmul.f32 %v3137, %v3141
      %v3143 = vsub.f32 1.0, %v3142
      %v3144 = vmul.f32 %v3141, %v3143
      %v3145 = vadd.f32 %v3141, %v3144
      %vm3146 = vweird.f32 %v3137
      %vm3147 = vweird.f32 %v3141
      %vm3148 = vmor %vm3146, %vm3147
      %v3149 = vsel %vm3148, %v3141, %v3145
      %v3150 = vand.u32 2147483647, %v3137
      %vm3151 = vcmp.eq.f32.partialorder %v3150, 8.507059e+37
      %v3152 = vand.u32 %v3137, 2147483648
      %v3153 = vor.u32 1.1754944e-38, %v3152
      %v3154 = vsel %vm3151, %v3153, %v3149
      %v3155 = vmul.f32 1.0, %v3154
      %v3156 = vrcp.pop %v3138
      %v3157 = vmul.f32 %v3138, %v3156
      %v3158 = vsub.f32 1.0, %v3157
      %v3159 = vmul.f32 %v3156, %v3158
      %v3160 = vadd.f32 %v3156, %v3159
      %vm3161 = vweird.f32 %v3138
      %vm3162 = vweird.f32 %v3156
      %vm3163 = vmor %vm3161, %vm3162
      %v3164 = vsel %vm3163, %v3156, %v3160
      %v3165 = vand.u32 2147483647, %v3138
      %vm3166 = vcmp.eq.f32.partialorder %v3165, 8.507059e+37
      %v3167 = vand.u32 %v3138, 2147483648
      %v3168 = vor.u32 1.1754944e-38, %v3167
      %v3169 = vsel %vm3166, %v3168, %v3164
      %v3170 = vmul.f32 1.0, %v3169
      %v3171 = vrcp.pop %v3139
      %v3172 = vmul.f32 %v3139, %v3171
      %v3173 = vsub.f32 1.0, %v3172
      %v3174 = vmul.f32 %v3171, %v3173
      %v3175 = vadd.f32 %v3171, %v3174
      %vm3176 = vweird.f32 %v3139
      %vm3177 = vweird.f32 %v3171
      %vm3178 = vmor %vm3176, %vm3177
      %v3179 = vsel %vm3178, %v3171, %v3175
      %v3180 = vand.u32 2147483647, %v3139
      %vm3181 = vcmp.eq.f32.partialorder %v3180, 8.507059e+37
      %v3182 = vand.u32 %v3139, 2147483648
      %v3183 = vor.u32 1.1754944e-38, %v3182
      %v3184 = vsel %vm3181, %v3183, %v3179
      %v3185 = vmul.f32 1.0, %v3184
      %v3186 = vrcp.pop %v3140
      %v3187 = vmul.f32 %v3140, %v3186
      %v3188 = vsub.f32 1.0, %v3187
      %v3189 = vmul.f32 %v3186, %v3188
      %v3190 = vadd.f32 %v3186, %v3189
      %vm3191 = vweird.f32 %v3140
      %vm3192 = vweird.f32 %v3186
      %vm3193 = vmor %vm3191, %vm3192
      %v3194 = vsel %vm3193, %v3186, %v3190
      %v3195 = vand.u32 2147483647, %v3140
      %vm3196 = vcmp.eq.f32.partialorder %v3195, 8.507059e+37
      %v3197 = vand.u32 %v3140, 2147483648
      %v3198 = vor.u32 1.1754944e-38, %v3197
      %v3199 = vsel %vm3196, %v3198, %v3194
      %v3200 = vmul.f32 1.0, %v3199
      %v3201 = vxor.u32 %v3113, 2147483648
      %v3202 = vxor.u32 %v3114, 2147483648
      %v3203 = vxor.u32 %v3115, 2147483648
      %v3204 = vxor.u32 %v3116, 2147483648
      %v3205 = vmul.f32 %v3201, 1.442695
      %v3206 = vpow.pop %v3205
      %v3207 = vmul.f32 %v3202, 1.442695
      %v3208 = vpow.pop %v3207
      %v3209 = vmul.f32 %v3203, 1.442695
      %v3210 = vpow.pop %v3209
      %v3211 = vmul.f32 %v3204, 1.442695
      %v3212 = vpow.pop %v3211
      %v3213 = vadd.f32 %v3206, 1.0
      %v3214 = vadd.f32 %v3208, 1.0
      %v3215 = vadd.f32 %v3210, 1.0
      %v3216 = vadd.f32 %v3212, 1.0
      %v3217 = vrcp.pop %v3213
      %v3218 = vmul.f32 %v3213, %v3217
      %v3219 = vsub.f32 1.0, %v3218
      %v3220 = vmul.f32 %v3217, %v3219
      %v3221 = vadd.f32 %v3217, %v3220
      %vm3222 = vweird.f32 %v3213
      %vm3223 = vweird.f32 %v3217
      %vm3224 = vmor %vm3222, %vm3223
      %v3225 = vsel %vm3224, %v3217, %v3221
      %v3226 = vand.u32 2147483647, %v3213
      %vm3227 = vcmp.eq.f32.partialorder %v3226, 8.507059e+37
      %v3228 = vand.u32 %v3213, 2147483648
      %v3229 = vor.u32 1.1754944e-38, %v3228
      %v3230 = vsel %vm3227, %v3229, %v3225
      %v3231 = vmul.f32 1.0, %v3230
      %v3232 = vrcp.pop %v3214
      %v3233 = vmul.f32 %v3214, %v3232
      %v3234 = vsub.f32 1.0, %v3233
      %v3235 = vmul.f32 %v3232, %v3234
      %v3236 = vadd.f32 %v3232, %v3235
      %vm3237 = vweird.f32 %v3214
      %vm3238 = vweird.f32 %v3232
      %vm3239 = vmor %vm3237, %vm3238
      %v3240 = vsel %vm3239, %v3232, %v3236
      %v3241 = vand.u32 2147483647, %v3214
      %vm3242 = vcmp.eq.f32.partialorder %v3241, 8.507059e+37
      %v3243 = vand.u32 %v3214, 2147483648
      %v3244 = vor.u32 1.1754944e-38, %v3243
      %v3245 = vsel %vm3242, %v3244, %v3240
      %v3246 = vmul.f32 1.0, %v3245
      %v3247 = vrcp.pop %v3215
      %v3248 = vmul.f32 %v3215, %v3247
      %v3249 = vsub.f32 1.0, %v3248
      %v3250 = vmul.f32 %v3247, %v3249
      %v3251 = vadd.f32 %v3247, %v3250
      %vm3252 = vweird.f32 %v3215
      %vm3253 = vweird.f32 %v3247
      %vm3254 = vmor %vm3252, %vm3253
      %v3255 = vsel %vm3254, %v3247, %v3251
      %v3256 = vand.u32 2147483647, %v3215
      %vm3257 = vcmp.eq.f32.partialorder %v3256, 8.507059e+37
      %v3258 = vand.u32 %v3215, 2147483648
      %v3259 = vor.u32 1.1754944e-38, %v3258
      %v3260 = vsel %vm3257, %v3259, %v3255
      %v3261 = vmul.f32 1.0, %v3260
      %v3262 = vrcp.pop %v3216
      %v3263 = vmul.f32 %v3216, %v3262
      %v3264 = vsub.f32 1.0, %v3263
      %v3265 = vmul.f32 %v3262, %v3264
      %v3266 = vadd.f32 %v3262, %v3265
      %vm3267 = vweird.f32 %v3216
      %vm3268 = vweird.f32 %v3262
      %vm3269 = vmor %vm3267, %vm3268
      %v3270 = vsel %vm3269, %v3262, %v3266
      %v3271 = vand.u32 2147483647, %v3216
      %vm3272 = vcmp.eq.f32.partialorder %v3271, 8.507059e+37
      %v3273 = vand.u32 %v3216, 2147483648
      %v3274 = vor.u32 1.1754944e-38, %v3273
      %v3275 = vsel %vm3272, %v3274, %v3270
      %v3276 = vmul.f32 1.0, %v3275
      %v3277 = vtanh.pop %v3117
      %v3278 = vtanh.pop %v3118
      %v3279 = vtanh.pop %v3119
      %v3280 = vtanh.pop %v3120
      %v3281 = vxor.u32 %v3121, 2147483648
      %v3282 = vxor.u32 %v3122, 2147483648
      %v3283 = vxor.u32 %v3123, 2147483648
      %v3284 = vxor.u32 %v3124, 2147483648
      %v3285 = vmul.f32 %v3281, 1.442695
      %v3286 = vpow.pop %v3285
      %v3287 = vmul.f32 %v3282, 1.442695
      %v3288 = vpow.pop %v3287
      %v3289 = vmul.f32 %v3283, 1.442695
      %v3290 = vpow.pop %v3289
      %v3291 = vmul.f32 %v3284, 1.442695
      %v3292 = vpow.pop %v3291
      %v3293 = vadd.f32 %v3286, 1.0
      %v3294 = vadd.f32 %v3288, 1.0
      %v3295 = vadd.f32 %v3290, 1.0
      %v3296 = vadd.f32 %v3292, 1.0
      %v3297 = vrcp.pop %v3293
      %v3298 = vmul.f32 %v3293, %v3297
      %v3299 = vsub.f32 1.0, %v3298
      %v3300 = vmul.f32 %v3297, %v3299
      %v3301 = vadd.f32 %v3297, %v3300
      %vm3302 = vweird.f32 %v3293
      %vm3303 = vweird.f32 %v3297
      %vm3304 = vmor %vm3302, %vm3303
      %v3305 = vsel %vm3304, %v3297, %v3301
      %v3306 = vand.u32 2147483647, %v3293
      %vm3307 = vcmp.eq.f32.partialorder %v3306, 8.507059e+37
      %v3308 = vand.u32 %v3293, 2147483648
      %v3309 = vor.u32 1.1754944e-38, %v3308
      %v3310 = vsel %vm3307, %v3309, %v3305
      %v3311 = vmul.f32 1.0, %v3310
      %v3312 = vrcp.pop %v3294
      %v3313 = vmul.f32 %v3294, %v3312
      %v3314 = vsub.f32 1.0, %v3313
      %v3315 = vmul.f32 %v3312, %v3314
      %v3316 = vadd.f32 %v3312, %v3315
      %vm3317 = vweird.f32 %v3294
      %vm3318 = vweird.f32 %v3312
      %vm3319 = vmor %vm3317, %vm3318
      %v3320 = vsel %vm3319, %v3312, %v3316
      %v3321 = vand.u32 2147483647, %v3294
      %vm3322 = vcmp.eq.f32.partialorder %v3321, 8.507059e+37
      %v3323 = vand.u32 %v3294, 2147483648
      %v3324 = vor.u32 1.1754944e-38, %v3323
      %v3325 = vsel %vm3322, %v3324, %v3320
      %v3326 = vmul.f32 1.0, %v3325
      %v3327 = vrcp.pop %v3295
      %v3328 = vmul.f32 %v3295, %v3327
      %v3329 = vsub.f32 1.0, %v3328
      %v3330 = vmul.f32 %v3327, %v3329
      %v3331 = vadd.f32 %v3327, %v3330
      %vm3332 = vweird.f32 %v3295
      %vm3333 = vweird.f32 %v3327
      %vm3334 = vmor %vm3332, %vm3333
      %v3335 = vsel %vm3334, %v3327, %v3331
      %v3336 = vand.u32 2147483647, %v3295
      %vm3337 = vcmp.eq.f32.partialorder %v3336, 8.507059e+37
      %v3338 = vand.u32 %v3295, 2147483648
      %v3339 = vor.u32 1.1754944e-38, %v3338
      %v3340 = vsel %vm3337, %v3339, %v3335
      %v3341 = vmul.f32 1.0, %v3340
      %v3342 = vrcp.pop %v3296
      %v3343 = vmul.f32 %v3296, %v3342
      %v3344 = vsub.f32 1.0, %v3343
      %v3345 = vmul.f32 %v3342, %v3344
      %v3346 = vadd.f32 %v3342, %v3345
      %vm3347 = vweird.f32 %v3296
      %vm3348 = vweird.f32 %v3342
      %vm3349 = vmor %vm3347, %vm3348
      %v3350 = vsel %vm3349, %v3342, %v3346
      %v3351 = vand.u32 2147483647, %v3296
      %vm3352 = vcmp.eq.f32.partialorder %v3351, 8.507059e+37
      %v3353 = vand.u32 %v3296, 2147483648
      %v3354 = vor.u32 1.1754944e-38, %v3353
      %v3355 = vsel %vm3352, %v3354, %v3350
      %v3356 = vmul.f32 1.0, %v3355
      %v3357 = vmul.f32 %v3231, %v2973
      %v3358 = vmul.f32 %v3246, %v2974
      %v3359 = vmul.f32 %v3261, %v2975
      %v3360 = vmul.f32 %v3276, %v2976
      %v3361 = vmul.f32 %v3155, %v3277
      %v3362 = vmul.f32 %v3170, %v3278
      %v3363 = vmul.f32 %v3185, %v3279
      %v3364 = vmul.f32 %v3200, %v3280
      %v3365 = vadd.f32 %v3357, %v3361
      %v3366 = vadd.f32 %v3358, %v3362
      %v3367 = vadd.f32 %v3359, %v3363
      %v3368 = vadd.f32 %v3360, %v3364
      %v3369 = vtanh.pop %v3365
      %v3370 = vtanh.pop %v3366
      %v3371 = vtanh.pop %v3367
      %v3372 = vtanh.pop %v3368
      %v3373 = vmul.f32 %v3311, %v3369
      %v3374 = vmul.f32 %v3326, %v3370
      %v3375 = vmul.f32 %v3341, %v3371
      %v3376 = vmul.f32 %v3356, %v3372
      %3377 = vmatpush.msra.mxu0 0.0
      %3378 = vmatpush.msra.mxu0 0.0
      %3379 = vmatpush.msra.mxu0 0.0
      %3380 = vmatpush.msra.mxu0 0.0
      %3381 = vmatpush.msra.mxu0 0.0
      %3382 = vmatpush.msra.mxu0 0.0
      %3383 = vmatpush.msra.mxu0 0.0
      %3384 = vmatpush.msra.mxu0 0.0
      %3385 = vmatpush.msra.mxu0 0.0
      %3386 = vmatpush.msra.mxu0 0.0
      %3387 = vmatpush.msra.mxu0 0.0
      %3388 = vmatpush.msra.mxu0 0.0
      %3389 = vmatpush.msra.mxu0 %v3376
      %3390 = vmatpush.msra.mxu0 %v3375
      %3391 = vmatpush.msra.mxu0 %v3374
      %3392 = vmatpush.msra.mxu0 %v3373
      %3393 = vmatmul.f32.gmra.mxu0 %v584
      %v3394 = vpop.f32.mrf.mxu0
      %v3395 = vadd.f32 0.0, %v3394
      %3396 = vmatmul.f32.gmra.mxu0 %v587
      %v3397 = vpop.f32.mrf.mxu0
      %v3398 = vadd.f32 0.0, %v3397
      %3399 = vmatmul.f32.gmra.mxu0 %v590
      %v3400 = vpop.f32.mrf.mxu0
      %v3401 = vadd.f32 0.0, %v3400
      %3402 = vmatmul.f32.gmra.mxu0 %v593
      %v3403 = vpop.f32.mrf.mxu0
      %v3404 = vadd.f32 0.0, %v3403
      %3405 = vmatmul.f32.gmra.mxu0 %v596
      %v3406 = vpop.f32.mrf.mxu0
      %v3407 = vadd.f32 0.0, %v3406
      %3408 = vmatmul.f32.gmra.mxu0 %v599
      %v3409 = vpop.f32.mrf.mxu0
      %v3410 = vadd.f32 0.0, %v3409
      %3411 = vmatmul.f32.gmra.mxu0 %v602
      %v3412 = vpop.f32.mrf.mxu0
      %v3413 = vadd.f32 0.0, %v3412
      %3414 = vmatmul.f32.gmra.mxu0 %v605
      %v3415 = vpop.f32.mrf.mxu0
      %v3416 = vadd.f32 0.0, %v3415
      %3417 = vmatmul.f32.gmra.mxu0 %v608
      %v3418 = vpop.f32.mrf.mxu0
      %v3419 = vadd.f32 0.0, %v3418
      %3420 = vmatmul.f32.gmra.mxu0 %v611
      %v3421 = vpop.f32.mrf.mxu0
      %v3422 = vadd.f32 0.0, %v3421
      %3423 = vmatmul.f32.gmra.mxu0 %v614
      %v3424 = vpop.f32.mrf.mxu0
      %v3425 = vadd.f32 0.0, %v3424
      %3426 = vmatmul.f32.gmra.mxu0 %v617
      %v3427 = vpop.f32.mrf.mxu0
      %v3428 = vadd.f32 0.0, %v3427
      %3429 = vmatmul.f32.gmra.mxu0 %v620
      %v3430 = vpop.f32.mrf.mxu0
      %v3431 = vadd.f32 0.0, %v3430
      %3432 = vmatmul.f32.gmra.mxu0 %v623
      %v3433 = vpop.f32.mrf.mxu0
      %v3434 = vadd.f32 0.0, %v3433
      %3435 = vmatmul.f32.gmra.mxu0 %v626
      %v3436 = vpop.f32.mrf.mxu0
      %v3437 = vadd.f32 0.0, %v3436
      %3438 = vmatmul.f32.gmra.mxu0 %v629
      %v3439 = vpop.f32.mrf.mxu0
      %v3440 = vadd.f32 0.0, %v3439
      %3441 = vmatmul.f32.gmra.mxu0 %v632
      %v3442 = vpop.f32.mrf.mxu0
      %v3443 = vadd.f32 0.0, %v3442
      %3444 = vdwg.mxu0
      %v3445 = vadd.f32 %v3443, %v250
      %v3446 = vrot.slane %v280, 7
      %v3448 = vadd.f32 %v3445, %v3446
      %v3449 = vxor.u32 %v3448, 2147483648
      %v3450 = vmul.f32 %v3449, 1.442695
      %v3451 = vpow.pop %v3450
      %v3452 = vadd.f32 %v3451, 1.0
      %v3453 = vrcp.pop %v3452
      %v3454 = vmul.f32 %v3452, %v3453
      %v3455 = vsub.f32 1.0, %v3454
      %v3456 = vmul.f32 %v3453, %v3455
      %v3457 = vadd.f32 %v3453, %v3456
      %vm3458 = vweird.f32 %v3452
      %vm3459 = vweird.f32 %v3453
      %vm3460 = vmor %vm3458, %vm3459
      %v3461 = vsel %vm3460, %v3453, %v3457
      %v3462 = vand.u32 2147483647, %v3452
      %vm3463 = vcmp.eq.f32.partialorder %v3462, 8.507059e+37
      %v3464 = vand.u32 %v3452, 2147483648
      %v3465 = vor.u32 1.1754944e-38, %v3464
      %v3466 = vsel %vm3463, %v3465, %v3461
      %v3467 = vmul.f32 1.0, %v3466
      %v3469 = vrot.slane %v1115, 7
      %v3472 = vrot.slane %v1507, 6
      %v3475 = vrot.slane %v1899, 5
      %v3478 = vrot.slane %v2291, 4
      %v3481 = vrot.slane %v2683, 3
      %v3484 = vrot.slane %v3075, 2
      %v3487 = vrot.slane %v3467, 1
      %vm3489 = vcmask 1040384
      %v3490 = vsel %vm3489, %v722, %v3469
      %vm3491 = vcmask 1041408
      %v3492 = vsel %vm3491, %v3490, %v3472
      %vm3493 = vcmask 1042432
      %v3494 = vsel %vm3493, %v3492, %v3475
      %vm3495 = vcmask 1043456
      %v3496 = vsel %vm3495, %v3494, %v3478
      %vm3497 = vcmask 1044480
      %v3498 = vsel %vm3497, %v3496, %v3481
      %vm3499 = vcmask 1045504
      %v3500 = vsel %vm3499, %v3498, %v3484
      %vm3501 = vcmask 1046528
      %v3502 = vsel %vm3501, %v3500, %v3487
      %s3503 = scalar_lea.vmem [#allocation3], %s278
      %3504 = vst [vmem:[%s3503] sm:$0xff] %v3502
    $region38: #{tpu_custom_call.1} parent=1 // loop_footer
      %s256 = sadd.s32 1, %s252
    $region39: #{tpu_custom_call.1} parent=1 // loop_footer_branch
      %251 = sbr.rel target = $region35
    $region40: #{tpu_custom_call.1} parent=1 // loop_exit
      _
    %v3505 = vld [vmem:[#allocation3] sm:$0xff]
    %v3506 = vld [vmem:[#allocation3 + $0x8] sm:$0xff]
    %v3507 = vld [vmem:[#allocation3 + $0x10] sm:$0xff]
    %v3508 = vld [vmem:[#allocation3 + $0x18] sm:$0xff]
    %v3509 = vld [vmem:[#allocation3 + $0x20] sm:$0xff]
    %v3510 = vld [vmem:[#allocation3 + $0x28] sm:$0xff]
    %v3511 = vld [vmem:[#allocation3 + $0x30] sm:$0xff]
    %v3512 = vld [vmem:[#allocation3 + $0x38] sm:$0xff]
    %v3513 = vld [vmem:[%s4] sm:$0xff]
    %v3514 = vld [vmem:[%s4 + $0x8] sm:$0xff]
    %v3515 = vld [vmem:[%s4 + $0x10] sm:$0xff]
    %v3516 = vld [vmem:[%s4 + $0x18] sm:$0xff]
    %v3517 = vld [vmem:[%s4 + $0x20] sm:$0xff]
    %v3518 = vld [vmem:[%s4 + $0x28] sm:$0xff]
    %v3519 = vld [vmem:[%s4 + $0x30] sm:$0xff]
    %v3520 = vld [vmem:[%s4 + $0x38] sm:$0xff]
    %v3521 = vld [vmem:[%s4 + $0x40] sm:$0xff]
    %v3522 = vld [vmem:[%s4 + $0x48] sm:$0xff]
    %v3523 = vld [vmem:[%s4 + $0x50] sm:$0xff]
    %v3524 = vld [vmem:[%s4 + $0x58] sm:$0xff]
    %v3525 = vld [vmem:[%s4 + $0x60] sm:$0xff]
    %v3526 = vld [vmem:[%s4 + $0x68] sm:$0xff]
    %v3527 = vld [vmem:[%s4 + $0x70] sm:$0xff]
    %v3528 = vld [vmem:[%s4 + $0x78] sm:$0xff]
    %v3529 = vld [vmem:[%s5] sm:$0xff]
    %v3530 = vld [vmem:[%s5 + $0x8] sm:$0xff]
    %v3531 = vld [vmem:[%s5 + $0x10] sm:$0xff]
    %v3532 = vld [vmem:[%s5 + $0x18] sm:$0xff]
    %v3533 = vld [vmem:[%s5 + $0x20] sm:$0xff]
    %v3534 = vld [vmem:[%s5 + $0x28] sm:$0xff]
    %v3535 = vld [vmem:[%s5 + $0x30] sm:$0xff]
    %v3536 = vld [vmem:[%s5 + $0x38] sm:$0xff]
    %v3537 = vld [vmem:[%s5 + $0x40] sm:$0xff]
    %v3538 = vld [vmem:[%s5 + $0x48] sm:$0xff]
    %v3539 = vld [vmem:[%s5 + $0x50] sm:$0xff]
    %v3540 = vld [vmem:[%s5 + $0x58] sm:$0xff]
    %v3541 = vld [vmem:[%s5 + $0x60] sm:$0xff]
    %v3542 = vld [vmem:[%s5 + $0x68] sm:$0xff]
    %v3543 = vld [vmem:[%s5 + $0x70] sm:$0xff]
    %v3544 = vld [vmem:[%s5 + $0x78] sm:$0xff]
    %3546 = vset.pattern.permute.xlu0 0
    %3547 = vperm.xlu0 %3546, %v3529
    %v3548 = vpop.permute.xlu0 %3547
    %3551 = vset.pattern.permute.xlu0 0
    %3552 = vperm.xlu0 %3551, %v3530
    %v3553 = vpop.permute.xlu0 %3552
    %3556 = vset.pattern.permute.xlu0 0
    %3557 = vperm.xlu0 %3556, %v3531
    %v3558 = vpop.permute.xlu0 %3557
    %3561 = vset.pattern.permute.xlu0 0
    %3562 = vperm.xlu0 %3561, %v3532
    %v3563 = vpop.permute.xlu0 %3562
    %3566 = vset.pattern.permute.xlu0 0
    %3567 = vperm.xlu0 %3566, %v3533
    %v3568 = vpop.permute.xlu0 %3567
    %3571 = vset.pattern.permute.xlu0 0
    %3572 = vperm.xlu0 %3571, %v3534
    %v3573 = vpop.permute.xlu0 %3572
    %3576 = vset.pattern.permute.xlu0 0
    %3577 = vperm.xlu0 %3576, %v3535
    %v3578 = vpop.permute.xlu0 %3577
    %3581 = vset.pattern.permute.xlu0 0
    %3582 = vperm.xlu0 %3581, %v3536
    %v3583 = vpop.permute.xlu0 %3582
    %3586 = vset.pattern.permute.xlu0 0
    %3587 = vperm.xlu0 %3586, %v3537
    %v3588 = vpop.permute.xlu0 %3587
    %3591 = vset.pattern.permute.xlu0 0
    %3592 = vperm.xlu0 %3591, %v3538
    %v3593 = vpop.permute.xlu0 %3592
    %3596 = vset.pattern.permute.xlu0 0
    %3597 = vperm.xlu0 %3596, %v3539
    %v3598 = vpop.permute.xlu0 %3597
    %3601 = vset.pattern.permute.xlu0 0
    %3602 = vperm.xlu0 %3601, %v3540
    %v3603 = vpop.permute.xlu0 %3602
    %3606 = vset.pattern.permute.xlu0 0
    %3607 = vperm.xlu0 %3606, %v3541
    %v3608 = vpop.permute.xlu0 %3607
    %3611 = vset.pattern.permute.xlu0 0
    %3612 = vperm.xlu0 %3611, %v3542
    %v3613 = vpop.permute.xlu0 %3612
    %3616 = vset.pattern.permute.xlu0 0
    %3617 = vperm.xlu0 %3616, %v3543
    %v3618 = vpop.permute.xlu0 %3617
    %3621 = vset.pattern.permute.xlu0 0
    %3622 = vperm.xlu0 %3621, %v3544
    %v3623 = vpop.permute.xlu0 %3622
    %vm3625 = vcmask 523264
    %v3627 = vsel %vm3625, %v3513, 0
    %v3630 = vsel %vm3625, %v3514, 0
    %v3633 = vsel %vm3625, %v3515, 0
    %v3636 = vsel %vm3625, %v3516, 0
    %v3639 = vsel %vm3625, %v3517, 0
    %v3642 = vsel %vm3625, %v3518, 0
    %v3645 = vsel %vm3625, %v3519, 0
    %v3648 = vsel %vm3625, %v3520, 0
    %v3651 = vsel %vm3625, %v3521, 0
    %v3654 = vsel %vm3625, %v3522, 0
    %v3657 = vsel %vm3625, %v3523, 0
    %v3660 = vsel %vm3625, %v3524, 0
    %v3663 = vsel %vm3625, %v3525, 0
    %v3666 = vsel %vm3625, %v3526, 0
    %v3669 = vsel %vm3625, %v3527, 0
    %v3672 = vsel %vm3625, %v3528, 0
    %3674 = vmatpush.msra.mxu0 0.0
    %3675 = vmatpush.msra.mxu0 0.0
    %3676 = vmatpush.msra.mxu0 0.0
    %3677 = vmatpush.msra.mxu0 0.0
    %3678 = vmatpush.msra.mxu0 0.0
    %3679 = vmatpush.msra.mxu0 0.0
    %3680 = vmatpush.msra.mxu0 0.0
    %3681 = vmatpush.msra.mxu0 0.0
    %3682 = vmatpush.msra.mxu0 %v3512
    %3683 = vmatpush.msra.mxu0 %v3511
    %3684 = vmatpush.msra.mxu0 %v3510
    %3685 = vmatpush.msra.mxu0 %v3509
    %3686 = vmatpush.msra.mxu0 %v3508
    %3687 = vmatpush.msra.mxu0 %v3507
    %3688 = vmatpush.msra.mxu0 %v3506
    %3689 = vmatpush.msra.mxu0 %v3505
    %3690 = vmatmul.f32.gmra.mxu0 %v3627
    %v3691 = vpop.f32.mrf.mxu0
    %v3692 = vadd.f32 %v3548, %v3691
    %3693 = vmatmul.f32.gmra.mxu0 %v3630
    %v3694 = vpop.f32.mrf.mxu0
    %v3695 = vadd.f32 %v3553, %v3694
    %3696 = vmatmul.f32.gmra.mxu0 %v3633
    %v3697 = vpop.f32.mrf.mxu0
    %v3698 = vadd.f32 %v3558, %v3697
    %3699 = vmatmul.f32.gmra.mxu0 %v3636
    %v3700 = vpop.f32.mrf.mxu0
    %v3701 = vadd.f32 %v3563, %v3700
    %3702 = vmatmul.f32.gmra.mxu0 %v3639
    %v3703 = vpop.f32.mrf.mxu0
    %v3704 = vadd.f32 %v3568, %v3703
    %3705 = vmatmul.f32.gmra.mxu0 %v3642
    %v3706 = vpop.f32.mrf.mxu0
    %v3707 = vadd.f32 %v3573, %v3706
    %3708 = vmatmul.f32.gmra.mxu0 %v3645
    %v3709 = vpop.f32.mrf.mxu0
    %v3710 = vadd.f32 %v3578, %v3709
    %3711 = vmatmul.f32.gmra.mxu0 %v3648
    %v3712 = vpop.f32.mrf.mxu0
    %v3713 = vadd.f32 %v3583, %v3712
    %3714 = vmatmul.f32.gmra.mxu0 %v3651
    %v3715 = vpop.f32.mrf.mxu0
    %v3716 = vadd.f32 %v3588, %v3715
    %3717 = vmatmul.f32.gmra.mxu0 %v3654
    %v3718 = vpop.f32.mrf.mxu0
    %v3719 = vadd.f32 %v3593, %v3718
    %3720 = vmatmul.f32.gmra.mxu0 %v3657
    %v3721 = vpop.f32.mrf.mxu0
    %v3722 = vadd.f32 %v3598, %v3721
    %3723 = vmatmul.f32.gmra.mxu0 %v3660
    %v3724 = vpop.f32.mrf.mxu0
    %v3725 = vadd.f32 %v3603, %v3724
    %3726 = vmatmul.f32.gmra.mxu0 %v3663
    %v3727 = vpop.f32.mrf.mxu0
    %v3728 = vadd.f32 %v3608, %v3727
    %3729 = vmatmul.f32.gmra.mxu0 %v3666
    %v3730 = vpop.f32.mrf.mxu0
    %v3731 = vadd.f32 %v3613, %v3730
    %3732 = vmatmul.f32.gmra.mxu0 %v3669
    %v3733 = vpop.f32.mrf.mxu0
    %v3734 = vadd.f32 %v3618, %v3733
    %3735 = vmatmul.f32.gmra.mxu0 %v3672
    %v3736 = vpop.f32.mrf.mxu0
    %v3737 = vadd.f32 %v3623, %v3736
    %3738 = vdwg.mxu0
    %v3739 = vmul.f32 %v3716, 1.442695
    %v3740 = vpow.pop %v3739
    %v3741 = vmul.f32 %v3719, 1.442695
    %v3742 = vpow.pop %v3741
    %v3743 = vmul.f32 %v3722, 1.442695
    %v3744 = vpow.pop %v3743
    %v3745 = vmul.f32 %v3725, 1.442695
    %v3746 = vpow.pop %v3745
    %v3747 = vmul.f32 %v3728, 1.442695
    %v3748 = vpow.pop %v3747
    %v3749 = vmul.f32 %v3731, 1.442695
    %v3750 = vpow.pop %v3749
    %v3751 = vmul.f32 %v3734, 1.442695
    %v3752 = vpow.pop %v3751
    %v3753 = vmul.f32 %v3737, 1.442695
    %v3754 = vpow.pop %v3753
    %v3755 = vld [vmem:[%s7] sm:$0xff]
    %v3756 = vld [vmem:[%s7 + $0x8] sm:$0xff]
    %v3757 = vld [vmem:[%s7 + $0x10] sm:$0xff]
    %v3758 = vld [vmem:[%s7 + $0x18] sm:$0xff]
    %v3759 = vld [vmem:[%s7 + $0x20] sm:$0xff]
    %v3760 = vld [vmem:[%s7 + $0x28] sm:$0xff]
    %v3761 = vld [vmem:[%s7 + $0x30] sm:$0xff]
    %v3762 = vld [vmem:[%s7 + $0x38] sm:$0xff]
    %v3763 = vmul.f32 %v3740, %v3755
    %v3764 = vmul.f32 %v3742, %v3756
    %v3765 = vmul.f32 %v3744, %v3757
    %v3766 = vmul.f32 %v3746, %v3758
    %v3767 = vmul.f32 %v3748, %v3759
    %v3768 = vmul.f32 %v3750, %v3760
    %v3769 = vmul.f32 %v3752, %v3761
    %v3770 = vmul.f32 %v3754, %v3762
    %v3771 = vadd.f32 %v3692, %v3763
    %v3772 = vadd.f32 %v3695, %v3764
    %v3773 = vadd.f32 %v3698, %v3765
    %v3774 = vadd.f32 %v3701, %v3766
    %v3775 = vadd.f32 %v3704, %v3767
    %v3776 = vadd.f32 %v3707, %v3768
    %v3777 = vadd.f32 %v3710, %v3769
    %v3778 = vadd.f32 %v3713, %v3770
    %v3779 = vmul.f32 %v3771, %v3505
    %v3780 = vmul.f32 %v3772, %v3506
    %v3781 = vmul.f32 %v3773, %v3507
    %v3782 = vmul.f32 %v3774, %v3508
    %v3783 = vmul.f32 %v3775, %v3509
    %v3784 = vmul.f32 %v3776, %v3510
    %v3785 = vmul.f32 %v3777, %v3511
    %v3786 = vmul.f32 %v3778, %v3512
    %3787 = vst [vmem:[#allocation5] sm:$0xff] %v3779
    %3788 = vst [vmem:[#allocation5 + $0x8] sm:$0xff] %v3780
    %3789 = vst [vmem:[#allocation5 + $0x10] sm:$0xff] %v3781
    %3790 = vst [vmem:[#allocation5 + $0x18] sm:$0xff] %v3782
    %3791 = vst [vmem:[#allocation5 + $0x20] sm:$0xff] %v3783
    %3792 = vst [vmem:[#allocation5 + $0x28] sm:$0xff] %v3784
    %3793 = vst [vmem:[#allocation5 + $0x30] sm:$0xff] %v3785
    %3794 = vst [vmem:[#allocation5 + $0x38] sm:$0xff] %v3786
    // Predicated region
    $region41: #{tpu_custom_call.1} parent=1 // pred_check
      _
    $region42: #{tpu_custom_call.1} parent=1 // pred_check_branch
      %3796 = sbr.rel (0) target = $region44
    $region43: #{tpu_custom_call.1} parent=1 // pred_region
      %3798 = vsyncadd [#allocation4], 0
      %s3799 = sshll.u32 [#allocation3], 4
      %s3800 = int_to_ptr.vmem [resolvable:$true] %s3799
      %s3801 = sshll.u32 %s8, 4
      %s3802 = int_to_ptr.hbm [resolvable:$true] %s3801
      %3807 = dma.vmem_to_hbm [thread:$0]  %s3800, 1024, %s3802, [#allocation4], 128, 128, 8
    $region44: #{tpu_custom_call.1} parent=1 // pred_fallthru
      _
    // Predicated region
    $region45: #{tpu_custom_call.1} parent=1 // pred_check
      _
    $region46: #{tpu_custom_call.1} parent=1 // pred_check_branch
      %3809 = sbr.rel (0) target = $region48
    $region47: #{tpu_custom_call.1} parent=1 // pred_region
      %3811 = vsyncadd [#allocation6], 0
      %s3812 = sshll.u32 [#allocation5], 4
      %s3813 = int_to_ptr.vmem [resolvable:$true] %s3812
      %s3814 = sshll.u32 %s9, 4
      %s3815 = int_to_ptr.hbm [resolvable:$true] %s3814
      %3820 = dma.vmem_to_hbm [thread:$0]  %s3813, 1024, %s3815, [#allocation6], 128, 128, 8
    $region48: #{tpu_custom_call.1} parent=1 // pred_fallthru
      _
    // Predicated region
    $region49: #{tpu_custom_call.1} parent=1 // pred_check
      _
    $region50: #{tpu_custom_call.1} parent=1 // pred_check_branch
      %3822 = sbr.rel (0) target = $region52
    $region51: #{tpu_custom_call.1} parent=1 // pred_region
      %3824 = dma.done [#allocation4], 1024
    $region52: #{tpu_custom_call.1} parent=1 // pred_fallthru
      _
    // Predicated region
    $region53: #{tpu_custom_call.1} parent=1 // pred_check
      _
    $region54: #{tpu_custom_call.1} parent=1 // pred_check_branch
      %3826 = sbr.rel (0) target = $region56
    $region55: #{tpu_custom_call.1} parent=1 // pred_region
      %3828 = dma.done [#allocation6], 1024
    $region56: #{tpu_custom_call.1} parent=1 // pred_fallthru
      _
    %3829 = vsyncpa [#allocation4], 1
    %3830 = vsyncpa [#allocation6], 1

</llo_original>
